<compile_context>
chip_gen: v7x
topology: tpu7x:2x2x1
jax: 0.10.0
libtpu: 0.0.40
codegen_flags: <defaults>
</compile_context>

<pallas_src>
import numpy as np
import jax
import jax.numpy as jnp
from jax import lax
from jax.experimental import pallas as pl
from jax.experimental.pallas import tpu as pltpu

EMB = 32        # embedding_dim (module default 300; scaled down for the demo)
HID = 32        # hidden_dim   (module default 300; scaled down for the demo)
H_PAD = 128     # per-gate lane-tile padding of the hidden dim inside the kernel
N_LAYERS = 2    # n_layers (hard-wired: two stacked LSTM cells)
OUT = 1         # output_size


# ----------------------------------------------------------------------------
# Kernel
# ----------------------------------------------------------------------------
def polarity_lstm_kernel(emb_ref, lens_ref,
                         w_ih0_ref, w_hh0_ref, b0_ref,
                         w1_ref, b1_ref,
                         fcw_ref, fcb_ref,
                         out_ref,
                         xp_ref, h1_ref, c1_ref, h2_ref, c2_ref, lasth_ref):
    TC, Bt, E = emb_ref.shape          # time-chunk, batch-tile, embedding dim
    HP = w_hh0_ref.shape[0]            # padded hidden (128-lane aligned per gate)
    G4 = 4 * HP

    t_chunk = pl.program_id(1)
    n_chunks = pl.num_programs(1)

    # Reset the recurrent state at the first time chunk of every batch tile.
    @pl.when(t_chunk == 0)
    def _init():
        z = jnp.zeros((Bt, HP), jnp.float32)
        h1_ref[...] = z
        c1_ref[...] = z
        h2_ref[...] = z
        c2_ref[...] = z
        lasth_ref[...] = z

    # ---- hoisted, non-recurrent work (once per chunk, off the serial path) ----
    # Layer-0 input projection for all TC timesteps as ONE MXU matmul, with the
    # layer-0 bias folded in (no per-step bias broadcast/add in the loop).
    x2d = emb_ref[...].reshape(TC * Bt, E)                       # bf16
    xp = jnp.dot(x2d, w_ih0_ref[...], preferred_element_type=jnp.float32)
    xp_ref[...] = (xp + b0_ref[...]).reshape(TC, Bt, G4)

    w_hh0 = w_hh0_ref[...]                                       # bf16 (HP, 4HP)
    w1 = w1_ref[...]                                             # bf16 (2HP, 4HP)
    b1 = jnp.broadcast_to(b1_ref[...], (Bt, G4))                 # hoisted broadcast
    last_t = jnp.broadcast_to(lens_ref[...] - 1, (Bt, HP))       # hoisted broadcast
    t_base = t_chunk * TC

    def gates(g):
        # PyTorch gate order i, f, g, o; each gate is its own 128-lane tile.
        i = jax.nn.sigmoid(g[:, 0 * HP:1 * HP])
        f = jax.nn.sigmoid(g[:, 1 * HP:2 * HP])
        gg = jnp.tanh(g[:, 2 * HP:3 * HP])
        o = jax.nn.sigmoid(g[:, 3 * HP:4 * HP])
        return i, f, gg, o

    def step(it, carry):
        h1, c1, h2, c2, lh = carry
        # Layer 0: only the truly recurrent h @ W_hh matmul is on the serial path.
        g0 = xp_ref[it] + jnp.dot(h1.astype(jnp.bfloat16), w_hh0,
                                  preferred_element_type=jnp.float32)
        i0, f0, gg0, o0 = gates(g0)
        c1 = f0 * c1 + i0 * gg0
        h1 = o0 * jnp.tanh(c1)
        # TODO(synk): inter-layer dropout (drop_lstm=0.1) and nn.Dropout(drop_out)
        # are identity in eval mode, which is what we reproduce here.
        # Layer 1: single fused [h1, h2] @ [W_ih1; W_hh1] matmul.
        xh = jnp.concatenate([h1, h2], axis=1).astype(jnp.bfloat16)
        g1 = jnp.dot(xh, w1, preferred_element_type=jnp.float32) + b1
        i1, f1, gg1, o1 = gates(g1)
        c2 = f1 * c2 + i1 * gg1
        h2 = o1 * jnp.tanh(c2)
        # Equivalent of pack/pad + gather(last_idxs): grab h2 at t == len-1.
        lh = jnp.where(last_t == (t_base + it), h2, lh)
        return h1, c1, h2, c2, lh

    carry0 = (h1_ref[...], c1_ref[...], h2_ref[...], c2_ref[...], lasth_ref[...])
    # Fully unrolled so the LLO scheduler can overlap the next step's W_hh matmul
    # push with the previous step's EUP/VPU gate math.
    h1, c1, h2, c2, lh = lax.fori_loop(0, TC, step, carry0, unroll=True)
    h1_ref[...] = h1
    c1_ref[...] = c1
    h2_ref[...] = h2
    c2_ref[...] = c2
    lasth_ref[...] = lh

    # TODO(synk): could skip remaining time chunks for a batch tile once
    # t_base >= max(lens) of the tile (sorted-decreasing lengths), via scalar
    # prefetch; padded steps are currently computed but never selected.

    # Final FC + sigmoid only at the last time chunk. N=1 FC as a VPU multiply +
    # lane reduction (worst-case MXU shape avoided); output written lane-dense.
    @pl.when(t_chunk == n_chunks - 1)
    def _finalize():
        logits = (jnp.sum(lasth_ref[...] * fcw_ref[...], axis=-1, keepdims=True)
                  + fcb_ref[...])                                  # (Bt, 1)
        out_ref[...] = jnp.broadcast_to(jax.nn.sigmoid(logits), out_ref.shape)


# ----------------------------------------------------------------------------
# Parameter layout helpers (pad each gate to its own 128-lane tile, bf16 weights)
# ----------------------------------------------------------------------------
def _pad_gate_cols(w, h, hp):
    """(K, 4h) -> (K, 4hp): gate g's columns placed at [g*hp : g*hp + h]."""
    k = w.shape[0]
    out = jnp.zeros((k, 4 * hp), w.dtype)
    for g in range(4):
        out = out.at[:, g * hp:g * hp + h].set(w[:, g * h:(g + 1) * h])
    return out


def _pad_rows(w, kp):
    return jnp.zeros((kp, w.shape[1]), w.dtype).at[:w.shape[0], :].set(w)


def prepare_kernel_params(params, h=HID, hp=H_PAD):
    w_ih0 = _pad_gate_cols(params["w_ih0"], h, hp)                     # (E, 4hp)
    w_hh0 = _pad_rows(_pad_gate_cols(params["w_hh0"], h, hp), hp)      # (hp, 4hp)
    b0 = _pad_gate_cols(params["b0"], h, hp)                           # (1, 4hp)
    w_ih1 = _pad_rows(_pad_gate_cols(params["w_ih1"], h, hp), hp)      # (hp, 4hp)
    w_hh1 = _pad_rows(_pad_gate_cols(params["w_hh1"], h, hp), hp)      # (hp, 4hp)
    w1 = jnp.concatenate([w_ih1, w_hh1], axis=0)                       # (2hp, 4hp)
    b1 = _pad_gate_cols(params["b1"], h, hp)                           # (1, 4hp)
    fcw = jnp.zeros((1, hp), jnp.float32).at[0, :h].set(params["fc_w"][:, 0])
    fcb = params["fc_b"].reshape(1, 1).astype(jnp.float32)
    return {
        "w_ih0": w_ih0.astype(jnp.bfloat16),
        "w_hh0": w_hh0.astype(jnp.bfloat16),
        "b0": b0.astype(jnp.float32),
        "w1": w1.astype(jnp.bfloat16),
        "b1": b1.astype(jnp.float32),
        "fc_w": fcw,
        "fc_b": fcb,
    }


# ----------------------------------------------------------------------------
# Wrapper
# ----------------------------------------------------------------------------
def polarity_lstm_forward(tokens, seq_lengths, params, *, time_chunk=8, batch_tile=8):
    """tokens: (B, T) int32 ids; seq_lengths: (B,) int32 (sorted decreasing, >= 1)."""
    cdiv = lambda a, b: (a + b - 1) // b
    B, T = tokens.shape
    E = params["embedding"].shape[1]
    kp = prepare_kernel_params(params)

    # TODO(synk): embedding gather stays in XLA (glue); stream is cast to bf16.
    emb = params["embedding"][tokens].astype(jnp.bfloat16)             # (B, T, E)
    emb = jnp.transpose(emb, (1, 0, 2))                                # (T, B, E)

    b_pad = cdiv(B, batch_tile) * batch_tile
    t_pad = cdiv(T, time_chunk) * time_chunk
    emb_p = jnp.zeros((t_pad, b_pad, E), jnp.bfloat16).at[:T, :B, :].set(emb)
    lens_p = jnp.ones((b_pad, 1), jnp.int32).at[:B, 0].set(
        seq_lengths.astype(jnp.int32))

    nb = b_pad // batch_tile
    nt = t_pad // time_chunk
    const = lambda b, t: (0, 0)

    out = pl.pallas_call(
        polarity_lstm_kernel,
        out_shape=jax.ShapeDtypeStruct((b_pad, 128), jnp.float32),
        grid=(nb, nt),
        in_specs=[
            pl.BlockSpec((time_chunk, batch_tile, E), lambda b, t: (t, b, 0)),  # emb
            pl.BlockSpec((batch_tile, 1), lambda b, t: (b, 0)),                 # lens
            pl.BlockSpec(kp["w_ih0"].shape, const),
            pl.BlockSpec(kp["w_hh0"].shape, const),
            pl.BlockSpec(kp["b0"].shape, const),
            pl.BlockSpec(kp["w1"].shape, const),
            pl.BlockSpec(kp["b1"].shape, const),
            pl.BlockSpec(kp["fc_w"].shape, const),
            pl.BlockSpec(kp["fc_b"].shape, const),
        ],
        out_specs=pl.BlockSpec((batch_tile, 128), lambda b, t: (b, 0)),
        scratch_shapes=[
            pltpu.VMEM((time_chunk, batch_tile, 4 * H_PAD), jnp.float32),  # x-proj
            pltpu.VMEM((batch_tile, H_PAD), jnp.float32),                  # h1
            pltpu.VMEM((batch_tile, H_PAD), jnp.float32),                  # c1
            pltpu.VMEM((batch_tile, H_PAD), jnp.float32),                  # h2
            pltpu.VMEM((batch_tile, H_PAD), jnp.float32),                  # c2
            pltpu.VMEM((batch_tile, H_PAD), jnp.float32),                  # last_h
        ],
        compiler_params=pltpu.CompilerParams(
            dimension_semantics=("parallel", "arbitrary"),
            vmem_limit_bytes=32 * 1024 * 1024,
        ),
    )(emb_p, lens_p, kp["w_ih0"], kp["w_hh0"], kp["b0"],
      kp["w1"], kp["b1"], kp["fc_w"], kp["fc_b"])

    return out[:B, 0]                                                # matches .squeeze()


# ----------------------------------------------------------------------------
# Parameters and pure-numpy reference (same bf16 rounding as the kernel)
# ----------------------------------------------------------------------------
def init_params(key, vocab_size, emb_dim, hidden, out_size):
    ks = jax.random.split(key, 11)
    s = 1.0 / float(np.sqrt(hidden))

    def u(k, shape):
        return jax.random.uniform(k, shape, jnp.float32, -s, s)

    return {
        "embedding": jax.random.normal(ks[0], (vocab_size, emb_dim), jnp.float32),
        # layer 0: input size = emb_dim; weights stored transposed (in, 4H)
        "w_ih0": u(ks[1], (emb_dim, 4 * hidden)),
        "w_hh0": u(ks[2], (hidden, 4 * hidden)),
        "b0": u(ks[3], (1, 4 * hidden)) + u(ks[4], (1, 4 * hidden)),   # b_ih + b_hh
        # layer 1: input size = hidden
        "w_ih1": u(ks[5], (hidden, 4 * hidden)),
        "w_hh1": u(ks[6], (hidden, 4 * hidden)),
        "b1": u(ks[7], (1, 4 * hidden)) + u(ks[8], (1, 4 * hidden)),
        # fc: (hidden -> out_size), stored transposed
        "fc_w": u(ks[9], (hidden, out_size)),
        "fc_b": u(ks[10], (1, out_size)),
    }


def _bf16(x):
    return np.asarray(jnp.asarray(x).astype(jnp.bfloat16).astype(jnp.float32))


def ref_forward(tokens, seq_lengths, params):
    emb_tbl = np.asarray(params["embedding"], np.float32)
    emb = _bf16(emb_tbl[np.asarray(tokens)])                           # (B, T, E)
    wih0, whh0 = _bf16(params["w_ih0"]), _bf16(params["w_hh0"])
    wih1, whh1 = _bf16(params["w_ih1"]), _bf16(params["w_hh1"])
    b0 = np.asarray(params["b0"], np.float32)
    b1 = np.asarray(params["b1"], np.float32)
    fcw = np.asarray(params["fc_w"], np.float32)
    fcb = np.asarray(params["fc_b"], np.float32)
    lens = np.asarray(seq_lengths)
    B, T, _ = emb.shape
    H = whh0.shape[0]
    sig = lambda v: 1.0 / (1.0 + np.exp(-v))
    h1 = np.zeros((B, H), np.float32); c1 = np.zeros_like(h1)
    h2 = np.zeros_like(h1); c2 = np.zeros_like(h1)
    last_h = np.zeros_like(h1)
    for t in range(T):
        g0 = emb[:, t, :] @ wih0 + _bf16(h1) @ whh0 + b0
        i0, f0 = sig(g0[:, :H]), sig(g0[:, H:2 * H])
        gg0, o0 = np.tanh(g0[:, 2 * H:3 * H]), sig(g0[:, 3 * H:])
        c1 = f0 * c1 + i0 * gg0
        h1 = o0 * np.tanh(c1)
        g1 = _bf16(h1) @ wih1 + _bf16(h2) @ whh1 + b1
        i1, f1 = sig(g1[:, :H]), sig(g1[:, H:2 * H])
        gg1, o1 = np.tanh(g1[:, 2 * H:3 * H]), sig(g1[:, 3 * H:])
        c2 = f1 * c2 + i1 * gg1
        h2 = o1 * np.tanh(c2)
        last_h = np.where((lens - 1 == t)[:, None], h2, last_h)
    logits = last_h @ fcw + fcb
    return sig(logits)[:, 0]


if __name__ == "__main__":
    key = jax.random.PRNGKey(0)
    vocab_size = 50
    B, T = 4, 16

    kp_key, kt_key = jax.random.split(key)
    params = init_params(kp_key, vocab_size, EMB, HID, OUT)
    tokens = jax.random.randint(kt_key, (B, T), 0, vocab_size, dtype=jnp.int32)
    # pack_padded_sequence(enforce_sorted=True) expects decreasing lengths (>= 1)
    seq_lengths = jnp.array([16, 11, 7, 3], dtype=jnp.int32)

    out = polarity_lstm_forward(tokens, seq_lengths, params)
    out = jax.block_until_ready(out)

    assert out.shape == (B,)
    out_np = np.asarray(out)
    assert np.all((out_np > 0.0) & (out_np < 1.0))

    ref = ref_forward(tokens, seq_lengths, params)
    assert np.allclose(out_np, ref, atol=2e-3, rtol=2e-3), (out_np, ref)

    print("KERNEL_OK")
</pallas_src>

<mosaic_0001>
module attributes {stable_mosaic.version = 11 : i64} {
  func.func @polarity_lstm_kernel(%arg0: i32, %arg1: i32, %arg2: memref<8x8x32xbf16, #tpu.memory_space<vmem>>, %arg3: memref<8x1xi32, #tpu.memory_space<vmem>>, %arg4: memref<32x512xbf16, #tpu.memory_space<vmem>>, %arg5: memref<128x512xbf16, #tpu.memory_space<vmem>>, %arg6: memref<1x512xf32, #tpu.memory_space<vmem>>, %arg7: memref<256x512xbf16, #tpu.memory_space<vmem>>, %arg8: memref<1x512xf32, #tpu.memory_space<vmem>>, %arg9: memref<1x128xf32, #tpu.memory_space<vmem>>, %arg10: memref<1x1xf32, #tpu.memory_space<vmem>>, %arg11: memref<8x128xf32, #tpu.memory_space<vmem>>, %arg12: memref<8x8x512xf32, #tpu.memory_space<vmem>>, %arg13: memref<8x128xf32, #tpu.memory_space<vmem>>, %arg14: memref<8x128xf32, #tpu.memory_space<vmem>>, %arg15: memref<8x128xf32, #tpu.memory_space<vmem>>, %arg16: memref<8x128xf32, #tpu.memory_space<vmem>>, %arg17: memref<8x128xf32, #tpu.memory_space<vmem>>) attributes {dimension_semantics = [#tpu.dimension_semantics<parallel>, #tpu.dimension_semantics<arbitrary>], iteration_bounds = array<i64: 1, 2>, scalar_prefetch = 0 : i64, scratch_operands = 6 : i64, tpu.core_type = #tpu.core_type<tc>, window_params = [{transform_indices = @transform_0, window_bounds = array<i64: 8, 8, 32>}, {transform_indices = @transform_1, window_bounds = array<i64: 8, 1>}, {pipeline_mode = #tpu.pipeline_mode<synchronous>, transform_indices = @transform_2, window_bounds = array<i64: 32, 512>}, {pipeline_mode = #tpu.pipeline_mode<synchronous>, transform_indices = @transform_3, window_bounds = array<i64: 128, 512>}, {pipeline_mode = #tpu.pipeline_mode<synchronous>, transform_indices = @transform_4, window_bounds = array<i64: 1, 512>}, {pipeline_mode = #tpu.pipeline_mode<synchronous>, transform_indices = @transform_5, window_bounds = array<i64: 256, 512>}, {pipeline_mode = #tpu.pipeline_mode<synchronous>, transform_indices = @transform_6, window_bounds = array<i64: 1, 512>}, {pipeline_mode = #tpu.pipeline_mode<synchronous>, transform_indices = @transform_7, window_bounds = array<i64: 1, 128>}, {pipeline_mode = #tpu.pipeline_mode<synchronous>, transform_indices = @transform_8, window_bounds = array<i64: 1, 1>}, {transform_indices = @transform_9, window_bounds = array<i64: 8, 128>}]} {
    %c0_i32 = arith.constant 0 : i32
    %0 = arith.cmpi eq, %arg1, %c0_i32 : i32
    %1 = arith.extui %0 : i1 to i32
    %c0_i32_0 = arith.constant 0 : i32
    %2 = arith.cmpi ne, %1, %c0_i32_0 : i32
    scf.if %2 {
      %cst_123 = arith.constant 0.000000e+00 : f32
      %548 = vector.broadcast %cst_123 : f32 to vector<8x128xf32>
      %c0_124 = arith.constant 0 : index
      %c0_125 = arith.constant 0 : index
      %549 = vector.load %arg13[%c0_124, %c0_125] : memref<8x128xf32, #tpu.memory_space<vmem>>, vector<8x128xf32>
      tpu.vector_store %arg13[%c0_124, %c0_125], %548 {strides = array<i32>} : memref<8x128xf32, #tpu.memory_space<vmem>>, vector<8x128xf32>,
      %c0_126 = arith.constant 0 : index
      %c0_127 = arith.constant 0 : index
      %550 = vector.load %arg14[%c0_126, %c0_127] : memref<8x128xf32, #tpu.memory_space<vmem>>, vector<8x128xf32>
      tpu.vector_store %arg14[%c0_126, %c0_127], %548 {strides = array<i32>} : memref<8x128xf32, #tpu.memory_space<vmem>>, vector<8x128xf32>,
      %c0_128 = arith.constant 0 : index
      %c0_129 = arith.constant 0 : index
      %551 = vector.load %arg15[%c0_128, %c0_129] : memref<8x128xf32, #tpu.memory_space<vmem>>, vector<8x128xf32>
      tpu.vector_store %arg15[%c0_128, %c0_129], %548 {strides = array<i32>} : memref<8x128xf32, #tpu.memory_space<vmem>>, vector<8x128xf32>,
      %c0_130 = arith.constant 0 : index
      %c0_131 = arith.constant 0 : index
      %552 = vector.load %arg16[%c0_130, %c0_131] : memref<8x128xf32, #tpu.memory_space<vmem>>, vector<8x128xf32>
      tpu.vector_store %arg16[%c0_130, %c0_131], %548 {strides = array<i32>} : memref<8x128xf32, #tpu.memory_space<vmem>>, vector<8x128xf32>,
      %c0_132 = arith.constant 0 : index
      %c0_133 = arith.constant 0 : index
      %553 = vector.load %arg17[%c0_132, %c0_133] : memref<8x128xf32, #tpu.memory_space<vmem>>, vector<8x128xf32>
      tpu.vector_store %arg17[%c0_132, %c0_133], %548 {strides = array<i32>} : memref<8x128xf32, #tpu.memory_space<vmem>>, vector<8x128xf32>,
    } else {
    }
    %c0 = arith.constant 0 : index
    %c0_1 = arith.constant 0 : index
    %c0_2 = arith.constant 0 : index
    %3 = vector.load %arg2[%c0, %c0_1, %c0_2] : memref<8x8x32xbf16, #tpu.memory_space<vmem>>, vector<8x8x32xbf16>
    %4 = vector.shape_cast %3 : vector<8x8x32xbf16> to vector<64x32xbf16>
    %c0_3 = arith.constant 0 : index
    %c0_4 = arith.constant 0 : index
    %5 = vector.load %arg4[%c0_3, %c0_4] : memref<32x512xbf16, #tpu.memory_space<vmem>>, vector<32x512xbf16>
    %cst = arith.constant dense<0.000000e+00> : vector<64x512xf32>
    %6 = tpu.matmul %4, %5, %cst {dimension_numbers = #tpu.dot_dimension_numbers<[1], [0], [0], [1], [0, 0, 1, 1], [], []>} : vector<64x32xbf16>, vector<32x512xbf16>, vector<64x512xf32> -> vector<64x512xf32>
    %c0_5 = arith.constant 0 : index
    %c0_6 = arith.constant 0 : index
    %7 = vector.load %arg6[%c0_5, %c0_6] : memref<1x512xf32, #tpu.memory_space<vmem>>, vector<1x512xf32>
    %8 = vector.broadcast %7 : vector<1x512xf32> to vector<64x512xf32>
    %9 = arith.addf %6, %8 : vector<64x512xf32>
    %10 = vector.shape_cast %9 : vector<64x512xf32> to vector<8x8x512xf32>
    %c0_7 = arith.constant 0 : index
    %c0_8 = arith.constant 0 : index
    %c0_9 = arith.constant 0 : index
    %11 = vector.load %arg12[%c0_7, %c0_8, %c0_9] : memref<8x8x512xf32, #tpu.memory_space<vmem>>, vector<8x8x512xf32>
    tpu.vector_store %arg12[%c0_7, %c0_8, %c0_9], %10 {strides = array<i32>} : memref<8x8x512xf32, #tpu.memory_space<vmem>>, vector<8x8x512xf32>,
    %c0_10 = arith.constant 0 : index
    %c0_11 = arith.constant 0 : index
    %12 = vector.load %arg5[%c0_10, %c0_11] : memref<128x512xbf16, #tpu.memory_space<vmem>>, vector<128x512xbf16>
    %c0_12 = arith.constant 0 : index
    %c0_13 = arith.constant 0 : index
    %13 = vector.load %arg7[%c0_12, %c0_13] : memref<256x512xbf16, #tpu.memory_space<vmem>>, vector<256x512xbf16>
    %c0_14 = arith.constant 0 : index
    %c0_15 = arith.constant 0 : index
    %14 = vector.load %arg8[%c0_14, %c0_15] : memref<1x512xf32, #tpu.memory_space<vmem>>, vector<1x512xf32>
    %15 = vector.shape_cast %14 : vector<1x512xf32> to vector<1x512xf32>
    %16 = vector.broadcast %15 : vector<1x512xf32> to vector<8x512xf32>
    %c0_16 = arith.constant 0 : index
    %c0_17 = arith.constant 0 : index
    %17 = vector.load %arg3[%c0_16, %c0_17] : memref<8x1xi32, #tpu.memory_space<vmem>>, vector<8x1xi32>
    %c1_i32 = arith.constant 1 : i32
    %18 = vector.broadcast %c1_i32 : i32 to vector<8x1xi32>
    %19 = arith.subi %17, %18 : vector<8x1xi32>
    %20 = vector.shape_cast %19 : vector<8x1xi32> to vector<8x1xi32>
    %21 = vector.broadcast %20 : vector<8x1xi32> to vector<8x128xi32>
    %c8_i32 = arith.constant 8 : i32
    %22 = arith.muli %arg1, %c8_i32 : i32
    %c0_18 = arith.constant 0 : index
    %c0_19 = arith.constant 0 : index
    %23 = vector.load %arg13[%c0_18, %c0_19] : memref<8x128xf32, #tpu.memory_space<vmem>>, vector<8x128xf32>
    %c0_20 = arith.constant 0 : index
    %c0_21 = arith.constant 0 : index
    %24 = vector.load %arg14[%c0_20, %c0_21] : memref<8x128xf32, #tpu.memory_space<vmem>>, vector<8x128xf32>
    %c0_22 = arith.constant 0 : index
    %c0_23 = arith.constant 0 : index
    %25 = vector.load %arg15[%c0_22, %c0_23] : memref<8x128xf32, #tpu.memory_space<vmem>>, vector<8x128xf32>
    %c0_24 = arith.constant 0 : index
    %c0_25 = arith.constant 0 : index
    %26 = vector.load %arg16[%c0_24, %c0_25] : memref<8x128xf32, #tpu.memory_space<vmem>>, vector<8x128xf32>
    %c0_26 = arith.constant 0 : index
    %c0_27 = arith.constant 0 : index
    %27 = vector.load %arg17[%c0_26, %c0_27] : memref<8x128xf32, #tpu.memory_space<vmem>>, vector<8x128xf32>
    %c0_i32_28 = arith.constant 0 : i32
    %28 = arith.index_cast %c0_i32_28 : i32 to index
    %c0_29 = arith.constant 0 : index
    %c0_30 = arith.constant 0 : index
    %29 = vector.load %arg12[%28, %c0_29, %c0_30] : memref<8x8x512xf32, #tpu.memory_space<vmem>>, vector<1x8x512xf32>
    %30 = vector.shape_cast %29 : vector<1x8x512xf32> to vector<8x512xf32>
    %31 = arith.truncf %23 : vector<8x128xf32> to vector<8x128xbf16>
    %cst_31 = arith.constant dense<0.000000e+00> : vector<8x512xf32>
    %32 = tpu.matmul %31, %12, %cst_31 {dimension_numbers = #tpu.dot_dimension_numbers<[1], [0], [0], [1], [0, 0, 1, 1], [], []>} : vector<8x128xbf16>, vector<128x512xbf16>, vector<8x512xf32> -> vector<8x512xf32>
    %33 = arith.addf %30, %32 : vector<8x512xf32>
    %34 = vector.extract_strided_slice %33 {offsets = [0, 0], sizes = [8, 128], strides = [1, 1]} : vector<8x512xf32> to vector<8x128xf32>
    %35 = arith.negf %34 : vector<8x128xf32>
    %36 = math.exp %35 : vector<8x128xf32>
    %cst_32 = arith.constant 1.000000e+00 : f32
    %37 = vector.broadcast %cst_32 : f32 to vector<8x128xf32>
    %38 = arith.addf %37, %36 : vector<8x128xf32>
    %39 = arith.divf %37, %38 : vector<8x128xf32>
    %40 = vector.extract_strided_slice %33 {offsets = [0, 128], sizes = [8, 128], strides = [1, 1]} : vector<8x512xf32> to vector<8x128xf32>
    %41 = arith.negf %40 : vector<8x128xf32>
    %42 = math.exp %41 : vector<8x128xf32>
    %cst_33 = arith.constant 1.000000e+00 : f32
    %43 = vector.broadcast %cst_33 : f32 to vector<8x128xf32>
    %44 = arith.addf %43, %42 : vector<8x128xf32>
    %45 = arith.divf %43, %44 : vector<8x128xf32>
    %46 = vector.extract_strided_slice %33 {offsets = [0, 256], sizes = [8, 128], strides = [1, 1]} : vector<8x512xf32> to vector<8x128xf32>
    %47 = math.tanh %46 : vector<8x128xf32>
    %48 = vector.extract_strided_slice %33 {offsets = [0, 384], sizes = [8, 128], strides = [1, 1]} : vector<8x512xf32> to vector<8x128xf32>
    %49 = arith.negf %48 : vector<8x128xf32>
    %50 = math.exp %49 : vector<8x128xf32>
    %cst_34 = arith.constant 1.000000e+00 : f32
    %51 = vector.broadcast %cst_34 : f32 to vector<8x128xf32>
    %52 = arith.addf %51, %50 : vector<8x128xf32>
    %53 = arith.divf %51, %52 : vector<8x128xf32>
    %54 = arith.mulf %45, %24 : vector<8x128xf32>
    %55 = arith.mulf %39, %47 : vector<8x128xf32>
    %56 = arith.addf %54, %55 : vector<8x128xf32>
    %57 = math.tanh %56 : vector<8x128xf32>
    %58 = arith.mulf %53, %57 : vector<8x128xf32>
    %59 = tpu.concatenate %58, %25 in 1 : vector<8x128xf32>, vector<8x128xf32> -> vector<8x256xf32>
    %60 = arith.truncf %59 : vector<8x256xf32> to vector<8x256xbf16>
    %cst_35 = arith.constant dense<0.000000e+00> : vector<8x512xf32>
    %61 = tpu.matmul %60, %13, %cst_35 {dimension_numbers = #tpu.dot_dimension_numbers<[1], [0], [0], [1], [0, 0, 1, 1], [], []>} : vector<8x256xbf16>, vector<256x512xbf16>, vector<8x512xf32> -> vector<8x512xf32>
    %62 = arith.addf %61, %16 : vector<8x512xf32>
    %63 = vector.extract_strided_slice %62 {offsets = [0, 0], sizes = [8, 128], strides = [1, 1]} : vector<8x512xf32> to vector<8x128xf32>
    %64 = arith.negf %63 : vector<8x128xf32>
    %65 = math.exp %64 : vector<8x128xf32>
    %cst_36 = arith.constant 1.000000e+00 : f32
    %66 = vector.broadcast %cst_36 : f32 to vector<8x128xf32>
    %67 = arith.addf %66, %65 : vector<8x128xf32>
    %68 = arith.divf %66, %67 : vector<8x128xf32>
    %69 = vector.extract_strided_slice %62 {offsets = [0, 128], sizes = [8, 128], strides = [1, 1]} : vector<8x512xf32> to vector<8x128xf32>
    %70 = arith.negf %69 : vector<8x128xf32>
    %71 = math.exp %70 : vector<8x128xf32>
    %cst_37 = arith.constant 1.000000e+00 : f32
    %72 = vector.broadcast %cst_37 : f32 to vector<8x128xf32>
    %73 = arith.addf %72, %71 : vector<8x128xf32>
    %74 = arith.divf %72, %73 : vector<8x128xf32>
    %75 = vector.extract_strided_slice %62 {offsets = [0, 256], sizes = [8, 128], strides = [1, 1]} : vector<8x512xf32> to vector<8x128xf32>
    %76 = math.tanh %75 : vector<8x128xf32>
    %77 = vector.extract_strided_slice %62 {offsets = [0, 384], sizes = [8, 128], strides = [1, 1]} : vector<8x512xf32> to vector<8x128xf32>
    %78 = arith.negf %77 : vector<8x128xf32>
    %79 = math.exp %78 : vector<8x128xf32>
    %cst_38 = arith.constant 1.000000e+00 : f32
    %80 = vector.broadcast %cst_38 : f32 to vector<8x128xf32>
    %81 = arith.addf %80, %79 : vector<8x128xf32>
    %82 = arith.divf %80, %81 : vector<8x128xf32>
    %83 = arith.mulf %74, %26 : vector<8x128xf32>
    %84 = arith.mulf %68, %76 : vector<8x128xf32>
    %85 = arith.addf %83, %84 : vector<8x128xf32>
    %86 = math.tanh %85 : vector<8x128xf32>
    %87 = arith.mulf %82, %86 : vector<8x128xf32>
    %88 = arith.addi %22, %c0_i32_28 : i32
    %89 = vector.broadcast %88 : i32 to vector<8x128xi32>
    %90 = arith.cmpi eq, %21, %89 : vector<8x128xi32>
    %91 = arith.select %90, %87, %27 : vector<8x128xi1>, vector<8x128xf32>
    %c1_i32_39 = arith.constant 1 : i32
    %92 = arith.index_cast %c1_i32_39 : i32 to index
    %c0_40 = arith.constant 0 : index
    %c0_41 = arith.constant 0 : index
    %93 = vector.load %arg12[%92, %c0_40, %c0_41] : memref<8x8x512xf32, #tpu.memory_space<vmem>>, vector<1x8x512xf32>
    %94 = vector.shape_cast %93 : vector<1x8x512xf32> to vector<8x512xf32>
    %95 = arith.truncf %58 : vector<8x128xf32> to vector<8x128xbf16>
    %cst_42 = arith.constant dense<0.000000e+00> : vector<8x512xf32>
    %96 = tpu.matmul %95, %12, %cst_42 {dimension_numbers = #tpu.dot_dimension_numbers<[1], [0], [0], [1], [0, 0, 1, 1], [], []>} : vector<8x128xbf16>, vector<128x512xbf16>, vector<8x512xf32> -> vector<8x512xf32>
    %97 = arith.addf %94, %96 : vector<8x512xf32>
    %98 = vector.extract_strided_slice %97 {offsets = [0, 0], sizes = [8, 128], strides = [1, 1]} : vector<8x512xf32> to vector<8x128xf32>
    %99 = arith.negf %98 : vector<8x128xf32>
    %100 = math.exp %99 : vector<8x128xf32>
    %cst_43 = arith.constant 1.000000e+00 : f32
    %101 = vector.broadcast %cst_43 : f32 to vector<8x128xf32>
    %102 = arith.addf %101, %100 : vector<8x128xf32>
    %103 = arith.divf %101, %102 : vector<8x128xf32>
    %104 = vector.extract_strided_slice %97 {offsets = [0, 128], sizes = [8, 128], strides = [1, 1]} : vector<8x512xf32> to vector<8x128xf32>
    %105 = arith.negf %104 : vector<8x128xf32>
    %106 = math.exp %105 : vector<8x128xf32>
    %cst_44 = arith.constant 1.000000e+00 : f32
    %107 = vector.broadcast %cst_44 : f32 to vector<8x128xf32>
    %108 = arith.addf %107, %106 : vector<8x128xf32>
    %109 = arith.divf %107, %108 : vector<8x128xf32>
    %110 = vector.extract_strided_slice %97 {offsets = [0, 256], sizes = [8, 128], strides = [1, 1]} : vector<8x512xf32> to vector<8x128xf32>
    %111 = math.tanh %110 : vector<8x128xf32>
    %112 = vector.extract_strided_slice %97 {offsets = [0, 384], sizes = [8, 128], strides = [1, 1]} : vector<8x512xf32> to vector<8x128xf32>
    %113 = arith.negf %112 : vector<8x128xf32>
    %114 = math.exp %113 : vector<8x128xf32>
    %cst_45 = arith.constant 1.000000e+00 : f32
    %115 = vector.broadcast %cst_45 : f32 to vector<8x128xf32>
    %116 = arith.addf %115, %114 : vector<8x128xf32>
    %117 = arith.divf %115, %116 : vector<8x128xf32>
    %118 = arith.mulf %109, %56 : vector<8x128xf32>
    %119 = arith.mulf %103, %111 : vector<8x128xf32>
    %120 = arith.addf %118, %119 : vector<8x128xf32>
    %121 = math.tanh %120 : vector<8x128xf32>
    %122 = arith.mulf %117, %121 : vector<8x128xf32>
    %123 = tpu.concatenate %122, %87 in 1 : vector<8x128xf32>, vector<8x128xf32> -> vector<8x256xf32>
    %124 = arith.truncf %123 : vector<8x256xf32> to vector<8x256xbf16>
    %cst_46 = arith.constant dense<0.000000e+00> : vector<8x512xf32>
    %125 = tpu.matmul %124, %13, %cst_46 {dimension_numbers = #tpu.dot_dimension_numbers<[1], [0], [0], [1], [0, 0, 1, 1], [], []>} : vector<8x256xbf16>, vector<256x512xbf16>, vector<8x512xf32> -> vector<8x512xf32>
    %126 = arith.addf %125, %16 : vector<8x512xf32>
    %127 = vector.extract_strided_slice %126 {offsets = [0, 0], sizes = [8, 128], strides = [1, 1]} : vector<8x512xf32> to vector<8x128xf32>
    %128 = arith.negf %127 : vector<8x128xf32>
    %129 = math.exp %128 : vector<8x128xf32>
    %cst_47 = arith.constant 1.000000e+00 : f32
    %130 = vector.broadcast %cst_47 : f32 to vector<8x128xf32>
    %131 = arith.addf %130, %129 : vector<8x128xf32>
    %132 = arith.divf %130, %131 : vector<8x128xf32>
    %133 = vector.extract_strided_slice %126 {offsets = [0, 128], sizes = [8, 128], strides = [1, 1]} : vector<8x512xf32> to vector<8x128xf32>
    %134 = arith.negf %133 : vector<8x128xf32>
    %135 = math.exp %134 : vector<8x128xf32>
    %cst_48 = arith.constant 1.000000e+00 : f32
    %136 = vector.broadcast %cst_48 : f32 to vector<8x128xf32>
    %137 = arith.addf %136, %135 : vector<8x128xf32>
    %138 = arith.divf %136, %137 : vector<8x128xf32>
    %139 = vector.extract_strided_slice %126 {offsets = [0, 256], sizes = [8, 128], strides = [1, 1]} : vector<8x512xf32> to vector<8x128xf32>
    %140 = math.tanh %139 : vector<8x128xf32>
    %141 = vector.extract_strided_slice %126 {offsets = [0, 384], sizes = [8, 128], strides = [1, 1]} : vector<8x512xf32> to vector<8x128xf32>
    %142 = arith.negf %141 : vector<8x128xf32>
    %143 = math.exp %142 : vector<8x128xf32>
    %cst_49 = arith.constant 1.000000e+00 : f32
    %144 = vector.broadcast %cst_49 : f32 to vector<8x128xf32>
    %145 = arith.addf %144, %143 : vector<8x128xf32>
    %146 = arith.divf %144, %145 : vector<8x128xf32>
    %147 = arith.mulf %138, %85 : vector<8x128xf32>
    %148 = arith.mulf %132, %140 : vector<8x128xf32>
    %149 = arith.addf %147, %148 : vector<8x128xf32>
    %150 = math.tanh %149 : vector<8x128xf32>
    %151 = arith.mulf %146, %150 : vector<8x128xf32>
    %152 = arith.addi %22, %c1_i32_39 : i32
    %153 = vector.broadcast %152 : i32 to vector<8x128xi32>
    %154 = arith.cmpi eq, %21, %153 : vector<8x128xi32>
    %155 = arith.select %154, %151, %91 : vector<8x128xi1>, vector<8x128xf32>
    %c2_i32 = arith.constant 2 : i32
    %156 = arith.index_cast %c2_i32 : i32 to index
    %c0_50 = arith.constant 0 : index
    %c0_51 = arith.constant 0 : index
    %157 = vector.load %arg12[%156, %c0_50, %c0_51] : memref<8x8x512xf32, #tpu.memory_space<vmem>>, vector<1x8x512xf32>
    %158 = vector.shape_cast %157 : vector<1x8x512xf32> to vector<8x512xf32>
    %159 = arith.truncf %122 : vector<8x128xf32> to vector<8x128xbf16>
    %cst_52 = arith.constant dense<0.000000e+00> : vector<8x512xf32>
    %160 = tpu.matmul %159, %12, %cst_52 {dimension_numbers = #tpu.dot_dimension_numbers<[1], [0], [0], [1], [0, 0, 1, 1], [], []>} : vector<8x128xbf16>, vector<128x512xbf16>, vector<8x512xf32> -> vector<8x512xf32>
    %161 = arith.addf %158, %160 : vector<8x512xf32>
    %162 = vector.extract_strided_slice %161 {offsets = [0, 0], sizes = [8, 128], strides = [1, 1]} : vector<8x512xf32> to vector<8x128xf32>
    %163 = arith.negf %162 : vector<8x128xf32>
    %164 = math.exp %163 : vector<8x128xf32>
    %cst_53 = arith.constant 1.000000e+00 : f32
    %165 = vector.broadcast %cst_53 : f32 to vector<8x128xf32>
    %166 = arith.addf %165, %164 : vector<8x128xf32>
    %167 = arith.divf %165, %166 : vector<8x128xf32>
    %168 = vector.extract_strided_slice %161 {offsets = [0, 128], sizes = [8, 128], strides = [1, 1]} : vector<8x512xf32> to vector<8x128xf32>
    %169 = arith.negf %168 : vector<8x128xf32>
    %170 = math.exp %169 : vector<8x128xf32>
    %cst_54 = arith.constant 1.000000e+00 : f32
    %171 = vector.broadcast %cst_54 : f32 to vector<8x128xf32>
    %172 = arith.addf %171, %170 : vector<8x128xf32>
    %173 = arith.divf %171, %172 : vector<8x128xf32>
    %174 = vector.extract_strided_slice %161 {offsets = [0, 256], sizes = [8, 128], strides = [1, 1]} : vector<8x512xf32> to vector<8x128xf32>
    %175 = math.tanh %174 : vector<8x128xf32>
    %176 = vector.extract_strided_slice %161 {offsets = [0, 384], sizes = [8, 128], strides = [1, 1]} : vector<8x512xf32> to vector<8x128xf32>
    %177 = arith.negf %176 : vector<8x128xf32>
    %178 = math.exp %177 : vector<8x128xf32>
    %cst_55 = arith.constant 1.000000e+00 : f32
    %179 = vector.broadcast %cst_55 : f32 to vector<8x128xf32>
    %180 = arith.addf %179, %178 : vector<8x128xf32>
    %181 = arith.divf %179, %180 : vector<8x128xf32>
    %182 = arith.mulf %173, %120 : vector<8x128xf32>
    %183 = arith.mulf %167, %175 : vector<8x128xf32>
    %184 = arith.addf %182, %183 : vector<8x128xf32>
    %185 = math.tanh %184 : vector<8x128xf32>
    %186 = arith.mulf %181, %185 : vector<8x128xf32>
    %187 = tpu.concatenate %186, %151 in 1 : vector<8x128xf32>, vector<8x128xf32> -> vector<8x256xf32>
    %188 = arith.truncf %187 : vector<8x256xf32> to vector<8x256xbf16>
    %cst_56 = arith.constant dense<0.000000e+00> : vector<8x512xf32>
    %189 = tpu.matmul %188, %13, %cst_56 {dimension_numbers = #tpu.dot_dimension_numbers<[1], [0], [0], [1], [0, 0, 1, 1], [], []>} : vector<8x256xbf16>, vector<256x512xbf16>, vector<8x512xf32> -> vector<8x512xf32>
    %190 = arith.addf %189, %16 : vector<8x512xf32>
    %191 = vector.extract_strided_slice %190 {offsets = [0, 0], sizes = [8, 128], strides = [1, 1]} : vector<8x512xf32> to vector<8x128xf32>
    %192 = arith.negf %191 : vector<8x128xf32>
    %193 = math.exp %192 : vector<8x128xf32>
    %cst_57 = arith.constant 1.000000e+00 : f32
    %194 = vector.broadcast %cst_57 : f32 to vector<8x128xf32>
    %195 = arith.addf %194, %193 : vector<8x128xf32>
    %196 = arith.divf %194, %195 : vector<8x128xf32>
    %197 = vector.extract_strided_slice %190 {offsets = [0, 128], sizes = [8, 128], strides = [1, 1]} : vector<8x512xf32> to vector<8x128xf32>
    %198 = arith.negf %197 : vector<8x128xf32>
    %199 = math.exp %198 : vector<8x128xf32>
    %cst_58 = arith.constant 1.000000e+00 : f32
    %200 = vector.broadcast %cst_58 : f32 to vector<8x128xf32>
    %201 = arith.addf %200, %199 : vector<8x128xf32>
    %202 = arith.divf %200, %201 : vector<8x128xf32>
    %203 = vector.extract_strided_slice %190 {offsets = [0, 256], sizes = [8, 128], strides = [1, 1]} : vector<8x512xf32> to vector<8x128xf32>
    %204 = math.tanh %203 : vector<8x128xf32>
    %205 = vector.extract_strided_slice %190 {offsets = [0, 384], sizes = [8, 128], strides = [1, 1]} : vector<8x512xf32> to vector<8x128xf32>
    %206 = arith.negf %205 : vector<8x128xf32>
    %207 = math.exp %206 : vector<8x128xf32>
    %cst_59 = arith.constant 1.000000e+00 : f32
    %208 = vector.broadcast %cst_59 : f32 to vector<8x128xf32>
    %209 = arith.addf %208, %207 : vector<8x128xf32>
    %210 = arith.divf %208, %209 : vector<8x128xf32>
    %211 = arith.mulf %202, %149 : vector<8x128xf32>
    %212 = arith.mulf %196, %204 : vector<8x128xf32>
    %213 = arith.addf %211, %212 : vector<8x128xf32>
    %214 = math.tanh %213 : vector<8x128xf32>
    %215 = arith.mulf %210, %214 : vector<8x128xf32>
    %216 = arith.addi %22, %c2_i32 : i32
    %217 = vector.broadcast %216 : i32 to vector<8x128xi32>
    %218 = arith.cmpi eq, %21, %217 : vector<8x128xi32>
    %219 = arith.select %218, %215, %155 : vector<8x128xi1>, vector<8x128xf32>
    %c3_i32 = arith.constant 3 : i32
    %220 = arith.index_cast %c3_i32 : i32 to index
    %c0_60 = arith.constant 0 : index
    %c0_61 = arith.constant 0 : index
    %221 = vector.load %arg12[%220, %c0_60, %c0_61] : memref<8x8x512xf32, #tpu.memory_space<vmem>>, vector<1x8x512xf32>
    %222 = vector.shape_cast %221 : vector<1x8x512xf32> to vector<8x512xf32>
    %223 = arith.truncf %186 : vector<8x128xf32> to vector<8x128xbf16>
    %cst_62 = arith.constant dense<0.000000e+00> : vector<8x512xf32>
    %224 = tpu.matmul %223, %12, %cst_62 {dimension_numbers = #tpu.dot_dimension_numbers<[1], [0], [0], [1], [0, 0, 1, 1], [], []>} : vector<8x128xbf16>, vector<128x512xbf16>, vector<8x512xf32> -> vector<8x512xf32>
    %225 = arith.addf %222, %224 : vector<8x512xf32>
    %226 = vector.extract_strided_slice %225 {offsets = [0, 0], sizes = [8, 128], strides = [1, 1]} : vector<8x512xf32> to vector<8x128xf32>
    %227 = arith.negf %226 : vector<8x128xf32>
    %228 = math.exp %227 : vector<8x128xf32>
    %cst_63 = arith.constant 1.000000e+00 : f32
    %229 = vector.broadcast %cst_63 : f32 to vector<8x128xf32>
    %230 = arith.addf %229, %228 : vector<8x128xf32>
    %231 = arith.divf %229, %230 : vector<8x128xf32>
    %232 = vector.extract_strided_slice %225 {offsets = [0, 128], sizes = [8, 128], strides = [1, 1]} : vector<8x512xf32> to vector<8x128xf32>
    %233 = arith.negf %232 : vector<8x128xf32>
    %234 = math.exp %233 : vector<8x128xf32>
    %cst_64 = arith.constant 1.000000e+00 : f32
    %235 = vector.broadcast %cst_64 : f32 to vector<8x128xf32>
    %236 = arith.addf %235, %234 : vector<8x128xf32>
    %237 = arith.divf %235, %236 : vector<8x128xf32>
    %238 = vector.extract_strided_slice %225 {offsets = [0, 256], sizes = [8, 128], strides = [1, 1]} : vector<8x512xf32> to vector<8x128xf32>
    %239 = math.tanh %238 : vector<8x128xf32>
    %240 = vector.extract_strided_slice %225 {offsets = [0, 384], sizes = [8, 128], strides = [1, 1]} : vector<8x512xf32> to vector<8x128xf32>
    %241 = arith.negf %240 : vector<8x128xf32>
    %242 = math.exp %241 : vector<8x128xf32>
    %cst_65 = arith.constant 1.000000e+00 : f32
    %243 = vector.broadcast %cst_65 : f32 to vector<8x128xf32>
    %244 = arith.addf %243, %242 : vector<8x128xf32>
    %245 = arith.divf %243, %244 : vector<8x128xf32>
    %246 = arith.mulf %237, %184 : vector<8x128xf32>
    %247 = arith.mulf %231, %239 : vector<8x128xf32>
    %248 = arith.addf %246, %247 : vector<8x128xf32>
    %249 = math.tanh %248 : vector<8x128xf32>
    %250 = arith.mulf %245, %249 : vector<8x128xf32>
    %251 = tpu.concatenate %250, %215 in 1 : vector<8x128xf32>, vector<8x128xf32> -> vector<8x256xf32>
    %252 = arith.truncf %251 : vector<8x256xf32> to vector<8x256xbf16>
    %cst_66 = arith.constant dense<0.000000e+00> : vector<8x512xf32>
    %253 = tpu.matmul %252, %13, %cst_66 {dimension_numbers = #tpu.dot_dimension_numbers<[1], [0], [0], [1], [0, 0, 1, 1], [], []>} : vector<8x256xbf16>, vector<256x512xbf16>, vector<8x512xf32> -> vector<8x512xf32>
    %254 = arith.addf %253, %16 : vector<8x512xf32>
    %255 = vector.extract_strided_slice %254 {offsets = [0, 0], sizes = [8, 128], strides = [1, 1]} : vector<8x512xf32> to vector<8x128xf32>
    %256 = arith.negf %255 : vector<8x128xf32>
    %257 = math.exp %256 : vector<8x128xf32>
    %cst_67 = arith.constant 1.000000e+00 : f32
    %258 = vector.broadcast %cst_67 : f32 to vector<8x128xf32>
    %259 = arith.addf %258, %257 : vector<8x128xf32>
    %260 = arith.divf %258, %259 : vector<8x128xf32>
    %261 = vector.extract_strided_slice %254 {offsets = [0, 128], sizes = [8, 128], strides = [1, 1]} : vector<8x512xf32> to vector<8x128xf32>
    %262 = arith.negf %261 : vector<8x128xf32>
    %263 = math.exp %262 : vector<8x128xf32>
    %cst_68 = arith.constant 1.000000e+00 : f32
    %264 = vector.broadcast %cst_68 : f32 to vector<8x128xf32>
    %265 = arith.addf %264, %263 : vector<8x128xf32>
    %266 = arith.divf %264, %265 : vector<8x128xf32>
    %267 = vector.extract_strided_slice %254 {offsets = [0, 256], sizes = [8, 128], strides = [1, 1]} : vector<8x512xf32> to vector<8x128xf32>
    %268 = math.tanh %267 : vector<8x128xf32>
    %269 = vector.extract_strided_slice %254 {offsets = [0, 384], sizes = [8, 128], strides = [1, 1]} : vector<8x512xf32> to vector<8x128xf32>
    %270 = arith.negf %269 : vector<8x128xf32>
    %271 = math.exp %270 : vector<8x128xf32>
    %cst_69 = arith.constant 1.000000e+00 : f32
    %272 = vector.broadcast %cst_69 : f32 to vector<8x128xf32>
    %273 = arith.addf %272, %271 : vector<8x128xf32>
    %274 = arith.divf %272, %273 : vector<8x128xf32>
    %275 = arith.mulf %266, %213 : vector<8x128xf32>
    %276 = arith.mulf %260, %268 : vector<8x128xf32>
    %277 = arith.addf %275, %276 : vector<8x128xf32>
    %278 = math.tanh %277 : vector<8x128xf32>
    %279 = arith.mulf %274, %278 : vector<8x128xf32>
    %280 = arith.addi %22, %c3_i32 : i32
    %281 = vector.broadcast %280 : i32 to vector<8x128xi32>
    %282 = arith.cmpi eq, %21, %281 : vector<8x128xi32>
    %283 = arith.select %282, %279, %219 : vector<8x128xi1>, vector<8x128xf32>
    %c4_i32 = arith.constant 4 : i32
    %284 = arith.index_cast %c4_i32 : i32 to index
    %c0_70 = arith.constant 0 : index
    %c0_71 = arith.constant 0 : index
    %285 = vector.load %arg12[%284, %c0_70, %c0_71] : memref<8x8x512xf32, #tpu.memory_space<vmem>>, vector<1x8x512xf32>
    %286 = vector.shape_cast %285 : vector<1x8x512xf32> to vector<8x512xf32>
    %287 = arith.truncf %250 : vector<8x128xf32> to vector<8x128xbf16>
    %cst_72 = arith.constant dense<0.000000e+00> : vector<8x512xf32>
    %288 = tpu.matmul %287, %12, %cst_72 {dimension_numbers = #tpu.dot_dimension_numbers<[1], [0], [0], [1], [0, 0, 1, 1], [], []>} : vector<8x128xbf16>, vector<128x512xbf16>, vector<8x512xf32> -> vector<8x512xf32>
    %289 = arith.addf %286, %288 : vector<8x512xf32>
    %290 = vector.extract_strided_slice %289 {offsets = [0, 0], sizes = [8, 128], strides = [1, 1]} : vector<8x512xf32> to vector<8x128xf32>
    %291 = arith.negf %290 : vector<8x128xf32>
    %292 = math.exp %291 : vector<8x128xf32>
    %cst_73 = arith.constant 1.000000e+00 : f32
    %293 = vector.broadcast %cst_73 : f32 to vector<8x128xf32>
    %294 = arith.addf %293, %292 : vector<8x128xf32>
    %295 = arith.divf %293, %294 : vector<8x128xf32>
    %296 = vector.extract_strided_slice %289 {offsets = [0, 128], sizes = [8, 128], strides = [1, 1]} : vector<8x512xf32> to vector<8x128xf32>
    %297 = arith.negf %296 : vector<8x128xf32>
    %298 = math.exp %297 : vector<8x128xf32>
    %cst_74 = arith.constant 1.000000e+00 : f32
    %299 = vector.broadcast %cst_74 : f32 to vector<8x128xf32>
    %300 = arith.addf %299, %298 : vector<8x128xf32>
    %301 = arith.divf %299, %300 : vector<8x128xf32>
    %302 = vector.extract_strided_slice %289 {offsets = [0, 256], sizes = [8, 128], strides = [1, 1]} : vector<8x512xf32> to vector<8x128xf32>
    %303 = math.tanh %302 : vector<8x128xf32>
    %304 = vector.extract_strided_slice %289 {offsets = [0, 384], sizes = [8, 128], strides = [1, 1]} : vector<8x512xf32> to vector<8x128xf32>
    %305 = arith.negf %304 : vector<8x128xf32>
    %306 = math.exp %305 : vector<8x128xf32>
    %cst_75 = arith.constant 1.000000e+00 : f32
    %307 = vector.broadcast %cst_75 : f32 to vector<8x128xf32>
    %308 = arith.addf %307, %306 : vector<8x128xf32>
    %309 = arith.divf %307, %308 : vector<8x128xf32>
    %310 = arith.mulf %301, %248 : vector<8x128xf32>
    %311 = arith.mulf %295, %303 : vector<8x128xf32>
    %312 = arith.addf %310, %311 : vector<8x128xf32>
    %313 = math.tanh %312 : vector<8x128xf32>
    %314 = arith.mulf %309, %313 : vector<8x128xf32>
    %315 = tpu.concatenate %314, %279 in 1 : vector<8x128xf32>, vector<8x128xf32> -> vector<8x256xf32>
    %316 = arith.truncf %315 : vector<8x256xf32> to vector<8x256xbf16>
    %cst_76 = arith.constant dense<0.000000e+00> : vector<8x512xf32>
    %317 = tpu.matmul %316, %13, %cst_76 {dimension_numbers = #tpu.dot_dimension_numbers<[1], [0], [0], [1], [0, 0, 1, 1], [], []>} : vector<8x256xbf16>, vector<256x512xbf16>, vector<8x512xf32> -> vector<8x512xf32>
    %318 = arith.addf %317, %16 : vector<8x512xf32>
    %319 = vector.extract_strided_slice %318 {offsets = [0, 0], sizes = [8, 128], strides = [1, 1]} : vector<8x512xf32> to vector<8x128xf32>
    %320 = arith.negf %319 : vector<8x128xf32>
    %321 = math.exp %320 : vector<8x128xf32>
    %cst_77 = arith.constant 1.000000e+00 : f32
    %322 = vector.broadcast %cst_77 : f32 to vector<8x128xf32>
    %323 = arith.addf %322, %321 : vector<8x128xf32>
    %324 = arith.divf %322, %323 : vector<8x128xf32>
    %325 = vector.extract_strided_slice %318 {offsets = [0, 128], sizes = [8, 128], strides = [1, 1]} : vector<8x512xf32> to vector<8x128xf32>
    %326 = arith.negf %325 : vector<8x128xf32>
    %327 = math.exp %326 : vector<8x128xf32>
    %cst_78 = arith.constant 1.000000e+00 : f32
    %328 = vector.broadcast %cst_78 : f32 to vector<8x128xf32>
    %329 = arith.addf %328, %327 : vector<8x128xf32>
    %330 = arith.divf %328, %329 : vector<8x128xf32>
    %331 = vector.extract_strided_slice %318 {offsets = [0, 256], sizes = [8, 128], strides = [1, 1]} : vector<8x512xf32> to vector<8x128xf32>
    %332 = math.tanh %331 : vector<8x128xf32>
    %333 = vector.extract_strided_slice %318 {offsets = [0, 384], sizes = [8, 128], strides = [1, 1]} : vector<8x512xf32> to vector<8x128xf32>
    %334 = arith.negf %333 : vector<8x128xf32>
    %335 = math.exp %334 : vector<8x128xf32>
    %cst_79 = arith.constant 1.000000e+00 : f32
    %336 = vector.broadcast %cst_79 : f32 to vector<8x128xf32>
    %337 = arith.addf %336, %335 : vector<8x128xf32>
    %338 = arith.divf %336, %337 : vector<8x128xf32>
    %339 = arith.mulf %330, %277 : vector<8x128xf32>
    %340 = arith.mulf %324, %332 : vector<8x128xf32>
    %341 = arith.addf %339, %340 : vector<8x128xf32>
    %342 = math.tanh %341 : vector<8x128xf32>
    %343 = arith.mulf %338, %342 : vector<8x128xf32>
    %344 = arith.addi %22, %c4_i32 : i32
    %345 = vector.broadcast %344 : i32 to vector<8x128xi32>
    %346 = arith.cmpi eq, %21, %345 : vector<8x128xi32>
    %347 = arith.select %346, %343, %283 : vector<8x128xi1>, vector<8x128xf32>
    %c5_i32 = arith.constant 5 : i32
    %348 = arith.index_cast %c5_i32 : i32 to index
    %c0_80 = arith.constant 0 : index
    %c0_81 = arith.constant 0 : index
    %349 = vector.load %arg12[%348, %c0_80, %c0_81] : memref<8x8x512xf32, #tpu.memory_space<vmem>>, vector<1x8x512xf32>
    %350 = vector.shape_cast %349 : vector<1x8x512xf32> to vector<8x512xf32>
    %351 = arith.truncf %314 : vector<8x128xf32> to vector<8x128xbf16>
    %cst_82 = arith.constant dense<0.000000e+00> : vector<8x512xf32>
    %352 = tpu.matmul %351, %12, %cst_82 {dimension_numbers = #tpu.dot_dimension_numbers<[1], [0], [0], [1], [0, 0, 1, 1], [], []>} : vector<8x128xbf16>, vector<128x512xbf16>, vector<8x512xf32> -> vector<8x512xf32>
    %353 = arith.addf %350, %352 : vector<8x512xf32>
    %354 = vector.extract_strided_slice %353 {offsets = [0, 0], sizes = [8, 128], strides = [1, 1]} : vector<8x512xf32> to vector<8x128xf32>
    %355 = arith.negf %354 : vector<8x128xf32>
    %356 = math.exp %355 : vector<8x128xf32>
    %cst_83 = arith.constant 1.000000e+00 : f32
    %357 = vector.broadcast %cst_83 : f32 to vector<8x128xf32>
    %358 = arith.addf %357, %356 : vector<8x128xf32>
    %359 = arith.divf %357, %358 : vector<8x128xf32>
    %360 = vector.extract_strided_slice %353 {offsets = [0, 128], sizes = [8, 128], strides = [1, 1]} : vector<8x512xf32> to vector<8x128xf32>
    %361 = arith.negf %360 : vector<8x128xf32>
    %362 = math.exp %361 : vector<8x128xf32>
    %cst_84 = arith.constant 1.000000e+00 : f32
    %363 = vector.broadcast %cst_84 : f32 to vector<8x128xf32>
    %364 = arith.addf %363, %362 : vector<8x128xf32>
    %365 = arith.divf %363, %364 : vector<8x128xf32>
    %366 = vector.extract_strided_slice %353 {offsets = [0, 256], sizes = [8, 128], strides = [1, 1]} : vector<8x512xf32> to vector<8x128xf32>
    %367 = math.tanh %366 : vector<8x128xf32>
    %368 = vector.extract_strided_slice %353 {offsets = [0, 384], sizes = [8, 128], strides = [1, 1]} : vector<8x512xf32> to vector<8x128xf32>
    %369 = arith.negf %368 : vector<8x128xf32>
    %370 = math.exp %369 : vector<8x128xf32>
    %cst_85 = arith.constant 1.000000e+00 : f32
    %371 = vector.broadcast %cst_85 : f32 to vector<8x128xf32>
    %372 = arith.addf %371, %370 : vector<8x128xf32>
    %373 = arith.divf %371, %372 : vector<8x128xf32>
    %374 = arith.mulf %365, %312 : vector<8x128xf32>
    %375 = arith.mulf %359, %367 : vector<8x128xf32>
    %376 = arith.addf %374, %375 : vector<8x128xf32>
    %377 = math.tanh %376 : vector<8x128xf32>
    %378 = arith.mulf %373, %377 : vector<8x128xf32>
    %379 = tpu.concatenate %378, %343 in 1 : vector<8x128xf32>, vector<8x128xf32> -> vector<8x256xf32>
    %380 = arith.truncf %379 : vector<8x256xf32> to vector<8x256xbf16>
    %cst_86 = arith.constant dense<0.000000e+00> : vector<8x512xf32>
    %381 = tpu.matmul %380, %13, %cst_86 {dimension_numbers = #tpu.dot_dimension_numbers<[1], [0], [0], [1], [0, 0, 1, 1], [], []>} : vector<8x256xbf16>, vector<256x512xbf16>, vector<8x512xf32> -> vector<8x512xf32>
    %382 = arith.addf %381, %16 : vector<8x512xf32>
    %383 = vector.extract_strided_slice %382 {offsets = [0, 0], sizes = [8, 128], strides = [1, 1]} : vector<8x512xf32> to vector<8x128xf32>
    %384 = arith.negf %383 : vector<8x128xf32>
    %385 = math.exp %384 : vector<8x128xf32>
    %cst_87 = arith.constant 1.000000e+00 : f32
    %386 = vector.broadcast %cst_87 : f32 to vector<8x128xf32>
    %387 = arith.addf %386, %385 : vector<8x128xf32>
    %388 = arith.divf %386, %387 : vector<8x128xf32>
    %389 = vector.extract_strided_slice %382 {offsets = [0, 128], sizes = [8, 128], strides = [1, 1]} : vector<8x512xf32> to vector<8x128xf32>
    %390 = arith.negf %389 : vector<8x128xf32>
    %391 = math.exp %390 : vector<8x128xf32>
    %cst_88 = arith.constant 1.000000e+00 : f32
    %392 = vector.broadcast %cst_88 : f32 to vector<8x128xf32>
    %393 = arith.addf %392, %391 : vector<8x128xf32>
    %394 = arith.divf %392, %393 : vector<8x128xf32>
    %395 = vector.extract_strided_slice %382 {offsets = [0, 256], sizes = [8, 128], strides = [1, 1]} : vector<8x512xf32> to vector<8x128xf32>
    %396 = math.tanh %395 : vector<8x128xf32>
    %397 = vector.extract_strided_slice %382 {offsets = [0, 384], sizes = [8, 128], strides = [1, 1]} : vector<8x512xf32> to vector<8x128xf32>
    %398 = arith.negf %397 : vector<8x128xf32>
    %399 = math.exp %398 : vector<8x128xf32>
    %cst_89 = arith.constant 1.000000e+00 : f32
    %400 = vector.broadcast %cst_89 : f32 to vector<8x128xf32>
    %401 = arith.addf %400, %399 : vector<8x128xf32>
    %402 = arith.divf %400, %401 : vector<8x128xf32>
    %403 = arith.mulf %394, %341 : vector<8x128xf32>
    %404 = arith.mulf %388, %396 : vector<8x128xf32>
    %405 = arith.addf %403, %404 : vector<8x128xf32>
    %406 = math.tanh %405 : vector<8x128xf32>
    %407 = arith.mulf %402, %406 : vector<8x128xf32>
    %408 = arith.addi %22, %c5_i32 : i32
    %409 = vector.broadcast %408 : i32 to vector<8x128xi32>
    %410 = arith.cmpi eq, %21, %409 : vector<8x128xi32>
    %411 = arith.select %410, %407, %347 : vector<8x128xi1>, vector<8x128xf32>
    %c6_i32 = arith.constant 6 : i32
    %412 = arith.index_cast %c6_i32 : i32 to index
    %c0_90 = arith.constant 0 : index
    %c0_91 = arith.constant 0 : index
    %413 = vector.load %arg12[%412, %c0_90, %c0_91] : memref<8x8x512xf32, #tpu.memory_space<vmem>>, vector<1x8x512xf32>
    %414 = vector.shape_cast %413 : vector<1x8x512xf32> to vector<8x512xf32>
    %415 = arith.truncf %378 : vector<8x128xf32> to vector<8x128xbf16>
    %cst_92 = arith.constant dense<0.000000e+00> : vector<8x512xf32>
    %416 = tpu.matmul %415, %12, %cst_92 {dimension_numbers = #tpu.dot_dimension_numbers<[1], [0], [0], [1], [0, 0, 1, 1], [], []>} : vector<8x128xbf16>, vector<128x512xbf16>, vector<8x512xf32> -> vector<8x512xf32>
    %417 = arith.addf %414, %416 : vector<8x512xf32>
    %418 = vector.extract_strided_slice %417 {offsets = [0, 0], sizes = [8, 128], strides = [1, 1]} : vector<8x512xf32> to vector<8x128xf32>
    %419 = arith.negf %418 : vector<8x128xf32>
    %420 = math.exp %419 : vector<8x128xf32>
    %cst_93 = arith.constant 1.000000e+00 : f32
    %421 = vector.broadcast %cst_93 : f32 to vector<8x128xf32>
    %422 = arith.addf %421, %420 : vector<8x128xf32>
    %423 = arith.divf %421, %422 : vector<8x128xf32>
    %424 = vector.extract_strided_slice %417 {offsets = [0, 128], sizes = [8, 128], strides = [1, 1]} : vector<8x512xf32> to vector<8x128xf32>
    %425 = arith.negf %424 : vector<8x128xf32>
    %426 = math.exp %425 : vector<8x128xf32>
    %cst_94 = arith.constant 1.000000e+00 : f32
    %427 = vector.broadcast %cst_94 : f32 to vector<8x128xf32>
    %428 = arith.addf %427, %426 : vector<8x128xf32>
    %429 = arith.divf %427, %428 : vector<8x128xf32>
    %430 = vector.extract_strided_slice %417 {offsets = [0, 256], sizes = [8, 128], strides = [1, 1]} : vector<8x512xf32> to vector<8x128xf32>
    %431 = math.tanh %430 : vector<8x128xf32>
    %432 = vector.extract_strided_slice %417 {offsets = [0, 384], sizes = [8, 128], strides = [1, 1]} : vector<8x512xf32> to vector<8x128xf32>
    %433 = arith.negf %432 : vector<8x128xf32>
    %434 = math.exp %433 : vector<8x128xf32>
    %cst_95 = arith.constant 1.000000e+00 : f32
    %435 = vector.broadcast %cst_95 : f32 to vector<8x128xf32>
    %436 = arith.addf %435, %434 : vector<8x128xf32>
    %437 = arith.divf %435, %436 : vector<8x128xf32>
    %438 = arith.mulf %429, %376 : vector<8x128xf32>
    %439 = arith.mulf %423, %431 : vector<8x128xf32>
    %440 = arith.addf %438, %439 : vector<8x128xf32>
    %441 = math.tanh %440 : vector<8x128xf32>
    %442 = arith.mulf %437, %441 : vector<8x128xf32>
    %443 = tpu.concatenate %442, %407 in 1 : vector<8x128xf32>, vector<8x128xf32> -> vector<8x256xf32>
    %444 = arith.truncf %443 : vector<8x256xf32> to vector<8x256xbf16>
    %cst_96 = arith.constant dense<0.000000e+00> : vector<8x512xf32>
    %445 = tpu.matmul %444, %13, %cst_96 {dimension_numbers = #tpu.dot_dimension_numbers<[1], [0], [0], [1], [0, 0, 1, 1], [], []>} : vector<8x256xbf16>, vector<256x512xbf16>, vector<8x512xf32> -> vector<8x512xf32>
    %446 = arith.addf %445, %16 : vector<8x512xf32>
    %447 = vector.extract_strided_slice %446 {offsets = [0, 0], sizes = [8, 128], strides = [1, 1]} : vector<8x512xf32> to vector<8x128xf32>
    %448 = arith.negf %447 : vector<8x128xf32>
    %449 = math.exp %448 : vector<8x128xf32>
    %cst_97 = arith.constant 1.000000e+00 : f32
    %450 = vector.broadcast %cst_97 : f32 to vector<8x128xf32>
    %451 = arith.addf %450, %449 : vector<8x128xf32>
    %452 = arith.divf %450, %451 : vector<8x128xf32>
    %453 = vector.extract_strided_slice %446 {offsets = [0, 128], sizes = [8, 128], strides = [1, 1]} : vector<8x512xf32> to vector<8x128xf32>
    %454 = arith.negf %453 : vector<8x128xf32>
    %455 = math.exp %454 : vector<8x128xf32>
    %cst_98 = arith.constant 1.000000e+00 : f32
    %456 = vector.broadcast %cst_98 : f32 to vector<8x128xf32>
    %457 = arith.addf %456, %455 : vector<8x128xf32>
    %458 = arith.divf %456, %457 : vector<8x128xf32>
    %459 = vector.extract_strided_slice %446 {offsets = [0, 256], sizes = [8, 128], strides = [1, 1]} : vector<8x512xf32> to vector<8x128xf32>
    %460 = math.tanh %459 : vector<8x128xf32>
    %461 = vector.extract_strided_slice %446 {offsets = [0, 384], sizes = [8, 128], strides = [1, 1]} : vector<8x512xf32> to vector<8x128xf32>
    %462 = arith.negf %461 : vector<8x128xf32>
    %463 = math.exp %462 : vector<8x128xf32>
    %cst_99 = arith.constant 1.000000e+00 : f32
    %464 = vector.broadcast %cst_99 : f32 to vector<8x128xf32>
    %465 = arith.addf %464, %463 : vector<8x128xf32>
    %466 = arith.divf %464, %465 : vector<8x128xf32>
    %467 = arith.mulf %458, %405 : vector<8x128xf32>
    %468 = arith.mulf %452, %460 : vector<8x128xf32>
    %469 = arith.addf %467, %468 : vector<8x128xf32>
    %470 = math.tanh %469 : vector<8x128xf32>
    %471 = arith.mulf %466, %470 : vector<8x128xf32>
    %472 = arith.addi %22, %c6_i32 : i32
    %473 = vector.broadcast %472 : i32 to vector<8x128xi32>
    %474 = arith.cmpi eq, %21, %473 : vector<8x128xi32>
    %475 = arith.select %474, %471, %411 : vector<8x128xi1>, vector<8x128xf32>
    %c7_i32 = arith.constant 7 : i32
    %476 = arith.index_cast %c7_i32 : i32 to index
    %c0_100 = arith.constant 0 : index
    %c0_101 = arith.constant 0 : index
    %477 = vector.load %arg12[%476, %c0_100, %c0_101] : memref<8x8x512xf32, #tpu.memory_space<vmem>>, vector<1x8x512xf32>
    %478 = vector.shape_cast %477 : vector<1x8x512xf32> to vector<8x512xf32>
    %479 = arith.truncf %442 : vector<8x128xf32> to vector<8x128xbf16>
    %cst_102 = arith.constant dense<0.000000e+00> : vector<8x512xf32>
    %480 = tpu.matmul %479, %12, %cst_102 {dimension_numbers = #tpu.dot_dimension_numbers<[1], [0], [0], [1], [0, 0, 1, 1], [], []>} : vector<8x128xbf16>, vector<128x512xbf16>, vector<8x512xf32> -> vector<8x512xf32>
    %481 = arith.addf %478, %480 : vector<8x512xf32>
    %482 = vector.extract_strided_slice %481 {offsets = [0, 0], sizes = [8, 128], strides = [1, 1]} : vector<8x512xf32> to vector<8x128xf32>
    %483 = arith.negf %482 : vector<8x128xf32>
    %484 = math.exp %483 : vector<8x128xf32>
    %cst_103 = arith.constant 1.000000e+00 : f32
    %485 = vector.broadcast %cst_103 : f32 to vector<8x128xf32>
    %486 = arith.addf %485, %484 : vector<8x128xf32>
    %487 = arith.divf %485, %486 : vector<8x128xf32>
    %488 = vector.extract_strided_slice %481 {offsets = [0, 128], sizes = [8, 128], strides = [1, 1]} : vector<8x512xf32> to vector<8x128xf32>
    %489 = arith.negf %488 : vector<8x128xf32>
    %490 = math.exp %489 : vector<8x128xf32>
    %cst_104 = arith.constant 1.000000e+00 : f32
    %491 = vector.broadcast %cst_104 : f32 to vector<8x128xf32>
    %492 = arith.addf %491, %490 : vector<8x128xf32>
    %493 = arith.divf %491, %492 : vector<8x128xf32>
    %494 = vector.extract_strided_slice %481 {offsets = [0, 256], sizes = [8, 128], strides = [1, 1]} : vector<8x512xf32> to vector<8x128xf32>
    %495 = math.tanh %494 : vector<8x128xf32>
    %496 = vector.extract_strided_slice %481 {offsets = [0, 384], sizes = [8, 128], strides = [1, 1]} : vector<8x512xf32> to vector<8x128xf32>
    %497 = arith.negf %496 : vector<8x128xf32>
    %498 = math.exp %497 : vector<8x128xf32>
    %cst_105 = arith.constant 1.000000e+00 : f32
    %499 = vector.broadcast %cst_105 : f32 to vector<8x128xf32>
    %500 = arith.addf %499, %498 : vector<8x128xf32>
    %501 = arith.divf %499, %500 : vector<8x128xf32>
    %502 = arith.mulf %493, %440 : vector<8x128xf32>
    %503 = arith.mulf %487, %495 : vector<8x128xf32>
    %504 = arith.addf %502, %503 : vector<8x128xf32>
    %505 = math.tanh %504 : vector<8x128xf32>
    %506 = arith.mulf %501, %505 : vector<8x128xf32>
    %507 = tpu.concatenate %506, %471 in 1 : vector<8x128xf32>, vector<8x128xf32> -> vector<8x256xf32>
    %508 = arith.truncf %507 : vector<8x256xf32> to vector<8x256xbf16>
    %cst_106 = arith.constant dense<0.000000e+00> : vector<8x512xf32>
    %509 = tpu.matmul %508, %13, %cst_106 {dimension_numbers = #tpu.dot_dimension_numbers<[1], [0], [0], [1], [0, 0, 1, 1], [], []>} : vector<8x256xbf16>, vector<256x512xbf16>, vector<8x512xf32> -> vector<8x512xf32>
    %510 = arith.addf %509, %16 : vector<8x512xf32>
    %511 = vector.extract_strided_slice %510 {offsets = [0, 0], sizes = [8, 128], strides = [1, 1]} : vector<8x512xf32> to vector<8x128xf32>
    %512 = arith.negf %511 : vector<8x128xf32>
    %513 = math.exp %512 : vector<8x128xf32>
    %cst_107 = arith.constant 1.000000e+00 : f32
    %514 = vector.broadcast %cst_107 : f32 to vector<8x128xf32>
    %515 = arith.addf %514, %513 : vector<8x128xf32>
    %516 = arith.divf %514, %515 : vector<8x128xf32>
    %517 = vector.extract_strided_slice %510 {offsets = [0, 128], sizes = [8, 128], strides = [1, 1]} : vector<8x512xf32> to vector<8x128xf32>
    %518 = arith.negf %517 : vector<8x128xf32>
    %519 = math.exp %518 : vector<8x128xf32>
    %cst_108 = arith.constant 1.000000e+00 : f32
    %520 = vector.broadcast %cst_108 : f32 to vector<8x128xf32>
    %521 = arith.addf %520, %519 : vector<8x128xf32>
    %522 = arith.divf %520, %521 : vector<8x128xf32>
    %523 = vector.extract_strided_slice %510 {offsets = [0, 256], sizes = [8, 128], strides = [1, 1]} : vector<8x512xf32> to vector<8x128xf32>
    %524 = math.tanh %523 : vector<8x128xf32>
    %525 = vector.extract_strided_slice %510 {offsets = [0, 384], sizes = [8, 128], strides = [1, 1]} : vector<8x512xf32> to vector<8x128xf32>
    %526 = arith.negf %525 : vector<8x128xf32>
    %527 = math.exp %526 : vector<8x128xf32>
    %cst_109 = arith.constant 1.000000e+00 : f32
    %528 = vector.broadcast %cst_109 : f32 to vector<8x128xf32>
    %529 = arith.addf %528, %527 : vector<8x128xf32>
    %530 = arith.divf %528, %529 : vector<8x128xf32>
    %531 = arith.mulf %522, %469 : vector<8x128xf32>
    %532 = arith.mulf %516, %524 : vector<8x128xf32>
    %533 = arith.addf %531, %532 : vector<8x128xf32>
    %534 = math.tanh %533 : vector<8x128xf32>
    %535 = arith.mulf %530, %534 : vector<8x128xf32>
    %536 = arith.addi %22, %c7_i32 : i32
    %537 = vector.broadcast %536 : i32 to vector<8x128xi32>
    %538 = arith.cmpi eq, %21, %537 : vector<8x128xi32>
    %539 = arith.select %538, %535, %475 : vector<8x128xi1>, vector<8x128xf32>
    %c8_i32_110 = arith.constant 8 : i32
    %c0_111 = arith.constant 0 : index
    %c0_112 = arith.constant 0 : index
    %540 = vector.load %arg13[%c0_111, %c0_112] : memref<8x128xf32, #tpu.memory_space<vmem>>, vector<8x128xf32>
    tpu.vector_store %arg13[%c0_111, %c0_112], %506 {strides = array<i32>} : memref<8x128xf32, #tpu.memory_space<vmem>>, vector<8x128xf32>,
    %c0_113 = arith.constant 0 : index
    %c0_114 = arith.constant 0 : index
    %541 = vector.load %arg14[%c0_113, %c0_114] : memref<8x128xf32, #tpu.memory_space<vmem>>, vector<8x128xf32>
    tpu.vector_store %arg14[%c0_113, %c0_114], %504 {strides = array<i32>} : memref<8x128xf32, #tpu.memory_space<vmem>>, vector<8x128xf32>,
    %c0_115 = arith.constant 0 : index
    %c0_116 = arith.constant 0 : index
    %542 = vector.load %arg15[%c0_115, %c0_116] : memref<8x128xf32, #tpu.memory_space<vmem>>, vector<8x128xf32>
    tpu.vector_store %arg15[%c0_115, %c0_116], %535 {strides = array<i32>} : memref<8x128xf32, #tpu.memory_space<vmem>>, vector<8x128xf32>,
    %c0_117 = arith.constant 0 : index
    %c0_118 = arith.constant 0 : index
    %543 = vector.load %arg16[%c0_117, %c0_118] : memref<8x128xf32, #tpu.memory_space<vmem>>, vector<8x128xf32>
    tpu.vector_store %arg16[%c0_117, %c0_118], %533 {strides = array<i32>} : memref<8x128xf32, #tpu.memory_space<vmem>>, vector<8x128xf32>,
    %c0_119 = arith.constant 0 : index
    %c0_120 = arith.constant 0 : index
    %544 = vector.load %arg17[%c0_119, %c0_120] : memref<8x128xf32, #tpu.memory_space<vmem>>, vector<8x128xf32>
    tpu.vector_store %arg17[%c0_119, %c0_120], %539 {strides = array<i32>} : memref<8x128xf32, #tpu.memory_space<vmem>>, vector<8x128xf32>,
    %c1_i32_121 = arith.constant 1 : i32
    %545 = arith.cmpi eq, %arg1, %c1_i32_121 : i32
    %546 = arith.extui %545 : i1 to i32
    %c0_i32_122 = arith.constant 0 : i32
    %547 = arith.cmpi ne, %546, %c0_i32_122 : i32
    scf.if %547 {
      %c0_123 = arith.constant 0 : index
      %c0_124 = arith.constant 0 : index
      %548 = vector.load %arg17[%c0_123, %c0_124] : memref<8x128xf32, #tpu.memory_space<vmem>>, vector<8x128xf32>
      %c0_125 = arith.constant 0 : index
      %c0_126 = arith.constant 0 : index
      %549 = vector.load %arg9[%c0_125, %c0_126] : memref<1x128xf32, #tpu.memory_space<vmem>>, vector<1x128xf32>
      %550 = vector.broadcast %549 : vector<1x128xf32> to vector<8x128xf32>
      %551 = arith.mulf %548, %550 : vector<8x128xf32>
      %cst_127 = arith.constant dense<0.000000e+00> : vector<8xf32>
      %552 = vector.multi_reduction <add>, %551, %cst_127 [1] : vector<8x128xf32> to vector<8xf32>
      %553 = vector.shape_cast %552 : vector<8xf32> to vector<8x1xf32>
      %c0_128 = arith.constant 0 : index
      %c0_129 = arith.constant 0 : index
      %554 = vector.load %arg10[%c0_128, %c0_129] : memref<1x1xf32, #tpu.memory_space<vmem>>, vector<1x1xf32>
      %555 = vector.broadcast %554 : vector<1x1xf32> to vector<8x1xf32>
      %556 = arith.addf %553, %555 : vector<8x1xf32>
      %557 = arith.negf %556 : vector<8x1xf32>
      %558 = math.exp %557 : vector<8x1xf32>
      %cst_130 = arith.constant 1.000000e+00 : f32
      %559 = vector.broadcast %cst_130 : f32 to vector<8x1xf32>
      %560 = arith.addf %559, %558 : vector<8x1xf32>
      %561 = arith.divf %559, %560 : vector<8x1xf32>
      %562 = vector.shape_cast %561 : vector<8x1xf32> to vector<8x1xf32>
      %563 = vector.broadcast %562 : vector<8x1xf32> to vector<8x128xf32>
      %c0_131 = arith.constant 0 : index
      %c0_132 = arith.constant 0 : index
      %564 = vector.load %arg11[%c0_131, %c0_132] : memref<8x128xf32, #tpu.memory_space<vmem>>, vector<8x128xf32>
      tpu.vector_store %arg11[%c0_131, %c0_132], %563 {strides = array<i32>} : memref<8x128xf32, #tpu.memory_space<vmem>>, vector<8x128xf32>,
    } else {
    }
    return
  }
  func.func @transform_0(%arg0: i32, %arg1: i32) -> (i32, i32, i32) {
    %c0_i32 = arith.constant 0 : i32
    %c0_i32_0 = arith.constant 0 : i32
    return %arg1, %arg0, %c0_i32 : i32, i32, i32
  }
  func.func @transform_1(%arg0: i32, %arg1: i32) -> (i32, i32) {
    %c0_i32 = arith.constant 0 : i32
    %c0_i32_0 = arith.constant 0 : i32
    return %arg0, %c0_i32 : i32, i32
  }
  func.func @transform_2(%arg0: i32, %arg1: i32) -> (i32, i32) {
    %c0_i32 = arith.constant 0 : i32
    %c0_i32_0 = arith.constant 0 : i32
    %c0_i32_1 = arith.constant 0 : i32
    return %c0_i32, %c0_i32_0 : i32, i32
  }
  func.func @transform_3(%arg0: i32, %arg1: i32) -> (i32, i32) {
    %c0_i32 = arith.constant 0 : i32
    %c0_i32_0 = arith.constant 0 : i32
    %c0_i32_1 = arith.constant 0 : i32
    return %c0_i32, %c0_i32_0 : i32, i32
  }
  func.func @transform_4(%arg0: i32, %arg1: i32) -> (i32, i32) {
    %c0_i32 = arith.constant 0 : i32
    %c0_i32_0 = arith.constant 0 : i32
    %c0_i32_1 = arith.constant 0 : i32
    return %c0_i32, %c0_i32_0 : i32, i32
  }
  func.func @transform_5(%arg0: i32, %arg1: i32) -> (i32, i32) {
    %c0_i32 = arith.constant 0 : i32
    %c0_i32_0 = arith.constant 0 : i32
    %c0_i32_1 = arith.constant 0 : i32
    return %c0_i32, %c0_i32_0 : i32, i32
  }
  func.func @transform_6(%arg0: i32, %arg1: i32) -> (i32, i32) {
    %c0_i32 = arith.constant 0 : i32
    %c0_i32_0 = arith.constant 0 : i32
    %c0_i32_1 = arith.constant 0 : i32
    return %c0_i32, %c0_i32_0 : i32, i32
  }
  func.func @transform_7(%arg0: i32, %arg1: i32) -> (i32, i32) {
    %c0_i32 = arith.constant 0 : i32
    %c0_i32_0 = arith.constant 0 : i32
    %c0_i32_1 = arith.constant 0 : i32
    return %c0_i32, %c0_i32_0 : i32, i32
  }
  func.func @transform_8(%arg0: i32, %arg1: i32) -> (i32, i32) {
    %c0_i32 = arith.constant 0 : i32
    %c0_i32_0 = arith.constant 0 : i32
    %c0_i32_1 = arith.constant 0 : i32
    return %c0_i32, %c0_i32_0 : i32, i32
  }
  func.func @transform_9(%arg0: i32, %arg1: i32) -> (i32, i32) {
    %c0_i32 = arith.constant 0 : i32
    %c0_i32_0 = arith.constant 0 : i32
    return %arg0, %c0_i32 : i32, i32
  }
}

</mosaic_0001>

<llo_original>
// kernel: tpu_custom_call.1
$region0: #{tpu_custom_call.1}
  #allocation0 [shape = 'u32[]', space=smem, size = 0x4, offset = 0x4, fixed_abs, tag = 'smem constant byte address 0x4 - core index']
  #allocation1 [shape = 'u32[144,128]{1,0:T(1,128)}', space=vmem, size = 0x12000, scoped, tag = 'internal scratch']
  #allocation2 [shape = 'f32[8,8,512]{2,1,0:T(8,128)}', space=vmem, size = 0x20000, scoped, tag = 'scratch operand']
  #allocation3 [shape = 'f32[8,128]{1,0:T(8,128)}', space=vmem, size = 0x1000, scoped, tag = 'scratch operand']
  #allocation4 [shape = 'f32[8,128]{1,0:T(8,128)}', space=vmem, size = 0x1000, scoped, tag = 'scratch operand']
  #allocation5 [shape = 'f32[8,128]{1,0:T(8,128)}', space=vmem, size = 0x1000, scoped, tag = 'scratch operand']
  #allocation6 [shape = 'f32[8,128]{1,0:T(8,128)}', space=vmem, size = 0x1000, scoped, tag = 'scratch operand']
  #allocation7 [shape = 'f32[8,128]{1,0:T(8,128)}', space=vmem, size = 0x1000, scoped, tag = 'scratch operand']
  #allocation8 [shape = 'f32[1,1]{1,0:T(1,128)S(1)}', space=vmem, size = 0x200, scoped, tag = 'scoped memory for tpu_custom_call.1']
  %s0 = inlined_call_operand.hbm [shape: bf16[16,8,32], index: 0, kind: input, shape index: {}]
  %s1 = inlined_call_operand.vmem [shape: s32[8,1], index: 1, kind: input, shape index: {}]
  %s2 = inlined_call_operand.hbm [shape: bf16[32,512], index: 2, kind: input, shape index: {}]
  %s3 = inlined_call_operand.hbm [shape: bf16[128,512], index: 3, kind: input, shape index: {}]
  %s4 = inlined_call_operand.vmem [shape: f32[1,512], index: 4, kind: input, shape index: {}]
  %s5 = inlined_call_operand.hbm [shape: bf16[256,512], index: 5, kind: input, shape index: {}]
  %s6 = inlined_call_operand.vmem [shape: f32[1,512], index: 6, kind: input, shape index: {}]
  %s7 = inlined_call_operand.vmem [shape: f32[1,128], index: 7, kind: input, shape index: {}]
  %s8 = inlined_call_operand.<no memory space> [shape: f32[1,1], index: 8, kind: input, shape index: {}]
  %s9 = inlined_call_operand.hbm [shape: f32[8,128], index: 9, kind: output, shape index: {}]
  %s10 = sld [smem:[#allocation0]]
  $region93: #{tpu_custom_call.1} parent=0
    _
  %s12 = ssub.s32 1, %s10
  %s13 = scalar_select 0, %s12, %s10
  %v14 = vstv %s8
  %15 = vst [vmem:[#allocation8] sm:$0x1] %v14
  $region1: #{tpu_custom_call.1} parent=0
    #allocation9 [shape = 'u8[32768]{0}', space=vmem, size = 0x8000, scoped, tag = 'input window, operand 0']
    #allocation10 [shape = 's32[2]{0}', space=sflag, size = 0x8, scoped, tag = 'scoped memory for tpu_custom_call.1']
    #allocation11 [shape = 's32[2]{0}', space=sflag, size = 0x8, scoped, tag = 'scoped memory for tpu_custom_call.1']
    #allocation12 [shape = 'u8[32768]{0}', space=vmem, size = 0x8000, scoped, tag = 'input window, operand 2, single buffered']
    #allocation13 [shape = 's32[1]{0}', space=sflag, size = 0x4, scoped, tag = 'scoped memory for tpu_custom_call.1']
    #allocation14 [shape = 'u8[131072]{0}', space=vmem, size = 0x20000, scoped, tag = 'input window, operand 3, single buffered']
    #allocation15 [shape = 'u8[262144]{0}', space=vmem, size = 0x40000, scoped, tag = 'input window, operand 5, single buffered']
    #allocation16 [shape = 's32[1]{0}', space=sflag, size = 0x4, scoped, tag = 'scoped memory for tpu_custom_call.1']
    #allocation17 [shape = 'u8[4096]{0}', space=vmem, size = 0x1000, scoped, tag = 'output window, operand 0, single buffered']
    %16 = vsyncpa [#allocation10], 0
    %s17 = scalar_lea.sflag [#allocation10], 1
    %18 = vsyncpa %s17, 0
    %19 = vsyncpa [#allocation13], 0
    %20 = vsyncpa [#allocation16], 0
    %21 = vsyncpa [#allocation11], 0
    loop: start=0, step=1, limit=4
    $region2: #{tpu_custom_call.1} parent=1 // loop_pre_header
      _
    $region3: #{tpu_custom_call.1} parent=1 // loop_header
      %s23 = sphi 0, %s27
      %p24 = scmp.ge.s32.totalorder %s23, 4
      %s30 = sphi 0, %s42
      %s31 = sphi 0, %s38
      %s32 = sphi 0, %s30
      %s33 = sphi 0, %s31
      %s34 = sphi 0, %s32
      %s35 = sphi 0, %s33
      %s47 = sphi 0, %s49
      %s50 = sphi 0, %s47
      %s51 = sphi 0, %s50
      %s67 = sphi 0, %s51
      %s73 = sphi 0, %s75
      %s76 = sphi 0, %s73
      %s77 = sphi 0, %s76
      %s93 = sphi 0, %s77
      %s97 = sphi 0, %s97
      %s99 = sphi 0, %s97
      %s100 = sphi 0, %s99
      %s114 = sphi 0, %s100
      %s118 = sphi 0, %s118
      %s120 = sphi 0, %s118
      %s121 = sphi 0, %s120
      %s135 = sphi 0, %s121
      %s139 = sphi 0, %s139
      %s141 = sphi 0, %s139
      %s142 = sphi 0, %s141
      %s156 = sphi 0, %s142
      %s160 = sphi 0, %s160
      %s162 = sphi 0, %s160
      %s163 = sphi 0, %s162
      %s177 = sphi 0, %s163
      %s181 = sphi 0, %s181
      %s183 = sphi 0, %s181
      %s184 = sphi 0, %s183
      %s198 = sphi 0, %s184
      %s202 = sphi 0, %s202
      %s204 = sphi 0, %s202
      %s205 = sphi 0, %s204
      %s219 = sphi 0, %s205
      %s223 = sphi 0, %s223
      %s225 = sphi 0, %s223
      %s226 = sphi 0, %s225
      %s240 = sphi 0, %s226
      %s246 = sphi 0, %s248
      %s249 = sphi 0, %s246
      %s250 = sphi 0, %s249
      %s266 = sphi 0, %s250
    $region4: #{tpu_custom_call.1} parent=1 // loop_header_branch
      %26 = sbr.rel (%p24) target = $region8
    $region5: #{tpu_custom_call.1} parent=1 // loop_body
      %s28 = ssub.s32 %s23, 1
      %s29 = ssub.s32 %s23, 2
      %s36 = sadd.s32 1, %s31
      %p37 = scmp.ge.s32.totalorder %s36, 2
      %s38 = scalar_select %p37, 0, %s36
      %s39 = sadd.s32 1, %s30
      %s40 = scalar_select %p37, %s39, %s30
      %p41 = scmp.ge.s32.totalorder %s40, 1
      %s42 = scalar_select %p41, 0, %s40
      %s43 = ssub.s32 %s31, %s38
      %s44 = ssub.s32 %s30, %s42
      %s45 = sor.u32 %s43, %s44
      %p46 = scmp.eq.s32.totalorder %s45, 0
      %s48 = sadd.s32 %s47, 1
      %s49 = scalar_select %p46, %s47, %s48
      %p52 = pneg %p46
      %p53 = scmp.eq.s32.totalorder %s23, 1
      %p54 = por %p52, %p53
      %p55 = scmp.ne.s32.totalorder %s47, %s50
      %p56 = scmp.eq.s32.totalorder %s23, 0
      %p57 = por %p55, %p56
      %p58 = scmp.ne.s32.totalorder %s47, %s50
      %p59 = scmp.eq.s32.totalorder %s28, 1
      %p60 = por %p58, %p59
      %p61 = scmp.ne.s32.totalorder %s50, %s51
      %p62 = scmp.eq.s32.totalorder %s28, 0
      %p63 = por %p61, %p62
      %p64 = scmp.ne.s32.totalorder %s50, %s51
      %p65 = scmp.eq.s32.totalorder %s29, 1
      %p66 = por %p64, %p65
      %p68 = scmp.ne.s32.totalorder %s51, %s67
      %p69 = scmp.eq.s32.totalorder %s29, 0
      %p70 = por %p68, %p69
      %s71 = ssub.s32 %s30, %s42
      %p72 = scmp.eq.s32.totalorder %s71, 0
      %s74 = sadd.s32 %s73, 1
      %s75 = scalar_select %p72, %s73, %s74
      %p78 = pneg %p72
      %p79 = scmp.eq.s32.totalorder %s23, 1
      %p80 = por %p78, %p79
      %p81 = scmp.ne.s32.totalorder %s73, %s76
      %p82 = scmp.eq.s32.totalorder %s23, 0
      %p83 = por %p81, %p82
      %p84 = scmp.ne.s32.totalorder %s73, %s76
      %p85 = scmp.eq.s32.totalorder %s28, 1
      %p86 = por %p84, %p85
      %p87 = scmp.ne.s32.totalorder %s76, %s77
      %p88 = scmp.eq.s32.totalorder %s28, 0
      %p89 = por %p87, %p88
      %p90 = scmp.ne.s32.totalorder %s76, %s77
      %p91 = scmp.eq.s32.totalorder %s29, 1
      %p92 = por %p90, %p91
      %p94 = scmp.ne.s32.totalorder %s77, %s93
      %p95 = scmp.eq.s32.totalorder %s29, 0
      %p96 = por %p94, %p95
      %s98 = sadd.s32 %s97, 1
      %p101 = scmp.eq.s32.totalorder %s23, 1
      %p102 = scmp.ne.s32.totalorder %s97, %s99
      %p103 = scmp.eq.s32.totalorder %s23, 0
      %p104 = por %p102, %p103
      %p105 = scmp.ne.s32.totalorder %s97, %s99
      %p106 = scmp.eq.s32.totalorder %s28, 1
      %p107 = por %p105, %p106
      %p108 = scmp.ne.s32.totalorder %s99, %s100
      %p109 = scmp.eq.s32.totalorder %s28, 0
      %p110 = por %p108, %p109
      %p111 = scmp.ne.s32.totalorder %s99, %s100
      %p112 = scmp.eq.s32.totalorder %s29, 1
      %p113 = por %p111, %p112
      %p115 = scmp.ne.s32.totalorder %s100, %s114
      %p116 = scmp.eq.s32.totalorder %s29, 0
      %p117 = por %p115, %p116
      %s119 = sadd.s32 %s118, 1
      %p122 = scmp.eq.s32.totalorder %s23, 1
      %p123 = scmp.ne.s32.totalorder %s118, %s120
      %p124 = scmp.eq.s32.totalorder %s23, 0
      %p125 = por %p123, %p124
      %p126 = scmp.ne.s32.totalorder %s118, %s120
      %p127 = scmp.eq.s32.totalorder %s28, 1
      %p128 = por %p126, %p127
      %p129 = scmp.ne.s32.totalorder %s120, %s121
      %p130 = scmp.eq.s32.totalorder %s28, 0
      %p131 = por %p129, %p130
      %p132 = scmp.ne.s32.totalorder %s120, %s121
      %p133 = scmp.eq.s32.totalorder %s29, 1
      %p134 = por %p132, %p133
      %p136 = scmp.ne.s32.totalorder %s121, %s135
      %p137 = scmp.eq.s32.totalorder %s29, 0
      %p138 = por %p136, %p137
      %s140 = sadd.s32 %s139, 1
      %p143 = scmp.eq.s32.totalorder %s23, 1
      %p144 = scmp.ne.s32.totalorder %s139, %s141
      %p145 = scmp.eq.s32.totalorder %s23, 0
      %p146 = por %p144, %p145
      %p147 = scmp.ne.s32.totalorder %s139, %s141
      %p148 = scmp.eq.s32.totalorder %s28, 1
      %p149 = por %p147, %p148
      %p150 = scmp.ne.s32.totalorder %s141, %s142
      %p151 = scmp.eq.s32.totalorder %s28, 0
      %p152 = por %p150, %p151
      %p153 = scmp.ne.s32.totalorder %s141, %s142
      %p154 = scmp.eq.s32.totalorder %s29, 1
      %p155 = por %p153, %p154
      %p157 = scmp.ne.s32.totalorder %s142, %s156
      %p158 = scmp.eq.s32.totalorder %s29, 0
      %p159 = por %p157, %p158
      %s161 = sadd.s32 %s160, 1
      %p164 = scmp.eq.s32.totalorder %s23, 1
      %p165 = scmp.ne.s32.totalorder %s160, %s162
      %p166 = scmp.eq.s32.totalorder %s23, 0
      %p167 = por %p165, %p166
      %p168 = scmp.ne.s32.totalorder %s160, %s162
      %p169 = scmp.eq.s32.totalorder %s28, 1
      %p170 = por %p168, %p169
      %p171 = scmp.ne.s32.totalorder %s162, %s163
      %p172 = scmp.eq.s32.totalorder %s28, 0
      %p173 = por %p171, %p172
      %p174 = scmp.ne.s32.totalorder %s162, %s163
      %p175 = scmp.eq.s32.totalorder %s29, 1
      %p176 = por %p174, %p175
      %p178 = scmp.ne.s32.totalorder %s163, %s177
      %p179 = scmp.eq.s32.totalorder %s29, 0
      %p180 = por %p178, %p179
      %s182 = sadd.s32 %s181, 1
      %p185 = scmp.eq.s32.totalorder %s23, 1
      %p186 = scmp.ne.s32.totalorder %s181, %s183
      %p187 = scmp.eq.s32.totalorder %s23, 0
      %p188 = por %p186, %p187
      %p189 = scmp.ne.s32.totalorder %s181, %s183
      %p190 = scmp.eq.s32.totalorder %s28, 1
      %p191 = por %p189, %p190
      %p192 = scmp.ne.s32.totalorder %s183, %s184
      %p193 = scmp.eq.s32.totalorder %s28, 0
      %p194 = por %p192, %p193
      %p195 = scmp.ne.s32.totalorder %s183, %s184
      %p196 = scmp.eq.s32.totalorder %s29, 1
      %p197 = por %p195, %p196
      %p199 = scmp.ne.s32.totalorder %s184, %s198
      %p200 = scmp.eq.s32.totalorder %s29, 0
      %p201 = por %p199, %p200
      %s203 = sadd.s32 %s202, 1
      %p206 = scmp.eq.s32.totalorder %s23, 1
      %p207 = scmp.ne.s32.totalorder %s202, %s204
      %p208 = scmp.eq.s32.totalorder %s23, 0
      %p209 = por %p207, %p208
      %p210 = scmp.ne.s32.totalorder %s202, %s204
      %p211 = scmp.eq.s32.totalorder %s28, 1
      %p212 = por %p210, %p211
      %p213 = scmp.ne.s32.totalorder %s204, %s205
      %p214 = scmp.eq.s32.totalorder %s28, 0
      %p215 = por %p213, %p214
      %p216 = scmp.ne.s32.totalorder %s204, %s205
      %p217 = scmp.eq.s32.totalorder %s29, 1
      %p218 = por %p216, %p217
      %p220 = scmp.ne.s32.totalorder %s205, %s219
      %p221 = scmp.eq.s32.totalorder %s29, 0
      %p222 = por %p220, %p221
      %s224 = sadd.s32 %s223, 1
      %p227 = scmp.eq.s32.totalorder %s23, 1
      %p228 = scmp.ne.s32.totalorder %s223, %s225
      %p229 = scmp.eq.s32.totalorder %s23, 0
      %p230 = por %p228, %p229
      %p231 = scmp.ne.s32.totalorder %s223, %s225
      %p232 = scmp.eq.s32.totalorder %s28, 1
      %p233 = por %p231, %p232
      %p234 = scmp.ne.s32.totalorder %s225, %s226
      %p235 = scmp.eq.s32.totalorder %s28, 0
      %p236 = por %p234, %p235
      %p237 = scmp.ne.s32.totalorder %s225, %s226
      %p238 = scmp.eq.s32.totalorder %s29, 1
      %p239 = por %p237, %p238
      %p241 = scmp.ne.s32.totalorder %s226, %s240
      %p242 = scmp.eq.s32.totalorder %s29, 0
      %p243 = por %p241, %p242
      %s244 = ssub.s32 %s30, %s42
      %p245 = scmp.eq.s32.totalorder %s244, 0
      %s247 = sadd.s32 %s246, 1
      %s248 = scalar_select %p245, %s246, %s247
      %p251 = pneg %p245
      %p252 = scmp.eq.s32.totalorder %s23, 1
      %p253 = por %p251, %p252
      %p254 = scmp.ne.s32.totalorder %s246, %s249
      %p255 = scmp.eq.s32.totalorder %s23, 0
      %p256 = por %p254, %p255
      %p257 = scmp.ne.s32.totalorder %s246, %s249
      %p258 = scmp.eq.s32.totalorder %s28, 1
      %p259 = por %p257, %p258
      %p260 = scmp.ne.s32.totalorder %s249, %s250
      %p261 = scmp.eq.s32.totalorder %s28, 0
      %p262 = por %p260, %p261
      %p263 = scmp.ne.s32.totalorder %s249, %s250
      %p264 = scmp.eq.s32.totalorder %s29, 1
      %p265 = por %p263, %p264
      %p267 = scmp.ne.s32.totalorder %s250, %s266
      %p268 = scmp.eq.s32.totalorder %s29, 0
      %p269 = por %p267, %p268
      %p270 = scmp.le.s32.totalorder 1, %s23
      %p271 = scmp.lt.s32.totalorder %s23, 3
      %p272 = pnand %p270, %p271
      %p273 = pneg %p272
      // Predicated region
      $region9: #{tpu_custom_call.1} parent=5 // pred_check
        _
      $region10: #{tpu_custom_call.1} parent=5 // pred_check_branch
        %275 = sbr.rel (%p272) target = $region12
      $region11: #{tpu_custom_call.1} parent=5 // pred_region
        %s276 = ssub.s32 %s23, 1
        // Predicated region
        $region13: #{tpu_custom_call.1} parent=11 // pred_check
          %p277 = pneg %p89
        $region14: #{tpu_custom_call.1} parent=11 // pred_check_branch
          %279 = sbr.rel (%p277) target = $region16
        $region15: #{tpu_custom_call.1} parent=11 // pred_region
          %p280 = scmp.lt.s32.totalorder %s32, 0
          %s281 = scalar_select %p280, %s32, 0
          %s282 = smul.addr %s281, 8
          %s283 = scalar_lea.vmem %s1, %s282
        $region16: #{tpu_custom_call.1} parent=11 // pred_fallthru
          _
        // Predicated region
        $region17: #{tpu_custom_call.1} parent=11 // pred_check
          %p284 = pneg %p110
        $region18: #{tpu_custom_call.1} parent=11 // pred_check_branch
          %286 = sbr.rel (%p284) target = $region20
        $region19: #{tpu_custom_call.1} parent=11 // pred_region
          %s288 = ssub.s32 1024, 1024
          %289 = vsyncadd [#allocation13], %s288
          %s290 = sshll.u32 [#allocation12], 4
          %s291 = int_to_ptr.vmem [resolvable:$true] %s290
          %296 = dma.hbm_to_vmem [thread:$0]  %s2, 1024, %s291, [#allocation13], 256, 256, 16
        $region20: #{tpu_custom_call.1} parent=11 // pred_fallthru
          _
        // Predicated region
        $region21: #{tpu_custom_call.1} parent=11 // pred_check
          %p297 = pneg %p131
        $region22: #{tpu_custom_call.1} parent=11 // pred_check_branch
          %299 = sbr.rel (%p297) target = $region24
        $region23: #{tpu_custom_call.1} parent=11 // pred_region
          %s301 = ssub.s32 4096, 4096
          %302 = vsyncadd [#allocation13], %s301
          %s303 = sshll.u32 [#allocation14], 4
          %s304 = int_to_ptr.vmem [resolvable:$true] %s303
          %309 = dma.hbm_to_vmem [thread:$0]  %s3, 4096, %s304, [#allocation13], 256, 256, 16
        $region24: #{tpu_custom_call.1} parent=11 // pred_fallthru
          _
        // Predicated region
        $region25: #{tpu_custom_call.1} parent=11 // pred_check
          %p310 = pneg %p152
        $region26: #{tpu_custom_call.1} parent=11 // pred_check_branch
          %312 = sbr.rel (%p310) target = $region28
        $region27: #{tpu_custom_call.1} parent=11 // pred_region
          _
        $region28: #{tpu_custom_call.1} parent=11 // pred_fallthru
          _
        // Predicated region
        $region29: #{tpu_custom_call.1} parent=11 // pred_check
          %p313 = pneg %p173
        $region30: #{tpu_custom_call.1} parent=11 // pred_check_branch
          %315 = sbr.rel (%p313) target = $region32
        $region31: #{tpu_custom_call.1} parent=11 // pred_region
          %s317 = ssub.s32 8192, 8192
          %318 = vsyncadd [#allocation16], %s317
          %s319 = sshll.u32 [#allocation15], 4
          %s320 = int_to_ptr.vmem [resolvable:$true] %s319
          %325 = dma.hbm_to_vmem [thread:$0]  %s5, 8192, %s320, [#allocation16], 256, 256, 16
        $region32: #{tpu_custom_call.1} parent=11 // pred_fallthru
          _
        // Predicated region
        $region33: #{tpu_custom_call.1} parent=11 // pred_check
          %p326 = pneg %p194
        $region34: #{tpu_custom_call.1} parent=11 // pred_check_branch
          %328 = sbr.rel (%p326) target = $region36
        $region35: #{tpu_custom_call.1} parent=11 // pred_region
          _
        $region36: #{tpu_custom_call.1} parent=11 // pred_fallthru
          _
        // Predicated region
        $region37: #{tpu_custom_call.1} parent=11 // pred_check
          %p329 = pneg %p215
        $region38: #{tpu_custom_call.1} parent=11 // pred_check_branch
          %331 = sbr.rel (%p329) target = $region40
        $region39: #{tpu_custom_call.1} parent=11 // pred_region
          _
        $region40: #{tpu_custom_call.1} parent=11 // pred_fallthru
          _
        // Predicated region
        $region41: #{tpu_custom_call.1} parent=11 // pred_check
          %p332 = pneg %p236
        $region42: #{tpu_custom_call.1} parent=11 // pred_check_branch
          %334 = sbr.rel (%p332) target = $region44
        $region43: #{tpu_custom_call.1} parent=11 // pred_region
          _
        $region44: #{tpu_custom_call.1} parent=11 // pred_fallthru
          _
      $region12: #{tpu_custom_call.1} parent=5 // pred_fallthru
        _
      %p335 = scmp.lt.s32.totalorder %s23, 2
      // Predicated region
      $region45: #{tpu_custom_call.1} parent=5 // pred_check
        %p336 = pneg %p335
      $region46: #{tpu_custom_call.1} parent=5 // pred_check_branch
        %338 = sbr.rel (%p336) target = $region48
      $region47: #{tpu_custom_call.1} parent=5 // pred_region
        // Predicated region
        $region49: #{tpu_custom_call.1} parent=47 // pred_check
          %p339 = pneg %p57
        $region50: #{tpu_custom_call.1} parent=47 // pred_check_branch
          %341 = sbr.rel (%p339) target = $region52
        $region51: #{tpu_custom_call.1} parent=47 // pred_region
          %s342 = sand.u32 %s47, 1
          %s343 = scalar_lea.sflag [#allocation10], %s342
          %s344 = sand.u32 %s47, 1
          %s345 = smul.addr %s344, 32
          %s346 = scalar_lea.vmem [#allocation9], %s345
          %s347 = smul.u32 8, %s31
          %s349 = ssub.s32 512, 512
          %350 = vsyncadd %s343, %s349
          %s351 = sadd.s32 %s30, %s347
          %s352 = smul.addr %s351, 64
          %s353 = scalar_lea.hbm %s0, %s352
          %s354 = sshll.u32 %s346, 4
          %s355 = int_to_ptr.vmem [resolvable:$true] %s354
          %360 = dma.hbm_to_vmem [thread:$0]  %s353, 512, %s355, %s343, 64, 64, 4
        $region52: #{tpu_custom_call.1} parent=47 // pred_fallthru
          _
      $region48: #{tpu_custom_call.1} parent=5 // pred_fallthru
        _
      %p361 = scmp.le.s32.totalorder 1, %s23
      %p362 = scmp.lt.s32.totalorder %s23, 3
      %p363 = pnand %p361, %p362
      %p364 = pneg %p363
      // Predicated region
      $region53: #{tpu_custom_call.1} parent=5 // pred_check
        _
      $region54: #{tpu_custom_call.1} parent=5 // pred_check_branch
        %366 = sbr.rel (%p363) target = $region56
      $region55: #{tpu_custom_call.1} parent=5 // pred_region
        %s367 = ssub.s32 %s23, 1
        %s368 = sand.u32 %s50, 1
        %s369 = scalar_lea.sflag [#allocation10], %s368
        %s370 = sand.u32 %s50, 1
        %s371 = smul.addr %s370, 32
        %s372 = scalar_lea.vmem [#allocation9], %s371
        // Predicated region
        $region57: #{tpu_custom_call.1} parent=55 // pred_check
          %p373 = pneg %p63
        $region58: #{tpu_custom_call.1} parent=55 // pred_check_branch
          %375 = sbr.rel (%p373) target = $region60
        $region59: #{tpu_custom_call.1} parent=55 // pred_region
          %376 = dma.done %s369, 512
        $region60: #{tpu_custom_call.1} parent=55 // pred_fallthru
          _
        // Predicated region
        $region61: #{tpu_custom_call.1} parent=55 // pred_check
          %p377 = pneg %p110
        $region62: #{tpu_custom_call.1} parent=55 // pred_check_branch
          %379 = sbr.rel (%p377) target = $region64
        $region63: #{tpu_custom_call.1} parent=55 // pred_region
          %380 = dma.done [#allocation13], 1024
        $region64: #{tpu_custom_call.1} parent=55 // pred_fallthru
          _
        // Predicated region
        $region65: #{tpu_custom_call.1} parent=55 // pred_check
          %p381 = pneg %p131
        $region66: #{tpu_custom_call.1} parent=55 // pred_check_branch
          %383 = sbr.rel (%p381) target = $region68
        $region67: #{tpu_custom_call.1} parent=55 // pred_region
          %384 = dma.done [#allocation13], 4096
        $region68: #{tpu_custom_call.1} parent=55 // pred_fallthru
          _
        // Predicated region
        $region69: #{tpu_custom_call.1} parent=55 // pred_check
          %p385 = pneg %p173
        $region70: #{tpu_custom_call.1} parent=55 // pred_check_branch
          %387 = sbr.rel (%p385) target = $region72
        $region71: #{tpu_custom_call.1} parent=55 // pred_region
          %388 = dma.done [#allocation16], 8192
        $region72: #{tpu_custom_call.1} parent=55 // pred_fallthru
          _
        %s389 = sand.u32 %s50, 1
        %s390 = scalar_lea.sflag [#allocation10], %s389
        %s391 = sand.u32 %s50, 1
        %s392 = smul.addr %s391, 32
        %s393 = scalar_lea.vmem [#allocation9], %s392
        %p394 = pneg %p63
        %p395 = pneg %p60
        %p396 = scmp.lt.s32.totalorder %s32, 0
        %s397 = scalar_select %p396, %s32, 0
        %s398 = smul.addr %s397, 8
        %s399 = scalar_lea.vmem %s1, %s398
        %p400 = pneg %p89
        %p401 = pneg %p86
        %p402 = pneg %p110
        %p403 = pneg %p107
        %p404 = pneg %p131
        %p405 = pneg %p128
        %p406 = pneg %p152
        %p407 = pneg %p149
        %p408 = pneg %p173
        %p409 = pneg %p170
        %p410 = pneg %p194
        %p411 = pneg %p191
        %p412 = pneg %p215
        %p413 = pneg %p212
        %p414 = pneg %p236
        %p415 = pneg %p233
        %p416 = pneg %p262
        %p417 = pneg %p259
        %s418 = smul.u32 8, %s33
        %p419 = scmp.lt.s32.totalorder %s32, 0
        %s420 = scalar_select %p419, %s32, 0
        %s421 = smul.addr %s420, 8
        %s422 = scalar_lea.vmem %s1, %s421
        %p424 = scmp.eq.s32.totalorder %s33, 0
        // Predicated region
        $region73: #{tpu_custom_call.1} parent=55 // pred_check
          %p425 = pneg %p424
        $region74: #{tpu_custom_call.1} parent=55 // pred_check_branch
          %427 = sbr.rel (%p425) target = $region76
        $region75: #{tpu_custom_call.1} parent=55 // pred_region
          %428 = vst [vmem:[#allocation3] sm:$0xff] 0.0
          %429 = vst [vmem:[#allocation4] sm:$0xff] 0.0
          %430 = vst [vmem:[#allocation5] sm:$0xff] 0.0
          %431 = vst [vmem:[#allocation6] sm:$0xff] 0.0
          %432 = vst [vmem:[#allocation7] sm:$0xff] 0.0
        $region76: #{tpu_custom_call.1} parent=55 // pred_fallthru
          _
        %v433 = vld [vmem:[%s372] sm:$0xf]
        %v434 = vld [vmem:[%s372 + $0x4] sm:$0xf]
        %v435 = vld [vmem:[%s372 + $0x8] sm:$0xf]
        %v436 = vld [vmem:[%s372 + $0xc] sm:$0xf]
        %v437 = vld [vmem:[%s372 + $0x10] sm:$0xf]
        %v438 = vld [vmem:[%s372 + $0x14] sm:$0xf]
        %v439 = vld [vmem:[%s372 + $0x18] sm:$0xf]
        %v440 = vld [vmem:[%s372 + $0x1c] sm:$0xf]
        %v441 = vld [vmem:[#allocation12] sm:$0xff]
        %v442 = vld [vmem:[#allocation12 + $0x8] sm:$0xff]
        %v443 = vld [vmem:[#allocation12 + $0x10] sm:$0xff]
        %v444 = vld [vmem:[#allocation12 + $0x18] sm:$0xff]
        %v445 = vld [vmem:[#allocation12 + $0x20] sm:$0xff]
        %v446 = vld [vmem:[#allocation12 + $0x28] sm:$0xff]
        %v447 = vld [vmem:[#allocation12 + $0x30] sm:$0xff]
        %v448 = vld [vmem:[#allocation12 + $0x38] sm:$0xff]
        %v449 = vld [vmem:[%s4] sm:$0xf]
        %v451 = vlaneseq
        %v452 = vshrl.u32 %v451, 7
        %v453 = vsub.s32 0, %v452
        %v454 = vrot.slane %v449, %v453
        %v455 = vlaneseq
        %v456 = vshrl.u32 %v455, 7
        %v457 = vsub.s32 1, %v456
        %v458 = vrot.slane %v449, %v457
        %v459 = vlaneseq
        %v460 = vshrl.u32 %v459, 7
        %v461 = vsub.s32 2, %v460
        %v462 = vrot.slane %v449, %v461
        %v463 = vlaneseq
        %v464 = vshrl.u32 %v463, 7
        %v465 = vsub.s32 3, %v464
        %v466 = vrot.slane %v449, %v465
        %v479 = vunpack.c.l.b16 %v433
        %v480 = vunpack.c.l.b16 %v434
        %v481 = vunpack.c.l.b16 %v435
        %v482 = vunpack.c.l.b16 %v436
        %v483 = vunpack.c.l.b16 %v437
        %v484 = vunpack.c.l.b16 %v438
        %v485 = vunpack.c.l.b16 %v439
        %v486 = vunpack.c.l.b16 %v440
        %v487 = vpack.c.b16 %v480, %v479
        %v488 = vpack.c.b16 %v482, %v481
        %v489 = vpack.c.b16 %v484, %v483
        %v490 = vpack.c.b16 %v486, %v485
        %v499 = vunpack.c.l.b16 %v441
        %v500 = vunpack.c.h.b16 %v441
        %v501 = vunpack.c.l.b16 %v442
        %v502 = vunpack.c.h.b16 %v442
        %v503 = vunpack.c.l.b16 %v443
        %v504 = vunpack.c.h.b16 %v443
        %v505 = vunpack.c.l.b16 %v444
        %v506 = vunpack.c.h.b16 %v444
        %v507 = vunpack.c.l.b16 %v445
        %v508 = vunpack.c.h.b16 %v445
        %v509 = vunpack.c.l.b16 %v446
        %v510 = vunpack.c.h.b16 %v446
        %v511 = vunpack.c.l.b16 %v447
        %v512 = vunpack.c.h.b16 %v447
        %v513 = vunpack.c.l.b16 %v448
        %v514 = vunpack.c.h.b16 %v448
        %v515 = vpack.c.b16 %v503, %v499
        %v516 = vpack.c.b16 %v504, %v500
        %v517 = vpack.c.b16 %v505, %v501
        %v518 = vpack.c.b16 %v506, %v502
        %v519 = vpack.c.b16 %v511, %v507
        %v520 = vpack.c.b16 %v512, %v508
        %v521 = vpack.c.b16 %v513, %v509
        %v522 = vpack.c.b16 %v514, %v510
        %vm531 = vcmask 261120
        %v533 = vsel %vm531, %v487, 0
        %v536 = vsel %vm531, %v488, 0
        %v539 = vsel %vm531, %v489, 0
        %v542 = vsel %vm531, %v490, 0
        %544 = vmatprep.subr.bf16.mxu0 %v516
        %545 = vmatpush1.bf16.msra.mxu0 %v515
        %546 = vmatprep.subr.bf16.mxu0 %v520
        %547 = vmatpush1.bf16.msra.mxu0 %v519
        %548 = vmatprep.subr.bf16.mxu0 0
        %549 = vmatpush1.bf16.msra.mxu0 0
        %550 = vmatprep.subr.bf16.mxu0 0
        %551 = vmatpush1.bf16.msra.mxu0 0
        %552 = vmatprep.subr.bf16.mxu0 0
        %553 = vmatpush1.bf16.msra.mxu0 0
        %554 = vmatprep.subr.bf16.mxu0 0
        %555 = vmatpush1.bf16.msra.mxu0 0
        %556 = vmatprep.subr.bf16.mxu0 0
        %557 = vmatpush1.bf16.msra.mxu0 0
        %558 = vmatprep.subr.bf16.mxu0 0
        %559 = vmatpush1.bf16.msra.mxu0 0
        %560 = vmatprep.subr.bf16.mxu0 0
        %561 = vmatpush1.bf16.msra.mxu0 0
        %562 = vmatprep.subr.bf16.mxu0 0
        %563 = vmatpush1.bf16.msra.mxu0 0
        %564 = vmatprep.subr.bf16.mxu0 0
        %565 = vmatpush1.bf16.msra.mxu0 0
        %566 = vmatprep.subr.bf16.mxu0 0
        %567 = vmatpush1.bf16.msra.mxu0 0
        %568 = vmatprep.subr.bf16.mxu0 0
        %569 = vmatpush1.bf16.msra.mxu0 0
        %570 = vmatprep.subr.bf16.mxu0 0
        %571 = vmatpush1.bf16.msra.mxu0 0
        %572 = vmatprep.subr.bf16.mxu0 0
        %573 = vmatpush1.bf16.msra.mxu0 0
        %574 = vmatprep.subr.bf16.mxu0 0
        %575 = vmatpush1.bf16.msra.mxu0 0
        %576 = vmatprep.mubr.bf16.mxu0 0
        %577 = vmatmul.mubr.bf16.gmra.mrb[0].mxu0 %v533
        %v578 = vpop.f32.mrb[0].mxu0
        %v579 = vadd.f32 %v454, %v578
        %v580 = vpop.f32.mrb[0].mxu0
        %v581 = vadd.f32 %v458, %v580
        %v582 = vpop.f32.mrb[0].mxu0
        %v583 = vadd.f32 %v454, %v582
        %v584 = vpop.f32.mrb[0].mxu0
        %v585 = vadd.f32 %v458, %v584
        %586 = vmatprep.mubr.bf16.mxu0 0
        %587 = vmatmul.mubr.bf16.gmra.mrb[0].mxu0 %v536
        %v588 = vpop.f32.mrb[0].mxu0
        %v589 = vadd.f32 %v454, %v588
        %v590 = vpop.f32.mrb[0].mxu0
        %v591 = vadd.f32 %v458, %v590
        %v592 = vpop.f32.mrb[0].mxu0
        %v593 = vadd.f32 %v454, %v592
        %v594 = vpop.f32.mrb[0].mxu0
        %v595 = vadd.f32 %v458, %v594
        %596 = vmatprep.mubr.bf16.mxu0 0
        %597 = vmatmul.mubr.bf16.gmra.mrb[0].mxu0 %v539
        %v598 = vpop.f32.mrb[0].mxu0
        %v599 = vadd.f32 %v454, %v598
        %v600 = vpop.f32.mrb[0].mxu0
        %v601 = vadd.f32 %v458, %v600
        %v602 = vpop.f32.mrb[0].mxu0
        %v603 = vadd.f32 %v454, %v602
        %v604 = vpop.f32.mrb[0].mxu0
        %v605 = vadd.f32 %v458, %v604
        %606 = vmatprep.mubr.bf16.mxu0 0
        %607 = vmatmul.mubr.bf16.gmra.mrb[0].mxu0 %v542
        %v608 = vpop.f32.mrb[0].mxu0
        %v609 = vadd.f32 %v454, %v608
        %v610 = vpop.f32.mrb[0].mxu0
        %v611 = vadd.f32 %v458, %v610
        %v612 = vpop.f32.mrb[0].mxu0
        %v613 = vadd.f32 %v454, %v612
        %v614 = vpop.f32.mrb[0].mxu0
        %v615 = vadd.f32 %v458, %v614
        %616 = vdwg.mxu0
        %617 = vmatprep.subr.bf16.mxu0 %v518
        %618 = vmatpush1.bf16.msra.mxu0 %v517
        %619 = vmatprep.subr.bf16.mxu0 %v522
        %620 = vmatpush1.bf16.msra.mxu0 %v521
        %621 = vmatprep.subr.bf16.mxu0 0
        %622 = vmatpush1.bf16.msra.mxu0 0
        %623 = vmatprep.subr.bf16.mxu0 0
        %624 = vmatpush1.bf16.msra.mxu0 0
        %625 = vmatprep.subr.bf16.mxu0 0
        %626 = vmatpush1.bf16.msra.mxu0 0
        %627 = vmatprep.subr.bf16.mxu0 0
        %628 = vmatpush1.bf16.msra.mxu0 0
        %629 = vmatprep.subr.bf16.mxu0 0
        %630 = vmatpush1.bf16.msra.mxu0 0
        %631 = vmatprep.subr.bf16.mxu0 0
        %632 = vmatpush1.bf16.msra.mxu0 0
        %633 = vmatprep.subr.bf16.mxu0 0
        %634 = vmatpush1.bf16.msra.mxu0 0
        %635 = vmatprep.subr.bf16.mxu0 0
        %636 = vmatpush1.bf16.msra.mxu0 0
        %637 = vmatprep.subr.bf16.mxu0 0
        %638 = vmatpush1.bf16.msra.mxu0 0
        %639 = vmatprep.subr.bf16.mxu0 0
        %640 = vmatpush1.bf16.msra.mxu0 0
        %641 = vmatprep.subr.bf16.mxu0 0
        %642 = vmatpush1.bf16.msra.mxu0 0
        %643 = vmatprep.subr.bf16.mxu0 0
        %644 = vmatpush1.bf16.msra.mxu0 0
        %645 = vmatprep.subr.bf16.mxu0 0
        %646 = vmatpush1.bf16.msra.mxu0 0
        %647 = vmatprep.subr.bf16.mxu0 0
        %648 = vmatpush1.bf16.msra.mxu0 0
        %649 = vmatprep.mubr.bf16.mxu0 0
        %650 = vmatmul.mubr.bf16.gmra.mrb[0].mxu0 %v533
        %v651 = vpop.f32.mrb[0].mxu0
        %v652 = vadd.f32 %v462, %v651
        %v653 = vpop.f32.mrb[0].mxu0
        %v654 = vadd.f32 %v466, %v653
        %v655 = vpop.f32.mrb[0].mxu0
        %v656 = vadd.f32 %v462, %v655
        %v657 = vpop.f32.mrb[0].mxu0
        %v658 = vadd.f32 %v466, %v657
        %659 = vmatprep.mubr.bf16.mxu0 0
        %660 = vmatmul.mubr.bf16.gmra.mrb[0].mxu0 %v536
        %v661 = vpop.f32.mrb[0].mxu0
        %v662 = vadd.f32 %v462, %v661
        %v663 = vpop.f32.mrb[0].mxu0
        %v664 = vadd.f32 %v466, %v663
        %v665 = vpop.f32.mrb[0].mxu0
        %v666 = vadd.f32 %v462, %v665
        %v667 = vpop.f32.mrb[0].mxu0
        %v668 = vadd.f32 %v466, %v667
        %669 = vmatprep.mubr.bf16.mxu0 0
        %670 = vmatmul.mubr.bf16.gmra.mrb[0].mxu0 %v539
        %v671 = vpop.f32.mrb[0].mxu0
        %v672 = vadd.f32 %v462, %v671
        %v673 = vpop.f32.mrb[0].mxu0
        %v674 = vadd.f32 %v466, %v673
        %v675 = vpop.f32.mrb[0].mxu0
        %v676 = vadd.f32 %v462, %v675
        %v677 = vpop.f32.mrb[0].mxu0
        %v678 = vadd.f32 %v466, %v677
        %679 = vmatprep.mubr.bf16.mxu0 0
        %680 = vmatmul.mubr.bf16.gmra.mrb[0].mxu0 %v542
        %v681 = vpop.f32.mrb[0].mxu0
        %v682 = vadd.f32 %v462, %v681
        %v683 = vpop.f32.mrb[0].mxu0
        %v684 = vadd.f32 %v466, %v683
        %v685 = vpop.f32.mrb[0].mxu0
        %v686 = vadd.f32 %v462, %v685
        %v687 = vpop.f32.mrb[0].mxu0
        %v688 = vadd.f32 %v466, %v687
        %689 = vdwg.mxu0
        %690 = vst [vmem:[#allocation2] sm:$0xff] %v579
        %691 = vst [vmem:[#allocation2 + $0x8] sm:$0xff] %v581
        %692 = vst [vmem:[#allocation2 + $0x10] sm:$0xff] %v652
        %693 = vst [vmem:[#allocation2 + $0x18] sm:$0xff] %v654
        %694 = vst [vmem:[#allocation2 + $0x20] sm:$0xff] %v583
        %695 = vst [vmem:[#allocation2 + $0x28] sm:$0xff] %v585
        %696 = vst [vmem:[#allocation2 + $0x30] sm:$0xff] %v656
        %697 = vst [vmem:[#allocation2 + $0x38] sm:$0xff] %v658
        %698 = vst [vmem:[#allocation2 + $0x40] sm:$0xff] %v589
        %699 = vst [vmem:[#allocation2 + $0x48] sm:$0xff] %v591
        %700 = vst [vmem:[#allocation2 + $0x50] sm:$0xff] %v662
        %701 = vst [vmem:[#allocation2 + $0x58] sm:$0xff] %v664
        %702 = vst [vmem:[#allocation2 + $0x60] sm:$0xff] %v593
        %703 = vst [vmem:[#allocation2 + $0x68] sm:$0xff] %v595
        %704 = vst [vmem:[#allocation2 + $0x70] sm:$0xff] %v666
        %705 = vst [vmem:[#allocation2 + $0x78] sm:$0xff] %v668
        %706 = vst [vmem:[#allocation2 + $0x80] sm:$0xff] %v599
        %707 = vst [vmem:[#allocation2 + $0x88] sm:$0xff] %v601
        %708 = vst [vmem:[#allocation2 + $0x90] sm:$0xff] %v672
        %709 = vst [vmem:[#allocation2 + $0x98] sm:$0xff] %v674
        %710 = vst [vmem:[#allocation2 + $0xa0] sm:$0xff] %v603
        %711 = vst [vmem:[#allocation2 + $0xa8] sm:$0xff] %v605
        %712 = vst [vmem:[#allocation2 + $0xb0] sm:$0xff] %v676
        %713 = vst [vmem:[#allocation2 + $0xb8] sm:$0xff] %v678
        %714 = vst [vmem:[#allocation2 + $0xc0] sm:$0xff] %v609
        %715 = vst [vmem:[#allocation2 + $0xc8] sm:$0xff] %v611
        %716 = vst [vmem:[#allocation2 + $0xd0] sm:$0xff] %v682
        %717 = vst [vmem:[#allocation2 + $0xd8] sm:$0xff] %v684
        %718 = vst [vmem:[#allocation2 + $0xe0] sm:$0xff] %v613
        %719 = vst [vmem:[#allocation2 + $0xe8] sm:$0xff] %v615
        %720 = vst [vmem:[#allocation2 + $0xf0] sm:$0xff] %v686
        %721 = vst [vmem:[#allocation2 + $0xf8] sm:$0xff] %v688
        %v722 = vld [vmem:[#allocation14] sm:$0xff]
        %v723 = vld [vmem:[#allocation14 + $0x8] sm:$0xff]
        %v724 = vld [vmem:[#allocation14 + $0x10] sm:$0xff]
        %v725 = vld [vmem:[#allocation14 + $0x18] sm:$0xff]
        %v726 = vld [vmem:[#allocation14 + $0x20] sm:$0xff]
        %v727 = vld [vmem:[#allocation14 + $0x28] sm:$0xff]
        %v728 = vld [vmem:[#allocation14 + $0x30] sm:$0xff]
        %v729 = vld [vmem:[#allocation14 + $0x38] sm:$0xff]
        %v730 = vld [vmem:[#allocation14 + $0x40] sm:$0xff]
        %v731 = vld [vmem:[#allocation14 + $0x48] sm:$0xff]
        %v732 = vld [vmem:[#allocation14 + $0x50] sm:$0xff]
        %v733 = vld [vmem:[#allocation14 + $0x58] sm:$0xff]
        %v734 = vld [vmem:[#allocation14 + $0x60] sm:$0xff]
        %v735 = vld [vmem:[#allocation14 + $0x68] sm:$0xff]
        %v736 = vld [vmem:[#allocation14 + $0x70] sm:$0xff]
        %v737 = vld [vmem:[#allocation14 + $0x78] sm:$0xff]
        %v738 = vld [vmem:[#allocation14 + $0x80] sm:$0xff]
        %v739 = vld [vmem:[#allocation14 + $0x88] sm:$0xff]
        %v740 = vld [vmem:[#allocation14 + $0x90] sm:$0xff]
        %v741 = vld [vmem:[#allocation14 + $0x98] sm:$0xff]
        %v742 = vld [vmem:[#allocation14 + $0xa0] sm:$0xff]
        %v743 = vld [vmem:[#allocation14 + $0xa8] sm:$0xff]
        %v744 = vld [vmem:[#allocation14 + $0xb0] sm:$0xff]
        %v745 = vld [vmem:[#allocation14 + $0xb8] sm:$0xff]
        %v746 = vld [vmem:[#allocation14 + $0xc0] sm:$0xff]
        %v747 = vld [vmem:[#allocation14 + $0xc8] sm:$0xff]
        %v748 = vld [vmem:[#allocation14 + $0xd0] sm:$0xff]
        %v749 = vld [vmem:[#allocation14 + $0xd8] sm:$0xff]
        %v750 = vld [vmem:[#allocation14 + $0xe0] sm:$0xff]
        %v751 = vld [vmem:[#allocation14 + $0xe8] sm:$0xff]
        %v752 = vld [vmem:[#allocation14 + $0xf0] sm:$0xff]
        %v753 = vld [vmem:[#allocation14 + $0xf8] sm:$0xff]
        %v754 = vld [vmem:[#allocation15] sm:$0xff]
        %v755 = vld [vmem:[#allocation15 + $0x8] sm:$0xff]
        %v756 = vld [vmem:[#allocation15 + $0x10] sm:$0xff]
        %v757 = vld [vmem:[#allocation15 + $0x18] sm:$0xff]
        %v758 = vld [vmem:[#allocation15 + $0x20] sm:$0xff]
        %v759 = vld [vmem:[#allocation15 + $0x28] sm:$0xff]
        %v760 = vld [vmem:[#allocation15 + $0x30] sm:$0xff]
        %v761 = vld [vmem:[#allocation15 + $0x38] sm:$0xff]
        %v762 = vld [vmem:[#allocation15 + $0x40] sm:$0xff]
        %v763 = vld [vmem:[#allocation15 + $0x48] sm:$0xff]
        %v764 = vld [vmem:[#allocation15 + $0x50] sm:$0xff]
        %v765 = vld [vmem:[#allocation15 + $0x58] sm:$0xff]
        %v766 = vld [vmem:[#allocation15 + $0x60] sm:$0xff]
        %v767 = vld [vmem:[#allocation15 + $0x68] sm:$0xff]
        %v768 = vld [vmem:[#allocation15 + $0x70] sm:$0xff]
        %v769 = vld [vmem:[#allocation15 + $0x78] sm:$0xff]
        %v770 = vld [vmem:[#allocation15 + $0x80] sm:$0xff]
        %v771 = vld [vmem:[#allocation15 + $0x88] sm:$0xff]
        %v772 = vld [vmem:[#allocation15 + $0x90] sm:$0xff]
        %v773 = vld [vmem:[#allocation15 + $0x98] sm:$0xff]
        %v774 = vld [vmem:[#allocation15 + $0xa0] sm:$0xff]
        %v775 = vld [vmem:[#allocation15 + $0xa8] sm:$0xff]
        %v776 = vld [vmem:[#allocation15 + $0xb0] sm:$0xff]
        %v777 = vld [vmem:[#allocation15 + $0xb8] sm:$0xff]
        %v778 = vld [vmem:[#allocation15 + $0xc0] sm:$0xff]
        %v779 = vld [vmem:[#allocation15 + $0xc8] sm:$0xff]
        %v780 = vld [vmem:[#allocation15 + $0xd0] sm:$0xff]
        %v781 = vld [vmem:[#allocation15 + $0xd8] sm:$0xff]
        %v782 = vld [vmem:[#allocation15 + $0xe0] sm:$0xff]
        %v783 = vld [vmem:[#allocation15 + $0xe8] sm:$0xff]
        %v784 = vld [vmem:[#allocation15 + $0xf0] sm:$0xff]
        %v785 = vld [vmem:[#allocation15 + $0xf8] sm:$0xff]
        %v786 = vld [vmem:[#allocation15 + $0x100] sm:$0xff]
        %v787 = vld [vmem:[#allocation15 + $0x108] sm:$0xff]
        %v788 = vld [vmem:[#allocation15 + $0x110] sm:$0xff]
        %v789 = vld [vmem:[#allocation15 + $0x118] sm:$0xff]
        %v790 = vld [vmem:[#allocation15 + $0x120] sm:$0xff]
        %v791 = vld [vmem:[#allocation15 + $0x128] sm:$0xff]
        %v792 = vld [vmem:[#allocation15 + $0x130] sm:$0xff]
        %v793 = vld [vmem:[#allocation15 + $0x138] sm:$0xff]
        %v794 = vld [vmem:[#allocation15 + $0x140] sm:$0xff]
        %v795 = vld [vmem:[#allocation15 + $0x148] sm:$0xff]
        %v796 = vld [vmem:[#allocation15 + $0x150] sm:$0xff]
        %v797 = vld [vmem:[#allocation15 + $0x158] sm:$0xff]
        %v798 = vld [vmem:[#allocation15 + $0x160] sm:$0xff]
        %v799 = vld [vmem:[#allocation15 + $0x168] sm:$0xff]
        %v800 = vld [vmem:[#allocation15 + $0x170] sm:$0xff]
        %v801 = vld [vmem:[#allocation15 + $0x178] sm:$0xff]
        %v802 = vld [vmem:[#allocation15 + $0x180] sm:$0xff]
        %v803 = vld [vmem:[#allocation15 + $0x188] sm:$0xff]
        %v804 = vld [vmem:[#allocation15 + $0x190] sm:$0xff]
        %v805 = vld [vmem:[#allocation15 + $0x198] sm:$0xff]
        %v806 = vld [vmem:[#allocation15 + $0x1a0] sm:$0xff]
        %v807 = vld [vmem:[#allocation15 + $0x1a8] sm:$0xff]
        %v808 = vld [vmem:[#allocation15 + $0x1b0] sm:$0xff]
        %v809 = vld [vmem:[#allocation15 + $0x1b8] sm:$0xff]
        %v810 = vld [vmem:[#allocation15 + $0x1c0] sm:$0xff]
        %v811 = vld [vmem:[#allocation15 + $0x1c8] sm:$0xff]
        %v812 = vld [vmem:[#allocation15 + $0x1d0] sm:$0xff]
        %v813 = vld [vmem:[#allocation15 + $0x1d8] sm:$0xff]
        %v814 = vld [vmem:[#allocation15 + $0x1e0] sm:$0xff]
        %v815 = vld [vmem:[#allocation15 + $0x1e8] sm:$0xff]
        %v816 = vld [vmem:[#allocation15 + $0x1f0] sm:$0xff]
        %v817 = vld [vmem:[#allocation15 + $0x1f8] sm:$0xff]
        %v818 = vld [vmem:[%s6] sm:$0xf]
        %v820 = vlaneseq
        %v821 = vshrl.u32 %v820, 7
        %v822 = vsub.s32 0, %v821
        %v823 = vrot.slane %v818, %v822
        %v824 = vlaneseq
        %v825 = vshrl.u32 %v824, 7
        %v826 = vsub.s32 1, %v825
        %v827 = vrot.slane %v818, %v826
        %v828 = vlaneseq
        %v829 = vshrl.u32 %v828, 7
        %v830 = vsub.s32 2, %v829
        %v831 = vrot.slane %v818, %v830
        %v832 = vlaneseq
        %v833 = vshrl.u32 %v832, 7
        %v834 = vsub.s32 3, %v833
        %v835 = vrot.slane %v818, %v834
        %v840 = vld [vmem:[%s422] sm:$0xff]
        %v841 = vsub.s32 %v840, 1
        %842 = vset.pattern.permute.xlu0 0
        %843 = vperm.xlu0 %842, %v841
        %v844 = vpop.permute.xlu0 %843
        %s845 = smul.u32 %s33, 8
        %v846 = vld [vmem:[#allocation3] sm:$0xff]
        %v847 = vld [vmem:[#allocation4] sm:$0xff]
        %v848 = vld [vmem:[#allocation5] sm:$0xff]
        %v849 = vld [vmem:[#allocation6] sm:$0xff]
        %v850 = vld [vmem:[#allocation7] sm:$0xff]
        %v851 = vld [vmem:[#allocation2] sm:$0xff]
        %v852 = vld [vmem:[#allocation2 + $0x8] sm:$0xff]
        %v853 = vld [vmem:[#allocation2 + $0x10] sm:$0xff]
        %v854 = vld [vmem:[#allocation2 + $0x18] sm:$0xff]
        %v855 = vpack.c.bf16 %v846, %v846
        %v888 = vunpack.c.l.b16 %v722
        %v889 = vunpack.c.h.b16 %v722
        %v890 = vunpack.c.l.b16 %v723
        %v891 = vunpack.c.h.b16 %v723
        %v892 = vunpack.c.l.b16 %v724
        %v893 = vunpack.c.h.b16 %v724
        %v894 = vunpack.c.l.b16 %v725
        %v895 = vunpack.c.h.b16 %v725
        %v896 = vunpack.c.l.b16 %v726
        %v897 = vunpack.c.h.b16 %v726
        %v898 = vunpack.c.l.b16 %v727
        %v899 = vunpack.c.h.b16 %v727
        %v900 = vunpack.c.l.b16 %v728
        %v901 = vunpack.c.h.b16 %v728
        %v902 = vunpack.c.l.b16 %v729
        %v903 = vunpack.c.h.b16 %v729
        %v904 = vunpack.c.l.b16 %v730
        %v905 = vunpack.c.h.b16 %v730
        %v906 = vunpack.c.l.b16 %v731
        %v907 = vunpack.c.h.b16 %v731
        %v908 = vunpack.c.l.b16 %v732
        %v909 = vunpack.c.h.b16 %v732
        %v910 = vunpack.c.l.b16 %v733
        %v911 = vunpack.c.h.b16 %v733
        %v912 = vunpack.c.l.b16 %v734
        %v913 = vunpack.c.h.b16 %v734
        %v914 = vunpack.c.l.b16 %v735
        %v915 = vunpack.c.h.b16 %v735
        %v916 = vunpack.c.l.b16 %v736
        %v917 = vunpack.c.h.b16 %v736
        %v918 = vunpack.c.l.b16 %v737
        %v919 = vunpack.c.h.b16 %v737
        %v920 = vunpack.c.l.b16 %v738
        %v921 = vunpack.c.h.b16 %v738
        %v922 = vunpack.c.l.b16 %v739
        %v923 = vunpack.c.h.b16 %v739
        %v924 = vunpack.c.l.b16 %v740
        %v925 = vunpack.c.h.b16 %v740
        %v926 = vunpack.c.l.b16 %v741
        %v927 = vunpack.c.h.b16 %v741
        %v928 = vunpack.c.l.b16 %v742
        %v929 = vunpack.c.h.b16 %v742
        %v930 = vunpack.c.l.b16 %v743
        %v931 = vunpack.c.h.b16 %v743
        %v932 = vunpack.c.l.b16 %v744
        %v933 = vunpack.c.h.b16 %v744
        %v934 = vunpack.c.l.b16 %v745
        %v935 = vunpack.c.h.b16 %v745
        %v936 = vunpack.c.l.b16 %v746
        %v937 = vunpack.c.h.b16 %v746
        %v938 = vunpack.c.l.b16 %v747
        %v939 = vunpack.c.h.b16 %v747
        %v940 = vunpack.c.l.b16 %v748
        %v941 = vunpack.c.h.b16 %v748
        %v942 = vunpack.c.l.b16 %v749
        %v943 = vunpack.c.h.b16 %v749
        %v944 = vunpack.c.l.b16 %v750
        %v945 = vunpack.c.h.b16 %v750
        %v946 = vunpack.c.l.b16 %v751
        %v947 = vunpack.c.h.b16 %v751
        %v948 = vunpack.c.l.b16 %v752
        %v949 = vunpack.c.h.b16 %v752
        %v950 = vunpack.c.l.b16 %v753
        %v951 = vunpack.c.h.b16 %v753
        %v952 = vpack.c.b16 %v892, %v888
        %v953 = vpack.c.b16 %v893, %v889
        %v954 = vpack.c.b16 %v894, %v890
        %v955 = vpack.c.b16 %v895, %v891
        %v956 = vpack.c.b16 %v900, %v896
        %v957 = vpack.c.b16 %v901, %v897
        %v958 = vpack.c.b16 %v902, %v898
        %v959 = vpack.c.b16 %v903, %v899
        %v960 = vpack.c.b16 %v908, %v904
        %v961 = vpack.c.b16 %v909, %v905
        %v962 = vpack.c.b16 %v910, %v906
        %v963 = vpack.c.b16 %v911, %v907
        %v964 = vpack.c.b16 %v916, %v912
        %v965 = vpack.c.b16 %v917, %v913
        %v966 = vpack.c.b16 %v918, %v914
        %v967 = vpack.c.b16 %v919, %v915
        %v968 = vpack.c.b16 %v924, %v920
        %v969 = vpack.c.b16 %v925, %v921
        %v970 = vpack.c.b16 %v926, %v922
        %v971 = vpack.c.b16 %v927, %v923
        %v972 = vpack.c.b16 %v932, %v928
        %v973 = vpack.c.b16 %v933, %v929
        %v974 = vpack.c.b16 %v934, %v930
        %v975 = vpack.c.b16 %v935, %v931
        %v976 = vpack.c.b16 %v940, %v936
        %v977 = vpack.c.b16 %v941, %v937
        %v978 = vpack.c.b16 %v942, %v938
        %v979 = vpack.c.b16 %v943, %v939
        %v980 = vpack.c.b16 %v948, %v944
        %v981 = vpack.c.b16 %v949, %v945
        %v982 = vpack.c.b16 %v950, %v946
        %v983 = vpack.c.b16 %v951, %v947
        %1016 = vmatprep.subr.bf16.mxu0 %v953
        %1017 = vmatpush1.bf16.msra.mxu0 %v952
        %1018 = vmatprep.subr.bf16.mxu0 %v957
        %1019 = vmatpush1.bf16.msra.mxu0 %v956
        %1020 = vmatprep.subr.bf16.mxu0 %v961
        %1021 = vmatpush1.bf16.msra.mxu0 %v960
        %1022 = vmatprep.subr.bf16.mxu0 %v965
        %1023 = vmatpush1.bf16.msra.mxu0 %v964
        %1024 = vmatprep.subr.bf16.mxu0 %v969
        %1025 = vmatpush1.bf16.msra.mxu0 %v968
        %1026 = vmatprep.subr.bf16.mxu0 %v973
        %1027 = vmatpush1.bf16.msra.mxu0 %v972
        %1028 = vmatprep.subr.bf16.mxu0 %v977
        %1029 = vmatpush1.bf16.msra.mxu0 %v976
        %1030 = vmatprep.subr.bf16.mxu0 %v981
        %1031 = vmatpush1.bf16.msra.mxu0 %v980
        %1032 = vmatprep.subr.bf16.mxu0 0
        %1033 = vmatpush1.bf16.msra.mxu0 0
        %1034 = vmatprep.subr.bf16.mxu0 0
        %1035 = vmatpush1.bf16.msra.mxu0 0
        %1036 = vmatprep.subr.bf16.mxu0 0
        %1037 = vmatpush1.bf16.msra.mxu0 0
        %1038 = vmatprep.subr.bf16.mxu0 0
        %1039 = vmatpush1.bf16.msra.mxu0 0
        %1040 = vmatprep.subr.bf16.mxu0 0
        %1041 = vmatpush1.bf16.msra.mxu0 0
        %1042 = vmatprep.subr.bf16.mxu0 0
        %1043 = vmatpush1.bf16.msra.mxu0 0
        %1044 = vmatprep.subr.bf16.mxu0 0
        %1045 = vmatpush1.bf16.msra.mxu0 0
        %1046 = vmatprep.subr.bf16.mxu0 0
        %1047 = vmatpush1.bf16.msra.mxu0 0
        %1048 = vmatprep.mubr.bf16.mxu0 0
        %1049 = vmatmul.mubr.bf16.gmra.mrb[0].mxu0 %v855
        %v1050 = vpop.f32.mrb[0].mxu0
        %v1051 = vadd.f32 0.0, %v1050
        %v1052 = vpop.f32.mrb[0].mxu0
        %v1053 = vadd.f32 0.0, %v1052
        %v1054 = vpop.f32.mrb[0].mxu0
        %v1055 = vpop.f32.mrb[0].mxu0
        %1056 = vdwg.mxu0
        %1057 = vmatprep.subr.bf16.mxu0 %v955
        %1058 = vmatpush1.bf16.msra.mxu0 %v954
        %1059 = vmatprep.subr.bf16.mxu0 %v959
        %1060 = vmatpush1.bf16.msra.mxu0 %v958
        %1061 = vmatprep.subr.bf16.mxu0 %v963
        %1062 = vmatpush1.bf16.msra.mxu0 %v962
        %1063 = vmatprep.subr.bf16.mxu0 %v967
        %1064 = vmatpush1.bf16.msra.mxu0 %v966
        %1065 = vmatprep.subr.bf16.mxu0 %v971
        %1066 = vmatpush1.bf16.msra.mxu0 %v970
        %1067 = vmatprep.subr.bf16.mxu0 %v975
        %1068 = vmatpush1.bf16.msra.mxu0 %v974
        %1069 = vmatprep.subr.bf16.mxu0 %v979
        %1070 = vmatpush1.bf16.msra.mxu0 %v978
        %1071 = vmatprep.subr.bf16.mxu0 %v983
        %1072 = vmatpush1.bf16.msra.mxu0 %v982
        %1073 = vmatprep.subr.bf16.mxu0 0
        %1074 = vmatpush1.bf16.msra.mxu0 0
        %1075 = vmatprep.subr.bf16.mxu0 0
        %1076 = vmatpush1.bf16.msra.mxu0 0
        %1077 = vmatprep.subr.bf16.mxu0 0
        %1078 = vmatpush1.bf16.msra.mxu0 0
        %1079 = vmatprep.subr.bf16.mxu0 0
        %1080 = vmatpush1.bf16.msra.mxu0 0
        %1081 = vmatprep.subr.bf16.mxu0 0
        %1082 = vmatpush1.bf16.msra.mxu0 0
        %1083 = vmatprep.subr.bf16.mxu0 0
        %1084 = vmatpush1.bf16.msra.mxu0 0
        %1085 = vmatprep.subr.bf16.mxu0 0
        %1086 = vmatpush1.bf16.msra.mxu0 0
        %1087 = vmatprep.subr.bf16.mxu0 0
        %1088 = vmatpush1.bf16.msra.mxu0 0
        %1089 = vmatprep.mubr.bf16.mxu0 0
        %1090 = vmatmul.mubr.bf16.gmra.mrb[0].mxu0 %v855
        %v1091 = vpop.f32.mrb[0].mxu0
        %v1092 = vadd.f32 0.0, %v1091
        %v1093 = vpop.f32.mrb[0].mxu0
        %v1094 = vadd.f32 0.0, %v1093
        %v1095 = vpop.f32.mrb[0].mxu0
        %v1096 = vpop.f32.mrb[0].mxu0
        %1097 = vdwg.mxu0
        %v1098 = vadd.f32 %v851, %v1051
        %v1099 = vadd.f32 %v852, %v1053
        %v1100 = vadd.f32 %v853, %v1092
        %v1101 = vadd.f32 %v854, %v1094
        %v1102 = vxor.u32 %v1098, 2147483648
        %v1103 = vmul.f32 %v1102, 1.442695
        %v1104 = vpow.pop %v1103
        %v1105 = vadd.f32 %v1104, 1.0
        %v1106 = vrcp.pop %v1105
        %v1107 = vmul.f32 1.0, %v1106
        %v1108 = vxor.u32 %v1099, 2147483648
        %v1109 = vmul.f32 %v1108, 1.442695
        %v1110 = vpow.pop %v1109
        %v1111 = vadd.f32 %v1110, 1.0
        %v1112 = vrcp.pop %v1111
        %v1113 = vmul.f32 1.0, %v1112
        %v1114 = vtanh.pop %v1100
        %v1115 = vxor.u32 %v1101, 2147483648
        %v1116 = vmul.f32 %v1115, 1.442695
        %v1117 = vpow.pop %v1116
        %v1118 = vadd.f32 %v1117, 1.0
        %v1119 = vrcp.pop %v1118
        %v1120 = vmul.f32 1.0, %v1119
        %v1121 = vmul.f32 %v1113, %v847
        %v1122 = vmul.f32 %v1107, %v1114
        %v1123 = vadd.f32 %v1121, %v1122
        %v1124 = vtanh.pop %v1123
        %v1125 = vmul.f32 %v1120, %v1124
        %v1126 = vpack.c.bf16 %v1125, %v1125
        %v1127 = vpack.c.bf16 %v848, %v848
        %v1192 = vunpack.c.l.b16 %v754
        %v1193 = vunpack.c.h.b16 %v754
        %v1194 = vunpack.c.l.b16 %v755
        %v1195 = vunpack.c.h.b16 %v755
        %v1196 = vunpack.c.l.b16 %v756
        %v1197 = vunpack.c.h.b16 %v756
        %v1198 = vunpack.c.l.b16 %v757
        %v1199 = vunpack.c.h.b16 %v757
        %v1200 = vunpack.c.l.b16 %v758
        %v1201 = vunpack.c.h.b16 %v758
        %v1202 = vunpack.c.l.b16 %v759
        %v1203 = vunpack.c.h.b16 %v759
        %v1204 = vunpack.c.l.b16 %v760
        %v1205 = vunpack.c.h.b16 %v760
        %v1206 = vunpack.c.l.b16 %v761
        %v1207 = vunpack.c.h.b16 %v761
        %v1208 = vunpack.c.l.b16 %v762
        %v1209 = vunpack.c.h.b16 %v762
        %v1210 = vunpack.c.l.b16 %v763
        %v1211 = vunpack.c.h.b16 %v763
        %v1212 = vunpack.c.l.b16 %v764
        %v1213 = vunpack.c.h.b16 %v764
        %v1214 = vunpack.c.l.b16 %v765
        %v1215 = vunpack.c.h.b16 %v765
        %v1216 = vunpack.c.l.b16 %v766
        %v1217 = vunpack.c.h.b16 %v766
        %v1218 = vunpack.c.l.b16 %v767
        %v1219 = vunpack.c.h.b16 %v767
        %v1220 = vunpack.c.l.b16 %v768
        %v1221 = vunpack.c.h.b16 %v768
        %v1222 = vunpack.c.l.b16 %v769
        %v1223 = vunpack.c.h.b16 %v769
        %v1224 = vunpack.c.l.b16 %v770
        %v1225 = vunpack.c.h.b16 %v770
        %v1226 = vunpack.c.l.b16 %v771
        %v1227 = vunpack.c.h.b16 %v771
        %v1228 = vunpack.c.l.b16 %v772
        %v1229 = vunpack.c.h.b16 %v772
        %v1230 = vunpack.c.l.b16 %v773
        %v1231 = vunpack.c.h.b16 %v773
        %v1232 = vunpack.c.l.b16 %v774
        %v1233 = vunpack.c.h.b16 %v774
        %v1234 = vunpack.c.l.b16 %v775
        %v1235 = vunpack.c.h.b16 %v775
        %v1236 = vunpack.c.l.b16 %v776
        %v1237 = vunpack.c.h.b16 %v776
        %v1238 = vunpack.c.l.b16 %v777
        %v1239 = vunpack.c.h.b16 %v777
        %v1240 = vunpack.c.l.b16 %v778
        %v1241 = vunpack.c.h.b16 %v778
        %v1242 = vunpack.c.l.b16 %v779
        %v1243 = vunpack.c.h.b16 %v779
        %v1244 = vunpack.c.l.b16 %v780
        %v1245 = vunpack.c.h.b16 %v780
        %v1246 = vunpack.c.l.b16 %v781
        %v1247 = vunpack.c.h.b16 %v781
        %v1248 = vunpack.c.l.b16 %v782
        %v1249 = vunpack.c.h.b16 %v782
        %v1250 = vunpack.c.l.b16 %v783
        %v1251 = vunpack.c.h.b16 %v783
        %v1252 = vunpack.c.l.b16 %v784
        %v1253 = vunpack.c.h.b16 %v784
        %v1254 = vunpack.c.l.b16 %v785
        %v1255 = vunpack.c.h.b16 %v785
        %v1256 = vunpack.c.l.b16 %v786
        %v1257 = vunpack.c.h.b16 %v786
        %v1258 = vunpack.c.l.b16 %v787
        %v1259 = vunpack.c.h.b16 %v787
        %v1260 = vunpack.c.l.b16 %v788
        %v1261 = vunpack.c.h.b16 %v788
        %v1262 = vunpack.c.l.b16 %v789
        %v1263 = vunpack.c.h.b16 %v789
        %v1264 = vunpack.c.l.b16 %v790
        %v1265 = vunpack.c.h.b16 %v790
        %v1266 = vunpack.c.l.b16 %v791
        %v1267 = vunpack.c.h.b16 %v791
        %v1268 = vunpack.c.l.b16 %v792
        %v1269 = vunpack.c.h.b16 %v792
        %v1270 = vunpack.c.l.b16 %v793
        %v1271 = vunpack.c.h.b16 %v793
        %v1272 = vunpack.c.l.b16 %v794
        %v1273 = vunpack.c.h.b16 %v794
        %v1274 = vunpack.c.l.b16 %v795
        %v1275 = vunpack.c.h.b16 %v795
        %v1276 = vunpack.c.l.b16 %v796
        %v1277 = vunpack.c.h.b16 %v796
        %v1278 = vunpack.c.l.b16 %v797
        %v1279 = vunpack.c.h.b16 %v797
        %v1280 = vunpack.c.l.b16 %v798
        %v1281 = vunpack.c.h.b16 %v798
        %v1282 = vunpack.c.l.b16 %v799
        %v1283 = vunpack.c.h.b16 %v799
        %v1284 = vunpack.c.l.b16 %v800
        %v1285 = vunpack.c.h.b16 %v800
        %v1286 = vunpack.c.l.b16 %v801
        %v1287 = vunpack.c.h.b16 %v801
        %v1288 = vunpack.c.l.b16 %v802
        %v1289 = vunpack.c.h.b16 %v802
        %v1290 = vunpack.c.l.b16 %v803
        %v1291 = vunpack.c.h.b16 %v803
        %v1292 = vunpack.c.l.b16 %v804
        %v1293 = vunpack.c.h.b16 %v804
        %v1294 = vunpack.c.l.b16 %v805
        %v1295 = vunpack.c.h.b16 %v805
        %v1296 = vunpack.c.l.b16 %v806
        %v1297 = vunpack.c.h.b16 %v806
        %v1298 = vunpack.c.l.b16 %v807
        %v1299 = vunpack.c.h.b16 %v807
        %v1300 = vunpack.c.l.b16 %v808
        %v1301 = vunpack.c.h.b16 %v808
        %v1302 = vunpack.c.l.b16 %v809
        %v1303 = vunpack.c.h.b16 %v809
        %v1304 = vunpack.c.l.b16 %v810
        %v1305 = vunpack.c.h.b16 %v810
        %v1306 = vunpack.c.l.b16 %v811
        %v1307 = vunpack.c.h.b16 %v811
        %v1308 = vunpack.c.l.b16 %v812
        %v1309 = vunpack.c.h.b16 %v812
        %v1310 = vunpack.c.l.b16 %v813
        %v1311 = vunpack.c.h.b16 %v813
        %v1312 = vunpack.c.l.b16 %v814
        %v1313 = vunpack.c.h.b16 %v814
        %v1314 = vunpack.c.l.b16 %v815
        %v1315 = vunpack.c.h.b16 %v815
        %v1316 = vunpack.c.l.b16 %v816
        %v1317 = vunpack.c.h.b16 %v816
        %v1318 = vunpack.c.l.b16 %v817
        %v1319 = vunpack.c.h.b16 %v817
        %v1320 = vpack.c.b16 %v1196, %v1192
        %v1321 = vpack.c.b16 %v1197, %v1193
        %v1322 = vpack.c.b16 %v1198, %v1194
        %v1323 = vpack.c.b16 %v1199, %v1195
        %v1324 = vpack.c.b16 %v1204, %v1200
        %v1325 = vpack.c.b16 %v1205, %v1201
        %v1326 = vpack.c.b16 %v1206, %v1202
        %v1327 = vpack.c.b16 %v1207, %v1203
        %v1328 = vpack.c.b16 %v1212, %v1208
        %v1329 = vpack.c.b16 %v1213, %v1209
        %v1330 = vpack.c.b16 %v1214, %v1210
        %v1331 = vpack.c.b16 %v1215, %v1211
        %v1332 = vpack.c.b16 %v1220, %v1216
        %v1333 = vpack.c.b16 %v1221, %v1217
        %v1334 = vpack.c.b16 %v1222, %v1218
        %v1335 = vpack.c.b16 %v1223, %v1219
        %v1336 = vpack.c.b16 %v1228, %v1224
        %v1337 = vpack.c.b16 %v1229, %v1225
        %v1338 = vpack.c.b16 %v1230, %v1226
        %v1339 = vpack.c.b16 %v1231, %v1227
        %v1340 = vpack.c.b16 %v1236, %v1232
        %v1341 = vpack.c.b16 %v1237, %v1233
        %v1342 = vpack.c.b16 %v1238, %v1234
        %v1343 = vpack.c.b16 %v1239, %v1235
        %v1344 = vpack.c.b16 %v1244, %v1240
        %v1345 = vpack.c.b16 %v1245, %v1241
        %v1346 = vpack.c.b16 %v1246, %v1242
        %v1347 = vpack.c.b16 %v1247, %v1243
        %v1348 = vpack.c.b16 %v1252, %v1248
        %v1349 = vpack.c.b16 %v1253, %v1249
        %v1350 = vpack.c.b16 %v1254, %v1250
        %v1351 = vpack.c.b16 %v1255, %v1251
        %v1352 = vpack.c.b16 %v1260, %v1256
        %v1353 = vpack.c.b16 %v1261, %v1257
        %v1354 = vpack.c.b16 %v1262, %v1258
        %v1355 = vpack.c.b16 %v1263, %v1259
        %v1356 = vpack.c.b16 %v1268, %v1264
        %v1357 = vpack.c.b16 %v1269, %v1265
        %v1358 = vpack.c.b16 %v1270, %v1266
        %v1359 = vpack.c.b16 %v1271, %v1267
        %v1360 = vpack.c.b16 %v1276, %v1272
        %v1361 = vpack.c.b16 %v1277, %v1273
        %v1362 = vpack.c.b16 %v1278, %v1274
        %v1363 = vpack.c.b16 %v1279, %v1275
        %v1364 = vpack.c.b16 %v1284, %v1280
        %v1365 = vpack.c.b16 %v1285, %v1281
        %v1366 = vpack.c.b16 %v1286, %v1282
        %v1367 = vpack.c.b16 %v1287, %v1283
        %v1368 = vpack.c.b16 %v1292, %v1288
        %v1369 = vpack.c.b16 %v1293, %v1289
        %v1370 = vpack.c.b16 %v1294, %v1290
        %v1371 = vpack.c.b16 %v1295, %v1291
        %v1372 = vpack.c.b16 %v1300, %v1296
        %v1373 = vpack.c.b16 %v1301, %v1297
        %v1374 = vpack.c.b16 %v1302, %v1298
        %v1375 = vpack.c.b16 %v1303, %v1299
        %v1376 = vpack.c.b16 %v1308, %v1304
        %v1377 = vpack.c.b16 %v1309, %v1305
        %v1378 = vpack.c.b16 %v1310, %v1306
        %v1379 = vpack.c.b16 %v1311, %v1307
        %v1380 = vpack.c.b16 %v1316, %v1312
        %v1381 = vpack.c.b16 %v1317, %v1313
        %v1382 = vpack.c.b16 %v1318, %v1314
        %v1383 = vpack.c.b16 %v1319, %v1315
        %1448 = vmatprep.subr.bf16.mxu0 %v1321
        %1449 = vmatpush1.bf16.msra.mxu0 %v1320
        %1450 = vmatprep.subr.bf16.mxu0 %v1325
        %1451 = vmatpush1.bf16.msra.mxu0 %v1324
        %1452 = vmatprep.subr.bf16.mxu0 %v1329
        %1453 = vmatpush1.bf16.msra.mxu0 %v1328
        %1454 = vmatprep.subr.bf16.mxu0 %v1333
        %1455 = vmatpush1.bf16.msra.mxu0 %v1332
        %1456 = vmatprep.subr.bf16.mxu0 %v1337
        %1457 = vmatpush1.bf16.msra.mxu0 %v1336
        %1458 = vmatprep.subr.bf16.mxu0 %v1341
        %1459 = vmatpush1.bf16.msra.mxu0 %v1340
        %1460 = vmatprep.subr.bf16.mxu0 %v1345
        %1461 = vmatpush1.bf16.msra.mxu0 %v1344
        %1462 = vmatprep.subr.bf16.mxu0 %v1349
        %1463 = vmatpush1.bf16.msra.mxu0 %v1348
        %1464 = vmatprep.subr.bf16.mxu0 %v1353
        %1465 = vmatpush1.bf16.msra.mxu0 %v1352
        %1466 = vmatprep.subr.bf16.mxu0 %v1357
        %1467 = vmatpush1.bf16.msra.mxu0 %v1356
        %1468 = vmatprep.subr.bf16.mxu0 %v1361
        %1469 = vmatpush1.bf16.msra.mxu0 %v1360
        %1470 = vmatprep.subr.bf16.mxu0 %v1365
        %1471 = vmatpush1.bf16.msra.mxu0 %v1364
        %1472 = vmatprep.subr.bf16.mxu0 %v1369
        %1473 = vmatpush1.bf16.msra.mxu0 %v1368
        %1474 = vmatprep.subr.bf16.mxu0 %v1373
        %1475 = vmatpush1.bf16.msra.mxu0 %v1372
        %1476 = vmatprep.subr.bf16.mxu0 %v1377
        %1477 = vmatpush1.bf16.msra.mxu0 %v1376
        %1478 = vmatprep.subr.bf16.mxu0 %v1381
        %1479 = vmatpush1.bf16.msra.mxu0 %v1380
        %1480 = vmatprep.mubr.bf16.mxu0 %v1127
        %1481 = vmatmul.mubr.bf16.gmra.mrb[0].mxu0 %v1126
        %v1482 = vpop.f32.mrb[0].mxu0
        %v1483 = vadd.f32 %v823, %v1482
        %v1484 = vpop.f32.mrb[0].mxu0
        %v1485 = vadd.f32 %v827, %v1484
        %v1486 = vpop.f32.mrb[0].mxu0
        %v1487 = vpop.f32.mrb[0].mxu0
        %1488 = vdwg.mxu0
        %1489 = vmatprep.subr.bf16.mxu0 %v1323
        %1490 = vmatpush1.bf16.msra.mxu0 %v1322
        %1491 = vmatprep.subr.bf16.mxu0 %v1327
        %1492 = vmatpush1.bf16.msra.mxu0 %v1326
        %1493 = vmatprep.subr.bf16.mxu0 %v1331
        %1494 = vmatpush1.bf16.msra.mxu0 %v1330
        %1495 = vmatprep.subr.bf16.mxu0 %v1335
        %1496 = vmatpush1.bf16.msra.mxu0 %v1334
        %1497 = vmatprep.subr.bf16.mxu0 %v1339
        %1498 = vmatpush1.bf16.msra.mxu0 %v1338
        %1499 = vmatprep.subr.bf16.mxu0 %v1343
        %1500 = vmatpush1.bf16.msra.mxu0 %v1342
        %1501 = vmatprep.subr.bf16.mxu0 %v1347
        %1502 = vmatpush1.bf16.msra.mxu0 %v1346
        %1503 = vmatprep.subr.bf16.mxu0 %v1351
        %1504 = vmatpush1.bf16.msra.mxu0 %v1350
        %1505 = vmatprep.subr.bf16.mxu0 %v1355
        %1506 = vmatpush1.bf16.msra.mxu0 %v1354
        %1507 = vmatprep.subr.bf16.mxu0 %v1359
        %1508 = vmatpush1.bf16.msra.mxu0 %v1358
        %1509 = vmatprep.subr.bf16.mxu0 %v1363
        %1510 = vmatpush1.bf16.msra.mxu0 %v1362
        %1511 = vmatprep.subr.bf16.mxu0 %v1367
        %1512 = vmatpush1.bf16.msra.mxu0 %v1366
        %1513 = vmatprep.subr.bf16.mxu0 %v1371
        %1514 = vmatpush1.bf16.msra.mxu0 %v1370
        %1515 = vmatprep.subr.bf16.mxu0 %v1375
        %1516 = vmatpush1.bf16.msra.mxu0 %v1374
        %1517 = vmatprep.subr.bf16.mxu0 %v1379
        %1518 = vmatpush1.bf16.msra.mxu0 %v1378
        %1519 = vmatprep.subr.bf16.mxu0 %v1383
        %1520 = vmatpush1.bf16.msra.mxu0 %v1382
        %1521 = vmatprep.mubr.bf16.mxu0 %v1127
        %1522 = vmatmul.mubr.bf16.gmra.mrb[0].mxu0 %v1126
        %v1523 = vpop.f32.mrb[0].mxu0
        %v1524 = vadd.f32 %v831, %v1523
        %v1525 = vpop.f32.mrb[0].mxu0
        %v1526 = vadd.f32 %v835, %v1525
        %v1527 = vpop.f32.mrb[0].mxu0
        %v1528 = vpop.f32.mrb[0].mxu0
        %1529 = vdwg.mxu0
        %v1530 = vxor.u32 %v1483, 2147483648
        %v1531 = vmul.f32 %v1530, 1.442695
        %v1532 = vpow.pop %v1531
        %v1533 = vadd.f32 %v1532, 1.0
        %v1534 = vrcp.pop %v1533
        %v1535 = vmul.f32 1.0, %v1534
        %v1536 = vxor.u32 %v1485, 2147483648
        %v1537 = vmul.f32 %v1536, 1.442695
        %v1538 = vpow.pop %v1537
        %v1539 = vadd.f32 %v1538, 1.0
        %v1540 = vrcp.pop %v1539
        %v1541 = vmul.f32 1.0, %v1540
        %v1542 = vtanh.pop %v1524
        %v1543 = vxor.u32 %v1526, 2147483648
        %v1544 = vmul.f32 %v1543, 1.442695
        %v1545 = vpow.pop %v1544
        %v1546 = vadd.f32 %v1545, 1.0
        %v1547 = vrcp.pop %v1546
        %v1548 = vmul.f32 1.0, %v1547
        %v1549 = vmul.f32 %v1541, %v849
        %v1550 = vmul.f32 %v1535, %v1542
        %v1551 = vadd.f32 %v1549, %v1550
        %v1552 = vtanh.pop %v1551
        %v1553 = vmul.f32 %v1548, %v1552
        %v1554 = vstv %s845
        %vm1555 = vcmp.eq.s32.totalorder %v844, %v1554
        %v1556 = vsel %vm1555, %v1553, %v850
        %s1557 = scalar_lea.vmem [#allocation2], 32
        %v1558 = vld [vmem:[%s1557] sm:$0xff]
        %v1559 = vld [vmem:[%s1557 + $0x8] sm:$0xff]
        %v1560 = vld [vmem:[%s1557 + $0x10] sm:$0xff]
        %v1561 = vld [vmem:[%s1557 + $0x18] sm:$0xff]
        %1562 = vmatprep.subr.bf16.mxu0 %v953
        %1563 = vmatpush1.bf16.msra.mxu0 %v952
        %1564 = vmatprep.subr.bf16.mxu0 %v957
        %1565 = vmatpush1.bf16.msra.mxu0 %v956
        %1566 = vmatprep.subr.bf16.mxu0 %v961
        %1567 = vmatpush1.bf16.msra.mxu0 %v960
        %1568 = vmatprep.subr.bf16.mxu0 %v965
        %1569 = vmatpush1.bf16.msra.mxu0 %v964
        %1570 = vmatprep.subr.bf16.mxu0 %v969
        %1571 = vmatpush1.bf16.msra.mxu0 %v968
        %1572 = vmatprep.subr.bf16.mxu0 %v973
        %1573 = vmatpush1.bf16.msra.mxu0 %v972
        %1574 = vmatprep.subr.bf16.mxu0 %v977
        %1575 = vmatpush1.bf16.msra.mxu0 %v976
        %1576 = vmatprep.subr.bf16.mxu0 %v981
        %1577 = vmatpush1.bf16.msra.mxu0 %v980
        %1578 = vmatprep.subr.bf16.mxu0 0
        %1579 = vmatpush1.bf16.msra.mxu0 0
        %1580 = vmatprep.subr.bf16.mxu0 0
        %1581 = vmatpush1.bf16.msra.mxu0 0
        %1582 = vmatprep.subr.bf16.mxu0 0
        %1583 = vmatpush1.bf16.msra.mxu0 0
        %1584 = vmatprep.subr.bf16.mxu0 0
        %1585 = vmatpush1.bf16.msra.mxu0 0
        %1586 = vmatprep.subr.bf16.mxu0 0
        %1587 = vmatpush1.bf16.msra.mxu0 0
        %1588 = vmatprep.subr.bf16.mxu0 0
        %1589 = vmatpush1.bf16.msra.mxu0 0
        %1590 = vmatprep.subr.bf16.mxu0 0
        %1591 = vmatpush1.bf16.msra.mxu0 0
        %1592 = vmatprep.subr.bf16.mxu0 0
        %1593 = vmatpush1.bf16.msra.mxu0 0
        %1594 = vmatprep.mubr.bf16.mxu0 0
        %1595 = vmatmul.mubr.bf16.gmra.mrb[0].mxu0 %v1126
        %v1596 = vpop.f32.mrb[0].mxu0
        %v1597 = vadd.f32 0.0, %v1596
        %v1598 = vpop.f32.mrb[0].mxu0
        %v1599 = vadd.f32 0.0, %v1598
        %v1600 = vpop.f32.mrb[0].mxu0
        %v1601 = vpop.f32.mrb[0].mxu0
        %1602 = vdwg.mxu0
        %1603 = vmatprep.subr.bf16.mxu0 %v955
        %1604 = vmatpush1.bf16.msra.mxu0 %v954
        %1605 = vmatprep.subr.bf16.mxu0 %v959
        %1606 = vmatpush1.bf16.msra.mxu0 %v958
        %1607 = vmatprep.subr.bf16.mxu0 %v963
        %1608 = vmatpush1.bf16.msra.mxu0 %v962
        %1609 = vmatprep.subr.bf16.mxu0 %v967
        %1610 = vmatpush1.bf16.msra.mxu0 %v966
        %1611 = vmatprep.subr.bf16.mxu0 %v971
        %1612 = vmatpush1.bf16.msra.mxu0 %v970
        %1613 = vmatprep.subr.bf16.mxu0 %v975
        %1614 = vmatpush1.bf16.msra.mxu0 %v974
        %1615 = vmatprep.subr.bf16.mxu0 %v979
        %1616 = vmatpush1.bf16.msra.mxu0 %v978
        %1617 = vmatprep.subr.bf16.mxu0 %v983
        %1618 = vmatpush1.bf16.msra.mxu0 %v982
        %1619 = vmatprep.subr.bf16.mxu0 0
        %1620 = vmatpush1.bf16.msra.mxu0 0
        %1621 = vmatprep.subr.bf16.mxu0 0
        %1622 = vmatpush1.bf16.msra.mxu0 0
        %1623 = vmatprep.subr.bf16.mxu0 0
        %1624 = vmatpush1.bf16.msra.mxu0 0
        %1625 = vmatprep.subr.bf16.mxu0 0
        %1626 = vmatpush1.bf16.msra.mxu0 0
        %1627 = vmatprep.subr.bf16.mxu0 0
        %1628 = vmatpush1.bf16.msra.mxu0 0
        %1629 = vmatprep.subr.bf16.mxu0 0
        %1630 = vmatpush1.bf16.msra.mxu0 0
        %1631 = vmatprep.subr.bf16.mxu0 0
        %1632 = vmatpush1.bf16.msra.mxu0 0
        %1633 = vmatprep.subr.bf16.mxu0 0
        %1634 = vmatpush1.bf16.msra.mxu0 0
        %1635 = vmatprep.mubr.bf16.mxu0 0
        %1636 = vmatmul.mubr.bf16.gmra.mrb[0].mxu0 %v1126
        %v1637 = vpop.f32.mrb[0].mxu0
        %v1638 = vadd.f32 0.0, %v1637
        %v1639 = vpop.f32.mrb[0].mxu0
        %v1640 = vadd.f32 0.0, %v1639
        %v1641 = vpop.f32.mrb[0].mxu0
        %v1642 = vpop.f32.mrb[0].mxu0
        %1643 = vdwg.mxu0
        %v1644 = vadd.f32 %v1558, %v1597
        %v1645 = vadd.f32 %v1559, %v1599
        %v1646 = vadd.f32 %v1560, %v1638
        %v1647 = vadd.f32 %v1561, %v1640
        %v1648 = vxor.u32 %v1644, 2147483648
        %v1649 = vmul.f32 %v1648, 1.442695
        %v1650 = vpow.pop %v1649
        %v1651 = vadd.f32 %v1650, 1.0
        %v1652 = vrcp.pop %v1651
        %v1653 = vmul.f32 1.0, %v1652
        %v1654 = vxor.u32 %v1645, 2147483648
        %v1655 = vmul.f32 %v1654, 1.442695
        %v1656 = vpow.pop %v1655
        %v1657 = vadd.f32 %v1656, 1.0
        %v1658 = vrcp.pop %v1657
        %v1659 = vmul.f32 1.0, %v1658
        %v1660 = vtanh.pop %v1646
        %v1661 = vxor.u32 %v1647, 2147483648
        %v1662 = vmul.f32 %v1661, 1.442695
        %v1663 = vpow.pop %v1662
        %v1664 = vadd.f32 %v1663, 1.0
        %v1665 = vrcp.pop %v1664
        %v1666 = vmul.f32 1.0, %v1665
        %v1667 = vmul.f32 %v1659, %v1123
        %v1668 = vmul.f32 %v1653, %v1660
        %v1669 = vadd.f32 %v1667, %v1668
        %v1670 = vtanh.pop %v1669
        %v1671 = vmul.f32 %v1666, %v1670
        %v1672 = vpack.c.bf16 %v1671, %v1671
        %v1673 = vpack.c.bf16 %v1553, %v1553
        %1674 = vmatprep.subr.bf16.mxu0 %v1321
        %1675 = vmatpush1.bf16.msra.mxu0 %v1320
        %1676 = vmatprep.subr.bf16.mxu0 %v1325
        %1677 = vmatpush1.bf16.msra.mxu0 %v1324
        %1678 = vmatprep.subr.bf16.mxu0 %v1329
        %1679 = vmatpush1.bf16.msra.mxu0 %v1328
        %1680 = vmatprep.subr.bf16.mxu0 %v1333
        %1681 = vmatpush1.bf16.msra.mxu0 %v1332
        %1682 = vmatprep.subr.bf16.mxu0 %v1337
        %1683 = vmatpush1.bf16.msra.mxu0 %v1336
        %1684 = vmatprep.subr.bf16.mxu0 %v1341
        %1685 = vmatpush1.bf16.msra.mxu0 %v1340
        %1686 = vmatprep.subr.bf16.mxu0 %v1345
        %1687 = vmatpush1.bf16.msra.mxu0 %v1344
        %1688 = vmatprep.subr.bf16.mxu0 %v1349
        %1689 = vmatpush1.bf16.msra.mxu0 %v1348
        %1690 = vmatprep.subr.bf16.mxu0 %v1353
        %1691 = vmatpush1.bf16.msra.mxu0 %v1352
        %1692 = vmatprep.subr.bf16.mxu0 %v1357
        %1693 = vmatpush1.bf16.msra.mxu0 %v1356
        %1694 = vmatprep.subr.bf16.mxu0 %v1361
        %1695 = vmatpush1.bf16.msra.mxu0 %v1360
        %1696 = vmatprep.subr.bf16.mxu0 %v1365
        %1697 = vmatpush1.bf16.msra.mxu0 %v1364
        %1698 = vmatprep.subr.bf16.mxu0 %v1369
        %1699 = vmatpush1.bf16.msra.mxu0 %v1368
        %1700 = vmatprep.subr.bf16.mxu0 %v1373
        %1701 = vmatpush1.bf16.msra.mxu0 %v1372
        %1702 = vmatprep.subr.bf16.mxu0 %v1377
        %1703 = vmatpush1.bf16.msra.mxu0 %v1376
        %1704 = vmatprep.subr.bf16.mxu0 %v1381
        %1705 = vmatpush1.bf16.msra.mxu0 %v1380
        %1706 = vmatprep.mubr.bf16.mxu0 %v1673
        %1707 = vmatmul.mubr.bf16.gmra.mrb[0].mxu0 %v1672
        %v1708 = vpop.f32.mrb[0].mxu0
        %v1709 = vadd.f32 %v823, %v1708
        %v1710 = vpop.f32.mrb[0].mxu0
        %v1711 = vadd.f32 %v827, %v1710
        %v1712 = vpop.f32.mrb[0].mxu0
        %v1713 = vpop.f32.mrb[0].mxu0
        %1714 = vdwg.mxu0
        %1715 = vmatprep.subr.bf16.mxu0 %v1323
        %1716 = vmatpush1.bf16.msra.mxu0 %v1322
        %1717 = vmatprep.subr.bf16.mxu0 %v1327
        %1718 = vmatpush1.bf16.msra.mxu0 %v1326
        %1719 = vmatprep.subr.bf16.mxu0 %v1331
        %1720 = vmatpush1.bf16.msra.mxu0 %v1330
        %1721 = vmatprep.subr.bf16.mxu0 %v1335
        %1722 = vmatpush1.bf16.msra.mxu0 %v1334
        %1723 = vmatprep.subr.bf16.mxu0 %v1339
        %1724 = vmatpush1.bf16.msra.mxu0 %v1338
        %1725 = vmatprep.subr.bf16.mxu0 %v1343
        %1726 = vmatpush1.bf16.msra.mxu0 %v1342
        %1727 = vmatprep.subr.bf16.mxu0 %v1347
        %1728 = vmatpush1.bf16.msra.mxu0 %v1346
        %1729 = vmatprep.subr.bf16.mxu0 %v1351
        %1730 = vmatpush1.bf16.msra.mxu0 %v1350
        %1731 = vmatprep.subr.bf16.mxu0 %v1355
        %1732 = vmatpush1.bf16.msra.mxu0 %v1354
        %1733 = vmatprep.subr.bf16.mxu0 %v1359
        %1734 = vmatpush1.bf16.msra.mxu0 %v1358
        %1735 = vmatprep.subr.bf16.mxu0 %v1363
        %1736 = vmatpush1.bf16.msra.mxu0 %v1362
        %1737 = vmatprep.subr.bf16.mxu0 %v1367
        %1738 = vmatpush1.bf16.msra.mxu0 %v1366
        %1739 = vmatprep.subr.bf16.mxu0 %v1371
        %1740 = vmatpush1.bf16.msra.mxu0 %v1370
        %1741 = vmatprep.subr.bf16.mxu0 %v1375
        %1742 = vmatpush1.bf16.msra.mxu0 %v1374
        %1743 = vmatprep.subr.bf16.mxu0 %v1379
        %1744 = vmatpush1.bf16.msra.mxu0 %v1378
        %1745 = vmatprep.subr.bf16.mxu0 %v1383
        %1746 = vmatpush1.bf16.msra.mxu0 %v1382
        %1747 = vmatprep.mubr.bf16.mxu0 %v1673
        %1748 = vmatmul.mubr.bf16.gmra.mrb[0].mxu0 %v1672
        %v1749 = vpop.f32.mrb[0].mxu0
        %v1750 = vadd.f32 %v831, %v1749
        %v1751 = vpop.f32.mrb[0].mxu0
        %v1752 = vadd.f32 %v835, %v1751
        %v1753 = vpop.f32.mrb[0].mxu0
        %v1754 = vpop.f32.mrb[0].mxu0
        %1755 = vdwg.mxu0
        %v1756 = vxor.u32 %v1709, 2147483648
        %v1757 = vmul.f32 %v1756, 1.442695
        %v1758 = vpow.pop %v1757
        %v1759 = vadd.f32 %v1758, 1.0
        %v1760 = vrcp.pop %v1759
        %v1761 = vmul.f32 1.0, %v1760
        %v1762 = vxor.u32 %v1711, 2147483648
        %v1763 = vmul.f32 %v1762, 1.442695
        %v1764 = vpow.pop %v1763
        %v1765 = vadd.f32 %v1764, 1.0
        %v1766 = vrcp.pop %v1765
        %v1767 = vmul.f32 1.0, %v1766
        %v1768 = vtanh.pop %v1750
        %v1769 = vxor.u32 %v1752, 2147483648
        %v1770 = vmul.f32 %v1769, 1.442695
        %v1771 = vpow.pop %v1770
        %v1772 = vadd.f32 %v1771, 1.0
        %v1773 = vrcp.pop %v1772
        %v1774 = vmul.f32 1.0, %v1773
        %v1775 = vmul.f32 %v1767, %v1551
        %v1776 = vmul.f32 %v1761, %v1768
        %v1777 = vadd.f32 %v1775, %v1776
        %v1778 = vtanh.pop %v1777
        %v1779 = vmul.f32 %v1774, %v1778
        %s1780 = sadd.s32 %s845, 1
        %v1781 = vstv %s1780
        %vm1782 = vcmp.eq.s32.totalorder %v844, %v1781
        %v1783 = vsel %vm1782, %v1779, %v1556
        %s1784 = scalar_lea.vmem [#allocation2], 64
        %v1785 = vld [vmem:[%s1784] sm:$0xff]
        %v1786 = vld [vmem:[%s1784 + $0x8] sm:$0xff]
        %v1787 = vld [vmem:[%s1784 + $0x10] sm:$0xff]
        %v1788 = vld [vmem:[%s1784 + $0x18] sm:$0xff]
        %1789 = vmatprep.subr.bf16.mxu0 %v953
        %1790 = vmatpush1.bf16.msra.mxu0 %v952
        %1791 = vmatprep.subr.bf16.mxu0 %v957
        %1792 = vmatpush1.bf16.msra.mxu0 %v956
        %1793 = vmatprep.subr.bf16.mxu0 %v961
        %1794 = vmatpush1.bf16.msra.mxu0 %v960
        %1795 = vmatprep.subr.bf16.mxu0 %v965
        %1796 = vmatpush1.bf16.msra.mxu0 %v964
        %1797 = vmatprep.subr.bf16.mxu0 %v969
        %1798 = vmatpush1.bf16.msra.mxu0 %v968
        %1799 = vmatprep.subr.bf16.mxu0 %v973
        %1800 = vmatpush1.bf16.msra.mxu0 %v972
        %1801 = vmatprep.subr.bf16.mxu0 %v977
        %1802 = vmatpush1.bf16.msra.mxu0 %v976
        %1803 = vmatprep.subr.bf16.mxu0 %v981
        %1804 = vmatpush1.bf16.msra.mxu0 %v980
        %1805 = vmatprep.subr.bf16.mxu0 0
        %1806 = vmatpush1.bf16.msra.mxu0 0
        %1807 = vmatprep.subr.bf16.mxu0 0
        %1808 = vmatpush1.bf16.msra.mxu0 0
        %1809 = vmatprep.subr.bf16.mxu0 0
        %1810 = vmatpush1.bf16.msra.mxu0 0
        %1811 = vmatprep.subr.bf16.mxu0 0
        %1812 = vmatpush1.bf16.msra.mxu0 0
        %1813 = vmatprep.subr.bf16.mxu0 0
        %1814 = vmatpush1.bf16.msra.mxu0 0
        %1815 = vmatprep.subr.bf16.mxu0 0
        %1816 = vmatpush1.bf16.msra.mxu0 0
        %1817 = vmatprep.subr.bf16.mxu0 0
        %1818 = vmatpush1.bf16.msra.mxu0 0
        %1819 = vmatprep.subr.bf16.mxu0 0
        %1820 = vmatpush1.bf16.msra.mxu0 0
        %1821 = vmatprep.mubr.bf16.mxu0 0
        %1822 = vmatmul.mubr.bf16.gmra.mrb[0].mxu0 %v1672
        %v1823 = vpop.f32.mrb[0].mxu0
        %v1824 = vadd.f32 0.0, %v1823
        %v1825 = vpop.f32.mrb[0].mxu0
        %v1826 = vadd.f32 0.0, %v1825
        %v1827 = vpop.f32.mrb[0].mxu0
        %v1828 = vpop.f32.mrb[0].mxu0
        %1829 = vdwg.mxu0
        %1830 = vmatprep.subr.bf16.mxu0 %v955
        %1831 = vmatpush1.bf16.msra.mxu0 %v954
        %1832 = vmatprep.subr.bf16.mxu0 %v959
        %1833 = vmatpush1.bf16.msra.mxu0 %v958
        %1834 = vmatprep.subr.bf16.mxu0 %v963
        %1835 = vmatpush1.bf16.msra.mxu0 %v962
        %1836 = vmatprep.subr.bf16.mxu0 %v967
        %1837 = vmatpush1.bf16.msra.mxu0 %v966
        %1838 = vmatprep.subr.bf16.mxu0 %v971
        %1839 = vmatpush1.bf16.msra.mxu0 %v970
        %1840 = vmatprep.subr.bf16.mxu0 %v975
        %1841 = vmatpush1.bf16.msra.mxu0 %v974
        %1842 = vmatprep.subr.bf16.mxu0 %v979
        %1843 = vmatpush1.bf16.msra.mxu0 %v978
        %1844 = vmatprep.subr.bf16.mxu0 %v983
        %1845 = vmatpush1.bf16.msra.mxu0 %v982
        %1846 = vmatprep.subr.bf16.mxu0 0
        %1847 = vmatpush1.bf16.msra.mxu0 0
        %1848 = vmatprep.subr.bf16.mxu0 0
        %1849 = vmatpush1.bf16.msra.mxu0 0
        %1850 = vmatprep.subr.bf16.mxu0 0
        %1851 = vmatpush1.bf16.msra.mxu0 0
        %1852 = vmatprep.subr.bf16.mxu0 0
        %1853 = vmatpush1.bf16.msra.mxu0 0
        %1854 = vmatprep.subr.bf16.mxu0 0
        %1855 = vmatpush1.bf16.msra.mxu0 0
        %1856 = vmatprep.subr.bf16.mxu0 0
        %1857 = vmatpush1.bf16.msra.mxu0 0
        %1858 = vmatprep.subr.bf16.mxu0 0
        %1859 = vmatpush1.bf16.msra.mxu0 0
        %1860 = vmatprep.subr.bf16.mxu0 0
        %1861 = vmatpush1.bf16.msra.mxu0 0
        %1862 = vmatprep.mubr.bf16.mxu0 0
        %1863 = vmatmul.mubr.bf16.gmra.mrb[0].mxu0 %v1672
        %v1864 = vpop.f32.mrb[0].mxu0
        %v1865 = vadd.f32 0.0, %v1864
        %v1866 = vpop.f32.mrb[0].mxu0
        %v1867 = vadd.f32 0.0, %v1866
        %v1868 = vpop.f32.mrb[0].mxu0
        %v1869 = vpop.f32.mrb[0].mxu0
        %1870 = vdwg.mxu0
        %v1871 = vadd.f32 %v1785, %v1824
        %v1872 = vadd.f32 %v1786, %v1826
        %v1873 = vadd.f32 %v1787, %v1865
        %v1874 = vadd.f32 %v1788, %v1867
        %v1875 = vxor.u32 %v1871, 2147483648
        %v1876 = vmul.f32 %v1875, 1.442695
        %v1877 = vpow.pop %v1876
        %v1878 = vadd.f32 %v1877, 1.0
        %v1879 = vrcp.pop %v1878
        %v1880 = vmul.f32 1.0, %v1879
        %v1881 = vxor.u32 %v1872, 2147483648
        %v1882 = vmul.f32 %v1881, 1.442695
        %v1883 = vpow.pop %v1882
        %v1884 = vadd.f32 %v1883, 1.0
        %v1885 = vrcp.pop %v1884
        %v1886 = vmul.f32 1.0, %v1885
        %v1887 = vtanh.pop %v1873
        %v1888 = vxor.u32 %v1874, 2147483648
        %v1889 = vmul.f32 %v1888, 1.442695
        %v1890 = vpow.pop %v1889
        %v1891 = vadd.f32 %v1890, 1.0
        %v1892 = vrcp.pop %v1891
        %v1893 = vmul.f32 1.0, %v1892
        %v1894 = vmul.f32 %v1886, %v1669
        %v1895 = vmul.f32 %v1880, %v1887
        %v1896 = vadd.f32 %v1894, %v1895
        %v1897 = vtanh.pop %v1896
        %v1898 = vmul.f32 %v1893, %v1897
        %v1899 = vpack.c.bf16 %v1898, %v1898
        %v1900 = vpack.c.bf16 %v1779, %v1779
        %1901 = vmatprep.subr.bf16.mxu0 %v1321
        %1902 = vmatpush1.bf16.msra.mxu0 %v1320
        %1903 = vmatprep.subr.bf16.mxu0 %v1325
        %1904 = vmatpush1.bf16.msra.mxu0 %v1324
        %1905 = vmatprep.subr.bf16.mxu0 %v1329
        %1906 = vmatpush1.bf16.msra.mxu0 %v1328
        %1907 = vmatprep.subr.bf16.mxu0 %v1333
        %1908 = vmatpush1.bf16.msra.mxu0 %v1332
        %1909 = vmatprep.subr.bf16.mxu0 %v1337
        %1910 = vmatpush1.bf16.msra.mxu0 %v1336
        %1911 = vmatprep.subr.bf16.mxu0 %v1341
        %1912 = vmatpush1.bf16.msra.mxu0 %v1340
        %1913 = vmatprep.subr.bf16.mxu0 %v1345
        %1914 = vmatpush1.bf16.msra.mxu0 %v1344
        %1915 = vmatprep.subr.bf16.mxu0 %v1349
        %1916 = vmatpush1.bf16.msra.mxu0 %v1348
        %1917 = vmatprep.subr.bf16.mxu0 %v1353
        %1918 = vmatpush1.bf16.msra.mxu0 %v1352
        %1919 = vmatprep.subr.bf16.mxu0 %v1357
        %1920 = vmatpush1.bf16.msra.mxu0 %v1356
        %1921 = vmatprep.subr.bf16.mxu0 %v1361
        %1922 = vmatpush1.bf16.msra.mxu0 %v1360
        %1923 = vmatprep.subr.bf16.mxu0 %v1365
        %1924 = vmatpush1.bf16.msra.mxu0 %v1364
        %1925 = vmatprep.subr.bf16.mxu0 %v1369
        %1926 = vmatpush1.bf16.msra.mxu0 %v1368
        %1927 = vmatprep.subr.bf16.mxu0 %v1373
        %1928 = vmatpush1.bf16.msra.mxu0 %v1372
        %1929 = vmatprep.subr.bf16.mxu0 %v1377
        %1930 = vmatpush1.bf16.msra.mxu0 %v1376
        %1931 = vmatprep.subr.bf16.mxu0 %v1381
        %1932 = vmatpush1.bf16.msra.mxu0 %v1380
        %1933 = vmatprep.mubr.bf16.mxu0 %v1900
        %1934 = vmatmul.mubr.bf16.gmra.mrb[0].mxu0 %v1899
        %v1935 = vpop.f32.mrb[0].mxu0
        %v1936 = vadd.f32 %v823, %v1935
        %v1937 = vpop.f32.mrb[0].mxu0
        %v1938 = vadd.f32 %v827, %v1937
        %v1939 = vpop.f32.mrb[0].mxu0
        %v1940 = vpop.f32.mrb[0].mxu0
        %1941 = vdwg.mxu0
        %1942 = vmatprep.subr.bf16.mxu0 %v1323
        %1943 = vmatpush1.bf16.msra.mxu0 %v1322
        %1944 = vmatprep.subr.bf16.mxu0 %v1327
        %1945 = vmatpush1.bf16.msra.mxu0 %v1326
        %1946 = vmatprep.subr.bf16.mxu0 %v1331
        %1947 = vmatpush1.bf16.msra.mxu0 %v1330
        %1948 = vmatprep.subr.bf16.mxu0 %v1335
        %1949 = vmatpush1.bf16.msra.mxu0 %v1334
        %1950 = vmatprep.subr.bf16.mxu0 %v1339
        %1951 = vmatpush1.bf16.msra.mxu0 %v1338
        %1952 = vmatprep.subr.bf16.mxu0 %v1343
        %1953 = vmatpush1.bf16.msra.mxu0 %v1342
        %1954 = vmatprep.subr.bf16.mxu0 %v1347
        %1955 = vmatpush1.bf16.msra.mxu0 %v1346
        %1956 = vmatprep.subr.bf16.mxu0 %v1351
        %1957 = vmatpush1.bf16.msra.mxu0 %v1350
        %1958 = vmatprep.subr.bf16.mxu0 %v1355
        %1959 = vmatpush1.bf16.msra.mxu0 %v1354
        %1960 = vmatprep.subr.bf16.mxu0 %v1359
        %1961 = vmatpush1.bf16.msra.mxu0 %v1358
        %1962 = vmatprep.subr.bf16.mxu0 %v1363
        %1963 = vmatpush1.bf16.msra.mxu0 %v1362
        %1964 = vmatprep.subr.bf16.mxu0 %v1367
        %1965 = vmatpush1.bf16.msra.mxu0 %v1366
        %1966 = vmatprep.subr.bf16.mxu0 %v1371
        %1967 = vmatpush1.bf16.msra.mxu0 %v1370
        %1968 = vmatprep.subr.bf16.mxu0 %v1375
        %1969 = vmatpush1.bf16.msra.mxu0 %v1374
        %1970 = vmatprep.subr.bf16.mxu0 %v1379
        %1971 = vmatpush1.bf16.msra.mxu0 %v1378
        %1972 = vmatprep.subr.bf16.mxu0 %v1383
        %1973 = vmatpush1.bf16.msra.mxu0 %v1382
        %1974 = vmatprep.mubr.bf16.mxu0 %v1900
        %1975 = vmatmul.mubr.bf16.gmra.mrb[0].mxu0 %v1899
        %v1976 = vpop.f32.mrb[0].mxu0
        %v1977 = vadd.f32 %v831, %v1976
        %v1978 = vpop.f32.mrb[0].mxu0
        %v1979 = vadd.f32 %v835, %v1978
        %v1980 = vpop.f32.mrb[0].mxu0
        %v1981 = vpop.f32.mrb[0].mxu0
        %1982 = vdwg.mxu0
        %v1983 = vxor.u32 %v1936, 2147483648
        %v1984 = vmul.f32 %v1983, 1.442695
        %v1985 = vpow.pop %v1984
        %v1986 = vadd.f32 %v1985, 1.0
        %v1987 = vrcp.pop %v1986
        %v1988 = vmul.f32 1.0, %v1987
        %v1989 = vxor.u32 %v1938, 2147483648
        %v1990 = vmul.f32 %v1989, 1.442695
        %v1991 = vpow.pop %v1990
        %v1992 = vadd.f32 %v1991, 1.0
        %v1993 = vrcp.pop %v1992
        %v1994 = vmul.f32 1.0, %v1993
        %v1995 = vtanh.pop %v1977
        %v1996 = vxor.u32 %v1979, 2147483648
        %v1997 = vmul.f32 %v1996, 1.442695
        %v1998 = vpow.pop %v1997
        %v1999 = vadd.f32 %v1998, 1.0
        %v2000 = vrcp.pop %v1999
        %v2001 = vmul.f32 1.0, %v2000
        %v2002 = vmul.f32 %v1994, %v1777
        %v2003 = vmul.f32 %v1988, %v1995
        %v2004 = vadd.f32 %v2002, %v2003
        %v2005 = vtanh.pop %v2004
        %v2006 = vmul.f32 %v2001, %v2005
        %s2007 = sadd.s32 %s845, 2
        %v2008 = vstv %s2007
        %vm2009 = vcmp.eq.s32.totalorder %v844, %v2008
        %v2010 = vsel %vm2009, %v2006, %v1783
        %s2011 = scalar_lea.vmem [#allocation2], 96
        %v2012 = vld [vmem:[%s2011] sm:$0xff]
        %v2013 = vld [vmem:[%s2011 + $0x8] sm:$0xff]
        %v2014 = vld [vmem:[%s2011 + $0x10] sm:$0xff]
        %v2015 = vld [vmem:[%s2011 + $0x18] sm:$0xff]
        %2016 = vmatprep.subr.bf16.mxu0 %v953
        %2017 = vmatpush1.bf16.msra.mxu0 %v952
        %2018 = vmatprep.subr.bf16.mxu0 %v957
        %2019 = vmatpush1.bf16.msra.mxu0 %v956
        %2020 = vmatprep.subr.bf16.mxu0 %v961
        %2021 = vmatpush1.bf16.msra.mxu0 %v960
        %2022 = vmatprep.subr.bf16.mxu0 %v965
        %2023 = vmatpush1.bf16.msra.mxu0 %v964
        %2024 = vmatprep.subr.bf16.mxu0 %v969
        %2025 = vmatpush1.bf16.msra.mxu0 %v968
        %2026 = vmatprep.subr.bf16.mxu0 %v973
        %2027 = vmatpush1.bf16.msra.mxu0 %v972
        %2028 = vmatprep.subr.bf16.mxu0 %v977
        %2029 = vmatpush1.bf16.msra.mxu0 %v976
        %2030 = vmatprep.subr.bf16.mxu0 %v981
        %2031 = vmatpush1.bf16.msra.mxu0 %v980
        %2032 = vmatprep.subr.bf16.mxu0 0
        %2033 = vmatpush1.bf16.msra.mxu0 0
        %2034 = vmatprep.subr.bf16.mxu0 0
        %2035 = vmatpush1.bf16.msra.mxu0 0
        %2036 = vmatprep.subr.bf16.mxu0 0
        %2037 = vmatpush1.bf16.msra.mxu0 0
        %2038 = vmatprep.subr.bf16.mxu0 0
        %2039 = vmatpush1.bf16.msra.mxu0 0
        %2040 = vmatprep.subr.bf16.mxu0 0
        %2041 = vmatpush1.bf16.msra.mxu0 0
        %2042 = vmatprep.subr.bf16.mxu0 0
        %2043 = vmatpush1.bf16.msra.mxu0 0
        %2044 = vmatprep.subr.bf16.mxu0 0
        %2045 = vmatpush1.bf16.msra.mxu0 0
        %2046 = vmatprep.subr.bf16.mxu0 0
        %2047 = vmatpush1.bf16.msra.mxu0 0
        %2048 = vmatprep.mubr.bf16.mxu0 0
        %2049 = vmatmul.mubr.bf16.gmra.mrb[0].mxu0 %v1899
        %v2050 = vpop.f32.mrb[0].mxu0
        %v2051 = vadd.f32 0.0, %v2050
        %v2052 = vpop.f32.mrb[0].mxu0
        %v2053 = vadd.f32 0.0, %v2052
        %v2054 = vpop.f32.mrb[0].mxu0
        %v2055 = vpop.f32.mrb[0].mxu0
        %2056 = vdwg.mxu0
        %2057 = vmatprep.subr.bf16.mxu0 %v955
        %2058 = vmatpush1.bf16.msra.mxu0 %v954
        %2059 = vmatprep.subr.bf16.mxu0 %v959
        %2060 = vmatpush1.bf16.msra.mxu0 %v958
        %2061 = vmatprep.subr.bf16.mxu0 %v963
        %2062 = vmatpush1.bf16.msra.mxu0 %v962
        %2063 = vmatprep.subr.bf16.mxu0 %v967
        %2064 = vmatpush1.bf16.msra.mxu0 %v966
        %2065 = vmatprep.subr.bf16.mxu0 %v971
        %2066 = vmatpush1.bf16.msra.mxu0 %v970
        %2067 = vmatprep.subr.bf16.mxu0 %v975
        %2068 = vmatpush1.bf16.msra.mxu0 %v974
        %2069 = vmatprep.subr.bf16.mxu0 %v979
        %2070 = vmatpush1.bf16.msra.mxu0 %v978
        %2071 = vmatprep.subr.bf16.mxu0 %v983
        %2072 = vmatpush1.bf16.msra.mxu0 %v982
        %2073 = vmatprep.subr.bf16.mxu0 0
        %2074 = vmatpush1.bf16.msra.mxu0 0
        %2075 = vmatprep.subr.bf16.mxu0 0
        %2076 = vmatpush1.bf16.msra.mxu0 0
        %2077 = vmatprep.subr.bf16.mxu0 0
        %2078 = vmatpush1.bf16.msra.mxu0 0
        %2079 = vmatprep.subr.bf16.mxu0 0
        %2080 = vmatpush1.bf16.msra.mxu0 0
        %2081 = vmatprep.subr.bf16.mxu0 0
        %2082 = vmatpush1.bf16.msra.mxu0 0
        %2083 = vmatprep.subr.bf16.mxu0 0
        %2084 = vmatpush1.bf16.msra.mxu0 0
        %2085 = vmatprep.subr.bf16.mxu0 0
        %2086 = vmatpush1.bf16.msra.mxu0 0
        %2087 = vmatprep.subr.bf16.mxu0 0
        %2088 = vmatpush1.bf16.msra.mxu0 0
        %2089 = vmatprep.mubr.bf16.mxu0 0
        %2090 = vmatmul.mubr.bf16.gmra.mrb[0].mxu0 %v1899
        %v2091 = vpop.f32.mrb[0].mxu0
        %v2092 = vadd.f32 0.0, %v2091
        %v2093 = vpop.f32.mrb[0].mxu0
        %v2094 = vadd.f32 0.0, %v2093
        %v2095 = vpop.f32.mrb[0].mxu0
        %v2096 = vpop.f32.mrb[0].mxu0
        %2097 = vdwg.mxu0
        %v2098 = vadd.f32 %v2012, %v2051
        %v2099 = vadd.f32 %v2013, %v2053
        %v2100 = vadd.f32 %v2014, %v2092
        %v2101 = vadd.f32 %v2015, %v2094
        %v2102 = vxor.u32 %v2098, 2147483648
        %v2103 = vmul.f32 %v2102, 1.442695
        %v2104 = vpow.pop %v2103
        %v2105 = vadd.f32 %v2104, 1.0
        %v2106 = vrcp.pop %v2105
        %v2107 = vmul.f32 1.0, %v2106
        %v2108 = vxor.u32 %v2099, 2147483648
        %v2109 = vmul.f32 %v2108, 1.442695
        %v2110 = vpow.pop %v2109
        %v2111 = vadd.f32 %v2110, 1.0
        %v2112 = vrcp.pop %v2111
        %v2113 = vmul.f32 1.0, %v2112
        %v2114 = vtanh.pop %v2100
        %v2115 = vxor.u32 %v2101, 2147483648
        %v2116 = vmul.f32 %v2115, 1.442695
        %v2117 = vpow.pop %v2116
        %v2118 = vadd.f32 %v2117, 1.0
        %v2119 = vrcp.pop %v2118
        %v2120 = vmul.f32 1.0, %v2119
        %v2121 = vmul.f32 %v2113, %v1896
        %v2122 = vmul.f32 %v2107, %v2114
        %v2123 = vadd.f32 %v2121, %v2122
        %v2124 = vtanh.pop %v2123
        %v2125 = vmul.f32 %v2120, %v2124
        %v2126 = vpack.c.bf16 %v2125, %v2125
        %v2127 = vpack.c.bf16 %v2006, %v2006
        %2128 = vmatprep.subr.bf16.mxu0 %v1321
        %2129 = vmatpush1.bf16.msra.mxu0 %v1320
        %2130 = vmatprep.subr.bf16.mxu0 %v1325
        %2131 = vmatpush1.bf16.msra.mxu0 %v1324
        %2132 = vmatprep.subr.bf16.mxu0 %v1329
        %2133 = vmatpush1.bf16.msra.mxu0 %v1328
        %2134 = vmatprep.subr.bf16.mxu0 %v1333
        %2135 = vmatpush1.bf16.msra.mxu0 %v1332
        %2136 = vmatprep.subr.bf16.mxu0 %v1337
        %2137 = vmatpush1.bf16.msra.mxu0 %v1336
        %2138 = vmatprep.subr.bf16.mxu0 %v1341
        %2139 = vmatpush1.bf16.msra.mxu0 %v1340
        %2140 = vmatprep.subr.bf16.mxu0 %v1345
        %2141 = vmatpush1.bf16.msra.mxu0 %v1344
        %2142 = vmatprep.subr.bf16.mxu0 %v1349
        %2143 = vmatpush1.bf16.msra.mxu0 %v1348
        %2144 = vmatprep.subr.bf16.mxu0 %v1353
        %2145 = vmatpush1.bf16.msra.mxu0 %v1352
        %2146 = vmatprep.subr.bf16.mxu0 %v1357
        %2147 = vmatpush1.bf16.msra.mxu0 %v1356
        %2148 = vmatprep.subr.bf16.mxu0 %v1361
        %2149 = vmatpush1.bf16.msra.mxu0 %v1360
        %2150 = vmatprep.subr.bf16.mxu0 %v1365
        %2151 = vmatpush1.bf16.msra.mxu0 %v1364
        %2152 = vmatprep.subr.bf16.mxu0 %v1369
        %2153 = vmatpush1.bf16.msra.mxu0 %v1368
        %2154 = vmatprep.subr.bf16.mxu0 %v1373
        %2155 = vmatpush1.bf16.msra.mxu0 %v1372
        %2156 = vmatprep.subr.bf16.mxu0 %v1377
        %2157 = vmatpush1.bf16.msra.mxu0 %v1376
        %2158 = vmatprep.subr.bf16.mxu0 %v1381
        %2159 = vmatpush1.bf16.msra.mxu0 %v1380
        %2160 = vmatprep.mubr.bf16.mxu0 %v2127
        %2161 = vmatmul.mubr.bf16.gmra.mrb[0].mxu0 %v2126
        %v2162 = vpop.f32.mrb[0].mxu0
        %v2163 = vadd.f32 %v823, %v2162
        %v2164 = vpop.f32.mrb[0].mxu0
        %v2165 = vadd.f32 %v827, %v2164
        %v2166 = vpop.f32.mrb[0].mxu0
        %v2167 = vpop.f32.mrb[0].mxu0
        %2168 = vdwg.mxu0
        %2169 = vmatprep.subr.bf16.mxu0 %v1323
        %2170 = vmatpush1.bf16.msra.mxu0 %v1322
        %2171 = vmatprep.subr.bf16.mxu0 %v1327
        %2172 = vmatpush1.bf16.msra.mxu0 %v1326
        %2173 = vmatprep.subr.bf16.mxu0 %v1331
        %2174 = vmatpush1.bf16.msra.mxu0 %v1330
        %2175 = vmatprep.subr.bf16.mxu0 %v1335
        %2176 = vmatpush1.bf16.msra.mxu0 %v1334
        %2177 = vmatprep.subr.bf16.mxu0 %v1339
        %2178 = vmatpush1.bf16.msra.mxu0 %v1338
        %2179 = vmatprep.subr.bf16.mxu0 %v1343
        %2180 = vmatpush1.bf16.msra.mxu0 %v1342
        %2181 = vmatprep.subr.bf16.mxu0 %v1347
        %2182 = vmatpush1.bf16.msra.mxu0 %v1346
        %2183 = vmatprep.subr.bf16.mxu0 %v1351
        %2184 = vmatpush1.bf16.msra.mxu0 %v1350
        %2185 = vmatprep.subr.bf16.mxu0 %v1355
        %2186 = vmatpush1.bf16.msra.mxu0 %v1354
        %2187 = vmatprep.subr.bf16.mxu0 %v1359
        %2188 = vmatpush1.bf16.msra.mxu0 %v1358
        %2189 = vmatprep.subr.bf16.mxu0 %v1363
        %2190 = vmatpush1.bf16.msra.mxu0 %v1362
        %2191 = vmatprep.subr.bf16.mxu0 %v1367
        %2192 = vmatpush1.bf16.msra.mxu0 %v1366
        %2193 = vmatprep.subr.bf16.mxu0 %v1371
        %2194 = vmatpush1.bf16.msra.mxu0 %v1370
        %2195 = vmatprep.subr.bf16.mxu0 %v1375
        %2196 = vmatpush1.bf16.msra.mxu0 %v1374
        %2197 = vmatprep.subr.bf16.mxu0 %v1379
        %2198 = vmatpush1.bf16.msra.mxu0 %v1378
        %2199 = vmatprep.subr.bf16.mxu0 %v1383
        %2200 = vmatpush1.bf16.msra.mxu0 %v1382
        %2201 = vmatprep.mubr.bf16.mxu0 %v2127
        %2202 = vmatmul.mubr.bf16.gmra.mrb[0].mxu0 %v2126
        %v2203 = vpop.f32.mrb[0].mxu0
        %v2204 = vadd.f32 %v831, %v2203
        %v2205 = vpop.f32.mrb[0].mxu0
        %v2206 = vadd.f32 %v835, %v2205
        %v2207 = vpop.f32.mrb[0].mxu0
        %v2208 = vpop.f32.mrb[0].mxu0
        %2209 = vdwg.mxu0
        %v2210 = vxor.u32 %v2163, 2147483648
        %v2211 = vmul.f32 %v2210, 1.442695
        %v2212 = vpow.pop %v2211
        %v2213 = vadd.f32 %v2212, 1.0
        %v2214 = vrcp.pop %v2213
        %v2215 = vmul.f32 1.0, %v2214
        %v2216 = vxor.u32 %v2165, 2147483648
        %v2217 = vmul.f32 %v2216, 1.442695
        %v2218 = vpow.pop %v2217
        %v2219 = vadd.f32 %v2218, 1.0
        %v2220 = vrcp.pop %v2219
        %v2221 = vmul.f32 1.0, %v2220
        %v2222 = vtanh.pop %v2204
        %v2223 = vxor.u32 %v2206, 2147483648
        %v2224 = vmul.f32 %v2223, 1.442695
        %v2225 = vpow.pop %v2224
        %v2226 = vadd.f32 %v2225, 1.0
        %v2227 = vrcp.pop %v2226
        %v2228 = vmul.f32 1.0, %v2227
        %v2229 = vmul.f32 %v2221, %v2004
        %v2230 = vmul.f32 %v2215, %v2222
        %v2231 = vadd.f32 %v2229, %v2230
        %v2232 = vtanh.pop %v2231
        %v2233 = vmul.f32 %v2228, %v2232
        %s2234 = sadd.s32 %s845, 3
        %v2235 = vstv %s2234
        %vm2236 = vcmp.eq.s32.totalorder %v844, %v2235
        %v2237 = vsel %vm2236, %v2233, %v2010
        %s2238 = scalar_lea.vmem [#allocation2], 128
        %v2239 = vld [vmem:[%s2238] sm:$0xff]
        %v2240 = vld [vmem:[%s2238 + $0x8] sm:$0xff]
        %v2241 = vld [vmem:[%s2238 + $0x10] sm:$0xff]
        %v2242 = vld [vmem:[%s2238 + $0x18] sm:$0xff]
        %2243 = vmatprep.subr.bf16.mxu0 %v953
        %2244 = vmatpush1.bf16.msra.mxu0 %v952
        %2245 = vmatprep.subr.bf16.mxu0 %v957
        %2246 = vmatpush1.bf16.msra.mxu0 %v956
        %2247 = vmatprep.subr.bf16.mxu0 %v961
        %2248 = vmatpush1.bf16.msra.mxu0 %v960
        %2249 = vmatprep.subr.bf16.mxu0 %v965
        %2250 = vmatpush1.bf16.msra.mxu0 %v964
        %2251 = vmatprep.subr.bf16.mxu0 %v969
        %2252 = vmatpush1.bf16.msra.mxu0 %v968
        %2253 = vmatprep.subr.bf16.mxu0 %v973
        %2254 = vmatpush1.bf16.msra.mxu0 %v972
        %2255 = vmatprep.subr.bf16.mxu0 %v977
        %2256 = vmatpush1.bf16.msra.mxu0 %v976
        %2257 = vmatprep.subr.bf16.mxu0 %v981
        %2258 = vmatpush1.bf16.msra.mxu0 %v980
        %2259 = vmatprep.subr.bf16.mxu0 0
        %2260 = vmatpush1.bf16.msra.mxu0 0
        %2261 = vmatprep.subr.bf16.mxu0 0
        %2262 = vmatpush1.bf16.msra.mxu0 0
        %2263 = vmatprep.subr.bf16.mxu0 0
        %2264 = vmatpush1.bf16.msra.mxu0 0
        %2265 = vmatprep.subr.bf16.mxu0 0
        %2266 = vmatpush1.bf16.msra.mxu0 0
        %2267 = vmatprep.subr.bf16.mxu0 0
        %2268 = vmatpush1.bf16.msra.mxu0 0
        %2269 = vmatprep.subr.bf16.mxu0 0
        %2270 = vmatpush1.bf16.msra.mxu0 0
        %2271 = vmatprep.subr.bf16.mxu0 0
        %2272 = vmatpush1.bf16.msra.mxu0 0
        %2273 = vmatprep.subr.bf16.mxu0 0
        %2274 = vmatpush1.bf16.msra.mxu0 0
        %2275 = vmatprep.mubr.bf16.mxu0 0
        %2276 = vmatmul.mubr.bf16.gmra.mrb[0].mxu0 %v2126
        %v2277 = vpop.f32.mrb[0].mxu0
        %v2278 = vadd.f32 0.0, %v2277
        %v2279 = vpop.f32.mrb[0].mxu0
        %v2280 = vadd.f32 0.0, %v2279
        %v2281 = vpop.f32.mrb[0].mxu0
        %v2282 = vpop.f32.mrb[0].mxu0
        %2283 = vdwg.mxu0
        %2284 = vmatprep.subr.bf16.mxu0 %v955
        %2285 = vmatpush1.bf16.msra.mxu0 %v954
        %2286 = vmatprep.subr.bf16.mxu0 %v959
        %2287 = vmatpush1.bf16.msra.mxu0 %v958
        %2288 = vmatprep.subr.bf16.mxu0 %v963
        %2289 = vmatpush1.bf16.msra.mxu0 %v962
        %2290 = vmatprep.subr.bf16.mxu0 %v967
        %2291 = vmatpush1.bf16.msra.mxu0 %v966
        %2292 = vmatprep.subr.bf16.mxu0 %v971
        %2293 = vmatpush1.bf16.msra.mxu0 %v970
        %2294 = vmatprep.subr.bf16.mxu0 %v975
        %2295 = vmatpush1.bf16.msra.mxu0 %v974
        %2296 = vmatprep.subr.bf16.mxu0 %v979
        %2297 = vmatpush1.bf16.msra.mxu0 %v978
        %2298 = vmatprep.subr.bf16.mxu0 %v983
        %2299 = vmatpush1.bf16.msra.mxu0 %v982
        %2300 = vmatprep.subr.bf16.mxu0 0
        %2301 = vmatpush1.bf16.msra.mxu0 0
        %2302 = vmatprep.subr.bf16.mxu0 0
        %2303 = vmatpush1.bf16.msra.mxu0 0
        %2304 = vmatprep.subr.bf16.mxu0 0
        %2305 = vmatpush1.bf16.msra.mxu0 0
        %2306 = vmatprep.subr.bf16.mxu0 0
        %2307 = vmatpush1.bf16.msra.mxu0 0
        %2308 = vmatprep.subr.bf16.mxu0 0
        %2309 = vmatpush1.bf16.msra.mxu0 0
        %2310 = vmatprep.subr.bf16.mxu0 0
        %2311 = vmatpush1.bf16.msra.mxu0 0
        %2312 = vmatprep.subr.bf16.mxu0 0
        %2313 = vmatpush1.bf16.msra.mxu0 0
        %2314 = vmatprep.subr.bf16.mxu0 0
        %2315 = vmatpush1.bf16.msra.mxu0 0
        %2316 = vmatprep.mubr.bf16.mxu0 0
        %2317 = vmatmul.mubr.bf16.gmra.mrb[0].mxu0 %v2126
        %v2318 = vpop.f32.mrb[0].mxu0
        %v2319 = vadd.f32 0.0, %v2318
        %v2320 = vpop.f32.mrb[0].mxu0
        %v2321 = vadd.f32 0.0, %v2320
        %v2322 = vpop.f32.mrb[0].mxu0
        %v2323 = vpop.f32.mrb[0].mxu0
        %2324 = vdwg.mxu0
        %v2325 = vadd.f32 %v2239, %v2278
        %v2326 = vadd.f32 %v2240, %v2280
        %v2327 = vadd.f32 %v2241, %v2319
        %v2328 = vadd.f32 %v2242, %v2321
        %v2329 = vxor.u32 %v2325, 2147483648
        %v2330 = vmul.f32 %v2329, 1.442695
        %v2331 = vpow.pop %v2330
        %v2332 = vadd.f32 %v2331, 1.0
        %v2333 = vrcp.pop %v2332
        %v2334 = vmul.f32 1.0, %v2333
        %v2335 = vxor.u32 %v2326, 2147483648
        %v2336 = vmul.f32 %v2335, 1.442695
        %v2337 = vpow.pop %v2336
        %v2338 = vadd.f32 %v2337, 1.0
        %v2339 = vrcp.pop %v2338
        %v2340 = vmul.f32 1.0, %v2339
        %v2341 = vtanh.pop %v2327
        %v2342 = vxor.u32 %v2328, 2147483648
        %v2343 = vmul.f32 %v2342, 1.442695
        %v2344 = vpow.pop %v2343
        %v2345 = vadd.f32 %v2344, 1.0
        %v2346 = vrcp.pop %v2345
        %v2347 = vmul.f32 1.0, %v2346
        %v2348 = vmul.f32 %v2340, %v2123
        %v2349 = vmul.f32 %v2334, %v2341
        %v2350 = vadd.f32 %v2348, %v2349
        %v2351 = vtanh.pop %v2350
        %v2352 = vmul.f32 %v2347, %v2351
        %v2353 = vpack.c.bf16 %v2352, %v2352
        %v2354 = vpack.c.bf16 %v2233, %v2233
        %2355 = vmatprep.subr.bf16.mxu0 %v1321
        %2356 = vmatpush1.bf16.msra.mxu0 %v1320
        %2357 = vmatprep.subr.bf16.mxu0 %v1325
        %2358 = vmatpush1.bf16.msra.mxu0 %v1324
        %2359 = vmatprep.subr.bf16.mxu0 %v1329
        %2360 = vmatpush1.bf16.msra.mxu0 %v1328
        %2361 = vmatprep.subr.bf16.mxu0 %v1333
        %2362 = vmatpush1.bf16.msra.mxu0 %v1332
        %2363 = vmatprep.subr.bf16.mxu0 %v1337
        %2364 = vmatpush1.bf16.msra.mxu0 %v1336
        %2365 = vmatprep.subr.bf16.mxu0 %v1341
        %2366 = vmatpush1.bf16.msra.mxu0 %v1340
        %2367 = vmatprep.subr.bf16.mxu0 %v1345
        %2368 = vmatpush1.bf16.msra.mxu0 %v1344
        %2369 = vmatprep.subr.bf16.mxu0 %v1349
        %2370 = vmatpush1.bf16.msra.mxu0 %v1348
        %2371 = vmatprep.subr.bf16.mxu0 %v1353
        %2372 = vmatpush1.bf16.msra.mxu0 %v1352
        %2373 = vmatprep.subr.bf16.mxu0 %v1357
        %2374 = vmatpush1.bf16.msra.mxu0 %v1356
        %2375 = vmatprep.subr.bf16.mxu0 %v1361
        %2376 = vmatpush1.bf16.msra.mxu0 %v1360
        %2377 = vmatprep.subr.bf16.mxu0 %v1365
        %2378 = vmatpush1.bf16.msra.mxu0 %v1364
        %2379 = vmatprep.subr.bf16.mxu0 %v1369
        %2380 = vmatpush1.bf16.msra.mxu0 %v1368
        %2381 = vmatprep.subr.bf16.mxu0 %v1373
        %2382 = vmatpush1.bf16.msra.mxu0 %v1372
        %2383 = vmatprep.subr.bf16.mxu0 %v1377
        %2384 = vmatpush1.bf16.msra.mxu0 %v1376
        %2385 = vmatprep.subr.bf16.mxu0 %v1381
        %2386 = vmatpush1.bf16.msra.mxu0 %v1380
        %2387 = vmatprep.mubr.bf16.mxu0 %v2354
        %2388 = vmatmul.mubr.bf16.gmra.mrb[0].mxu0 %v2353
        %v2389 = vpop.f32.mrb[0].mxu0
        %v2390 = vadd.f32 %v823, %v2389
        %v2391 = vpop.f32.mrb[0].mxu0
        %v2392 = vadd.f32 %v827, %v2391
        %v2393 = vpop.f32.mrb[0].mxu0
        %v2394 = vpop.f32.mrb[0].mxu0
        %2395 = vdwg.mxu0
        %2396 = vmatprep.subr.bf16.mxu0 %v1323
        %2397 = vmatpush1.bf16.msra.mxu0 %v1322
        %2398 = vmatprep.subr.bf16.mxu0 %v1327
        %2399 = vmatpush1.bf16.msra.mxu0 %v1326
        %2400 = vmatprep.subr.bf16.mxu0 %v1331
        %2401 = vmatpush1.bf16.msra.mxu0 %v1330
        %2402 = vmatprep.subr.bf16.mxu0 %v1335
        %2403 = vmatpush1.bf16.msra.mxu0 %v1334
        %2404 = vmatprep.subr.bf16.mxu0 %v1339
        %2405 = vmatpush1.bf16.msra.mxu0 %v1338
        %2406 = vmatprep.subr.bf16.mxu0 %v1343
        %2407 = vmatpush1.bf16.msra.mxu0 %v1342
        %2408 = vmatprep.subr.bf16.mxu0 %v1347
        %2409 = vmatpush1.bf16.msra.mxu0 %v1346
        %2410 = vmatprep.subr.bf16.mxu0 %v1351
        %2411 = vmatpush1.bf16.msra.mxu0 %v1350
        %2412 = vmatprep.subr.bf16.mxu0 %v1355
        %2413 = vmatpush1.bf16.msra.mxu0 %v1354
        %2414 = vmatprep.subr.bf16.mxu0 %v1359
        %2415 = vmatpush1.bf16.msra.mxu0 %v1358
        %2416 = vmatprep.subr.bf16.mxu0 %v1363
        %2417 = vmatpush1.bf16.msra.mxu0 %v1362
        %2418 = vmatprep.subr.bf16.mxu0 %v1367
        %2419 = vmatpush1.bf16.msra.mxu0 %v1366
        %2420 = vmatprep.subr.bf16.mxu0 %v1371
        %2421 = vmatpush1.bf16.msra.mxu0 %v1370
        %2422 = vmatprep.subr.bf16.mxu0 %v1375
        %2423 = vmatpush1.bf16.msra.mxu0 %v1374
        %2424 = vmatprep.subr.bf16.mxu0 %v1379
        %2425 = vmatpush1.bf16.msra.mxu0 %v1378
        %2426 = vmatprep.subr.bf16.mxu0 %v1383
        %2427 = vmatpush1.bf16.msra.mxu0 %v1382
        %2428 = vmatprep.mubr.bf16.mxu0 %v2354
        %2429 = vmatmul.mubr.bf16.gmra.mrb[0].mxu0 %v2353
        %v2430 = vpop.f32.mrb[0].mxu0
        %v2431 = vadd.f32 %v831, %v2430
        %v2432 = vpop.f32.mrb[0].mxu0
        %v2433 = vadd.f32 %v835, %v2432
        %v2434 = vpop.f32.mrb[0].mxu0
        %v2435 = vpop.f32.mrb[0].mxu0
        %2436 = vdwg.mxu0
        %v2437 = vxor.u32 %v2390, 2147483648
        %v2438 = vmul.f32 %v2437, 1.442695
        %v2439 = vpow.pop %v2438
        %v2440 = vadd.f32 %v2439, 1.0
        %v2441 = vrcp.pop %v2440
        %v2442 = vmul.f32 1.0, %v2441
        %v2443 = vxor.u32 %v2392, 2147483648
        %v2444 = vmul.f32 %v2443, 1.442695
        %v2445 = vpow.pop %v2444
        %v2446 = vadd.f32 %v2445, 1.0
        %v2447 = vrcp.pop %v2446
        %v2448 = vmul.f32 1.0, %v2447
        %v2449 = vtanh.pop %v2431
        %v2450 = vxor.u32 %v2433, 2147483648
        %v2451 = vmul.f32 %v2450, 1.442695
        %v2452 = vpow.pop %v2451
        %v2453 = vadd.f32 %v2452, 1.0
        %v2454 = vrcp.pop %v2453
        %v2455 = vmul.f32 1.0, %v2454
        %v2456 = vmul.f32 %v2448, %v2231
        %v2457 = vmul.f32 %v2442, %v2449
        %v2458 = vadd.f32 %v2456, %v2457
        %v2459 = vtanh.pop %v2458
        %v2460 = vmul.f32 %v2455, %v2459
        %s2461 = sadd.s32 %s845, 4
        %v2462 = vstv %s2461
        %vm2463 = vcmp.eq.s32.totalorder %v844, %v2462
        %v2464 = vsel %vm2463, %v2460, %v2237
        %s2465 = scalar_lea.vmem [#allocation2], 160
        %v2466 = vld [vmem:[%s2465] sm:$0xff]
        %v2467 = vld [vmem:[%s2465 + $0x8] sm:$0xff]
        %v2468 = vld [vmem:[%s2465 + $0x10] sm:$0xff]
        %v2469 = vld [vmem:[%s2465 + $0x18] sm:$0xff]
        %2470 = vmatprep.subr.bf16.mxu0 %v953
        %2471 = vmatpush1.bf16.msra.mxu0 %v952
        %2472 = vmatprep.subr.bf16.mxu0 %v957
        %2473 = vmatpush1.bf16.msra.mxu0 %v956
        %2474 = vmatprep.subr.bf16.mxu0 %v961
        %2475 = vmatpush1.bf16.msra.mxu0 %v960
        %2476 = vmatprep.subr.bf16.mxu0 %v965
        %2477 = vmatpush1.bf16.msra.mxu0 %v964
        %2478 = vmatprep.subr.bf16.mxu0 %v969
        %2479 = vmatpush1.bf16.msra.mxu0 %v968
        %2480 = vmatprep.subr.bf16.mxu0 %v973
        %2481 = vmatpush1.bf16.msra.mxu0 %v972
        %2482 = vmatprep.subr.bf16.mxu0 %v977
        %2483 = vmatpush1.bf16.msra.mxu0 %v976
        %2484 = vmatprep.subr.bf16.mxu0 %v981
        %2485 = vmatpush1.bf16.msra.mxu0 %v980
        %2486 = vmatprep.subr.bf16.mxu0 0
        %2487 = vmatpush1.bf16.msra.mxu0 0
        %2488 = vmatprep.subr.bf16.mxu0 0
        %2489 = vmatpush1.bf16.msra.mxu0 0
        %2490 = vmatprep.subr.bf16.mxu0 0
        %2491 = vmatpush1.bf16.msra.mxu0 0
        %2492 = vmatprep.subr.bf16.mxu0 0
        %2493 = vmatpush1.bf16.msra.mxu0 0
        %2494 = vmatprep.subr.bf16.mxu0 0
        %2495 = vmatpush1.bf16.msra.mxu0 0
        %2496 = vmatprep.subr.bf16.mxu0 0
        %2497 = vmatpush1.bf16.msra.mxu0 0
        %2498 = vmatprep.subr.bf16.mxu0 0
        %2499 = vmatpush1.bf16.msra.mxu0 0
        %2500 = vmatprep.subr.bf16.mxu0 0
        %2501 = vmatpush1.bf16.msra.mxu0 0
        %2502 = vmatprep.mubr.bf16.mxu0 0
        %2503 = vmatmul.mubr.bf16.gmra.mrb[0].mxu0 %v2353
        %v2504 = vpop.f32.mrb[0].mxu0
        %v2505 = vadd.f32 0.0, %v2504
        %v2506 = vpop.f32.mrb[0].mxu0
        %v2507 = vadd.f32 0.0, %v2506
        %v2508 = vpop.f32.mrb[0].mxu0
        %v2509 = vpop.f32.mrb[0].mxu0
        %2510 = vdwg.mxu0
        %2511 = vmatprep.subr.bf16.mxu0 %v955
        %2512 = vmatpush1.bf16.msra.mxu0 %v954
        %2513 = vmatprep.subr.bf16.mxu0 %v959
        %2514 = vmatpush1.bf16.msra.mxu0 %v958
        %2515 = vmatprep.subr.bf16.mxu0 %v963
        %2516 = vmatpush1.bf16.msra.mxu0 %v962
        %2517 = vmatprep.subr.bf16.mxu0 %v967
        %2518 = vmatpush1.bf16.msra.mxu0 %v966
        %2519 = vmatprep.subr.bf16.mxu0 %v971
        %2520 = vmatpush1.bf16.msra.mxu0 %v970
        %2521 = vmatprep.subr.bf16.mxu0 %v975
        %2522 = vmatpush1.bf16.msra.mxu0 %v974
        %2523 = vmatprep.subr.bf16.mxu0 %v979
        %2524 = vmatpush1.bf16.msra.mxu0 %v978
        %2525 = vmatprep.subr.bf16.mxu0 %v983
        %2526 = vmatpush1.bf16.msra.mxu0 %v982
        %2527 = vmatprep.subr.bf16.mxu0 0
        %2528 = vmatpush1.bf16.msra.mxu0 0
        %2529 = vmatprep.subr.bf16.mxu0 0
        %2530 = vmatpush1.bf16.msra.mxu0 0
        %2531 = vmatprep.subr.bf16.mxu0 0
        %2532 = vmatpush1.bf16.msra.mxu0 0
        %2533 = vmatprep.subr.bf16.mxu0 0
        %2534 = vmatpush1.bf16.msra.mxu0 0
        %2535 = vmatprep.subr.bf16.mxu0 0
        %2536 = vmatpush1.bf16.msra.mxu0 0
        %2537 = vmatprep.subr.bf16.mxu0 0
        %2538 = vmatpush1.bf16.msra.mxu0 0
        %2539 = vmatprep.subr.bf16.mxu0 0
        %2540 = vmatpush1.bf16.msra.mxu0 0
        %2541 = vmatprep.subr.bf16.mxu0 0
        %2542 = vmatpush1.bf16.msra.mxu0 0
        %2543 = vmatprep.mubr.bf16.mxu0 0
        %2544 = vmatmul.mubr.bf16.gmra.mrb[0].mxu0 %v2353
        %v2545 = vpop.f32.mrb[0].mxu0
        %v2546 = vadd.f32 0.0, %v2545
        %v2547 = vpop.f32.mrb[0].mxu0
        %v2548 = vadd.f32 0.0, %v2547
        %v2549 = vpop.f32.mrb[0].mxu0
        %v2550 = vpop.f32.mrb[0].mxu0
        %2551 = vdwg.mxu0
        %v2552 = vadd.f32 %v2466, %v2505
        %v2553 = vadd.f32 %v2467, %v2507
        %v2554 = vadd.f32 %v2468, %v2546
        %v2555 = vadd.f32 %v2469, %v2548
        %v2556 = vxor.u32 %v2552, 2147483648
        %v2557 = vmul.f32 %v2556, 1.442695
        %v2558 = vpow.pop %v2557
        %v2559 = vadd.f32 %v2558, 1.0
        %v2560 = vrcp.pop %v2559
        %v2561 = vmul.f32 1.0, %v2560
        %v2562 = vxor.u32 %v2553, 2147483648
        %v2563 = vmul.f32 %v2562, 1.442695
        %v2564 = vpow.pop %v2563
        %v2565 = vadd.f32 %v2564, 1.0
        %v2566 = vrcp.pop %v2565
        %v2567 = vmul.f32 1.0, %v2566
        %v2568 = vtanh.pop %v2554
        %v2569 = vxor.u32 %v2555, 2147483648
        %v2570 = vmul.f32 %v2569, 1.442695
        %v2571 = vpow.pop %v2570
        %v2572 = vadd.f32 %v2571, 1.0
        %v2573 = vrcp.pop %v2572
        %v2574 = vmul.f32 1.0, %v2573
        %v2575 = vmul.f32 %v2567, %v2350
        %v2576 = vmul.f32 %v2561, %v2568
        %v2577 = vadd.f32 %v2575, %v2576
        %v2578 = vtanh.pop %v2577
        %v2579 = vmul.f32 %v2574, %v2578
        %v2580 = vpack.c.bf16 %v2579, %v2579
        %v2581 = vpack.c.bf16 %v2460, %v2460
        %2582 = vmatprep.subr.bf16.mxu0 %v1321
        %2583 = vmatpush1.bf16.msra.mxu0 %v1320
        %2584 = vmatprep.subr.bf16.mxu0 %v1325
        %2585 = vmatpush1.bf16.msra.mxu0 %v1324
        %2586 = vmatprep.subr.bf16.mxu0 %v1329
        %2587 = vmatpush1.bf16.msra.mxu0 %v1328
        %2588 = vmatprep.subr.bf16.mxu0 %v1333
        %2589 = vmatpush1.bf16.msra.mxu0 %v1332
        %2590 = vmatprep.subr.bf16.mxu0 %v1337
        %2591 = vmatpush1.bf16.msra.mxu0 %v1336
        %2592 = vmatprep.subr.bf16.mxu0 %v1341
        %2593 = vmatpush1.bf16.msra.mxu0 %v1340
        %2594 = vmatprep.subr.bf16.mxu0 %v1345
        %2595 = vmatpush1.bf16.msra.mxu0 %v1344
        %2596 = vmatprep.subr.bf16.mxu0 %v1349
        %2597 = vmatpush1.bf16.msra.mxu0 %v1348
        %2598 = vmatprep.subr.bf16.mxu0 %v1353
        %2599 = vmatpush1.bf16.msra.mxu0 %v1352
        %2600 = vmatprep.subr.bf16.mxu0 %v1357
        %2601 = vmatpush1.bf16.msra.mxu0 %v1356
        %2602 = vmatprep.subr.bf16.mxu0 %v1361
        %2603 = vmatpush1.bf16.msra.mxu0 %v1360
        %2604 = vmatprep.subr.bf16.mxu0 %v1365
        %2605 = vmatpush1.bf16.msra.mxu0 %v1364
        %2606 = vmatprep.subr.bf16.mxu0 %v1369
        %2607 = vmatpush1.bf16.msra.mxu0 %v1368
        %2608 = vmatprep.subr.bf16.mxu0 %v1373
        %2609 = vmatpush1.bf16.msra.mxu0 %v1372
        %2610 = vmatprep.subr.bf16.mxu0 %v1377
        %2611 = vmatpush1.bf16.msra.mxu0 %v1376
        %2612 = vmatprep.subr.bf16.mxu0 %v1381
        %2613 = vmatpush1.bf16.msra.mxu0 %v1380
        %2614 = vmatprep.mubr.bf16.mxu0 %v2581
        %2615 = vmatmul.mubr.bf16.gmra.mrb[0].mxu0 %v2580
        %v2616 = vpop.f32.mrb[0].mxu0
        %v2617 = vadd.f32 %v823, %v2616
        %v2618 = vpop.f32.mrb[0].mxu0
        %v2619 = vadd.f32 %v827, %v2618
        %v2620 = vpop.f32.mrb[0].mxu0
        %v2621 = vpop.f32.mrb[0].mxu0
        %2622 = vdwg.mxu0
        %2623 = vmatprep.subr.bf16.mxu0 %v1323
        %2624 = vmatpush1.bf16.msra.mxu0 %v1322
        %2625 = vmatprep.subr.bf16.mxu0 %v1327
        %2626 = vmatpush1.bf16.msra.mxu0 %v1326
        %2627 = vmatprep.subr.bf16.mxu0 %v1331
        %2628 = vmatpush1.bf16.msra.mxu0 %v1330
        %2629 = vmatprep.subr.bf16.mxu0 %v1335
        %2630 = vmatpush1.bf16.msra.mxu0 %v1334
        %2631 = vmatprep.subr.bf16.mxu0 %v1339
        %2632 = vmatpush1.bf16.msra.mxu0 %v1338
        %2633 = vmatprep.subr.bf16.mxu0 %v1343
        %2634 = vmatpush1.bf16.msra.mxu0 %v1342
        %2635 = vmatprep.subr.bf16.mxu0 %v1347
        %2636 = vmatpush1.bf16.msra.mxu0 %v1346
        %2637 = vmatprep.subr.bf16.mxu0 %v1351
        %2638 = vmatpush1.bf16.msra.mxu0 %v1350
        %2639 = vmatprep.subr.bf16.mxu0 %v1355
        %2640 = vmatpush1.bf16.msra.mxu0 %v1354
        %2641 = vmatprep.subr.bf16.mxu0 %v1359
        %2642 = vmatpush1.bf16.msra.mxu0 %v1358
        %2643 = vmatprep.subr.bf16.mxu0 %v1363
        %2644 = vmatpush1.bf16.msra.mxu0 %v1362
        %2645 = vmatprep.subr.bf16.mxu0 %v1367
        %2646 = vmatpush1.bf16.msra.mxu0 %v1366
        %2647 = vmatprep.subr.bf16.mxu0 %v1371
        %2648 = vmatpush1.bf16.msra.mxu0 %v1370
        %2649 = vmatprep.subr.bf16.mxu0 %v1375
        %2650 = vmatpush1.bf16.msra.mxu0 %v1374
        %2651 = vmatprep.subr.bf16.mxu0 %v1379
        %2652 = vmatpush1.bf16.msra.mxu0 %v1378
        %2653 = vmatprep.subr.bf16.mxu0 %v1383
        %2654 = vmatpush1.bf16.msra.mxu0 %v1382
        %2655 = vmatprep.mubr.bf16.mxu0 %v2581
        %2656 = vmatmul.mubr.bf16.gmra.mrb[0].mxu0 %v2580
        %v2657 = vpop.f32.mrb[0].mxu0
        %v2658 = vadd.f32 %v831, %v2657
        %v2659 = vpop.f32.mrb[0].mxu0
        %v2660 = vadd.f32 %v835, %v2659
        %v2661 = vpop.f32.mrb[0].mxu0
        %v2662 = vpop.f32.mrb[0].mxu0
        %2663 = vdwg.mxu0
        %v2664 = vxor.u32 %v2617, 2147483648
        %v2665 = vmul.f32 %v2664, 1.442695
        %v2666 = vpow.pop %v2665
        %v2667 = vadd.f32 %v2666, 1.0
        %v2668 = vrcp.pop %v2667
        %v2669 = vmul.f32 1.0, %v2668
        %v2670 = vxor.u32 %v2619, 2147483648
        %v2671 = vmul.f32 %v2670, 1.442695
        %v2672 = vpow.pop %v2671
        %v2673 = vadd.f32 %v2672, 1.0
        %v2674 = vrcp.pop %v2673
        %v2675 = vmul.f32 1.0, %v2674
        %v2676 = vtanh.pop %v2658
        %v2677 = vxor.u32 %v2660, 2147483648
        %v2678 = vmul.f32 %v2677, 1.442695
        %v2679 = vpow.pop %v2678
        %v2680 = vadd.f32 %v2679, 1.0
        %v2681 = vrcp.pop %v2680
        %v2682 = vmul.f32 1.0, %v2681
        %v2683 = vmul.f32 %v2675, %v2458
        %v2684 = vmul.f32 %v2669, %v2676
        %v2685 = vadd.f32 %v2683, %v2684
        %v2686 = vtanh.pop %v2685
        %v2687 = vmul.f32 %v2682, %v2686
        %s2688 = sadd.s32 %s845, 5
        %v2689 = vstv %s2688
        %vm2690 = vcmp.eq.s32.totalorder %v844, %v2689
        %v2691 = vsel %vm2690, %v2687, %v2464
        %s2692 = scalar_lea.vmem [#allocation2], 192
        %v2693 = vld [vmem:[%s2692] sm:$0xff]
        %v2694 = vld [vmem:[%s2692 + $0x8] sm:$0xff]
        %v2695 = vld [vmem:[%s2692 + $0x10] sm:$0xff]
        %v2696 = vld [vmem:[%s2692 + $0x18] sm:$0xff]
        %2697 = vmatprep.subr.bf16.mxu0 %v953
        %2698 = vmatpush1.bf16.msra.mxu0 %v952
        %2699 = vmatprep.subr.bf16.mxu0 %v957
        %2700 = vmatpush1.bf16.msra.mxu0 %v956
        %2701 = vmatprep.subr.bf16.mxu0 %v961
        %2702 = vmatpush1.bf16.msra.mxu0 %v960
        %2703 = vmatprep.subr.bf16.mxu0 %v965
        %2704 = vmatpush1.bf16.msra.mxu0 %v964
        %2705 = vmatprep.subr.bf16.mxu0 %v969
        %2706 = vmatpush1.bf16.msra.mxu0 %v968
        %2707 = vmatprep.subr.bf16.mxu0 %v973
        %2708 = vmatpush1.bf16.msra.mxu0 %v972
        %2709 = vmatprep.subr.bf16.mxu0 %v977
        %2710 = vmatpush1.bf16.msra.mxu0 %v976
        %2711 = vmatprep.subr.bf16.mxu0 %v981
        %2712 = vmatpush1.bf16.msra.mxu0 %v980
        %2713 = vmatprep.subr.bf16.mxu0 0
        %2714 = vmatpush1.bf16.msra.mxu0 0
        %2715 = vmatprep.subr.bf16.mxu0 0
        %2716 = vmatpush1.bf16.msra.mxu0 0
        %2717 = vmatprep.subr.bf16.mxu0 0
        %2718 = vmatpush1.bf16.msra.mxu0 0
        %2719 = vmatprep.subr.bf16.mxu0 0
        %2720 = vmatpush1.bf16.msra.mxu0 0
        %2721 = vmatprep.subr.bf16.mxu0 0
        %2722 = vmatpush1.bf16.msra.mxu0 0
        %2723 = vmatprep.subr.bf16.mxu0 0
        %2724 = vmatpush1.bf16.msra.mxu0 0
        %2725 = vmatprep.subr.bf16.mxu0 0
        %2726 = vmatpush1.bf16.msra.mxu0 0
        %2727 = vmatprep.subr.bf16.mxu0 0
        %2728 = vmatpush1.bf16.msra.mxu0 0
        %2729 = vmatprep.mubr.bf16.mxu0 0
        %2730 = vmatmul.mubr.bf16.gmra.mrb[0].mxu0 %v2580
        %v2731 = vpop.f32.mrb[0].mxu0
        %v2732 = vadd.f32 0.0, %v2731
        %v2733 = vpop.f32.mrb[0].mxu0
        %v2734 = vadd.f32 0.0, %v2733
        %v2735 = vpop.f32.mrb[0].mxu0
        %v2736 = vpop.f32.mrb[0].mxu0
        %2737 = vdwg.mxu0
        %2738 = vmatprep.subr.bf16.mxu0 %v955
        %2739 = vmatpush1.bf16.msra.mxu0 %v954
        %2740 = vmatprep.subr.bf16.mxu0 %v959
        %2741 = vmatpush1.bf16.msra.mxu0 %v958
        %2742 = vmatprep.subr.bf16.mxu0 %v963
        %2743 = vmatpush1.bf16.msra.mxu0 %v962
        %2744 = vmatprep.subr.bf16.mxu0 %v967
        %2745 = vmatpush1.bf16.msra.mxu0 %v966
        %2746 = vmatprep.subr.bf16.mxu0 %v971
        %2747 = vmatpush1.bf16.msra.mxu0 %v970
        %2748 = vmatprep.subr.bf16.mxu0 %v975
        %2749 = vmatpush1.bf16.msra.mxu0 %v974
        %2750 = vmatprep.subr.bf16.mxu0 %v979
        %2751 = vmatpush1.bf16.msra.mxu0 %v978
        %2752 = vmatprep.subr.bf16.mxu0 %v983
        %2753 = vmatpush1.bf16.msra.mxu0 %v982
        %2754 = vmatprep.subr.bf16.mxu0 0
        %2755 = vmatpush1.bf16.msra.mxu0 0
        %2756 = vmatprep.subr.bf16.mxu0 0
        %2757 = vmatpush1.bf16.msra.mxu0 0
        %2758 = vmatprep.subr.bf16.mxu0 0
        %2759 = vmatpush1.bf16.msra.mxu0 0
        %2760 = vmatprep.subr.bf16.mxu0 0
        %2761 = vmatpush1.bf16.msra.mxu0 0
        %2762 = vmatprep.subr.bf16.mxu0 0
        %2763 = vmatpush1.bf16.msra.mxu0 0
        %2764 = vmatprep.subr.bf16.mxu0 0
        %2765 = vmatpush1.bf16.msra.mxu0 0
        %2766 = vmatprep.subr.bf16.mxu0 0
        %2767 = vmatpush1.bf16.msra.mxu0 0
        %2768 = vmatprep.subr.bf16.mxu0 0
        %2769 = vmatpush1.bf16.msra.mxu0 0
        %2770 = vmatprep.mubr.bf16.mxu0 0
        %2771 = vmatmul.mubr.bf16.gmra.mrb[0].mxu0 %v2580
        %v2772 = vpop.f32.mrb[0].mxu0
        %v2773 = vadd.f32 0.0, %v2772
        %v2774 = vpop.f32.mrb[0].mxu0
        %v2775 = vadd.f32 0.0, %v2774
        %v2776 = vpop.f32.mrb[0].mxu0
        %v2777 = vpop.f32.mrb[0].mxu0
        %2778 = vdwg.mxu0
        %v2779 = vadd.f32 %v2693, %v2732
        %v2780 = vadd.f32 %v2694, %v2734
        %v2781 = vadd.f32 %v2695, %v2773
        %v2782 = vadd.f32 %v2696, %v2775
        %v2783 = vxor.u32 %v2779, 2147483648
        %v2784 = vmul.f32 %v2783, 1.442695
        %v2785 = vpow.pop %v2784
        %v2786 = vadd.f32 %v2785, 1.0
        %v2787 = vrcp.pop %v2786
        %v2788 = vmul.f32 1.0, %v2787
        %v2789 = vxor.u32 %v2780, 2147483648
        %v2790 = vmul.f32 %v2789, 1.442695
        %v2791 = vpow.pop %v2790
        %v2792 = vadd.f32 %v2791, 1.0
        %v2793 = vrcp.pop %v2792
        %v2794 = vmul.f32 1.0, %v2793
        %v2795 = vtanh.pop %v2781
        %v2796 = vxor.u32 %v2782, 2147483648
        %v2797 = vmul.f32 %v2796, 1.442695
        %v2798 = vpow.pop %v2797
        %v2799 = vadd.f32 %v2798, 1.0
        %v2800 = vrcp.pop %v2799
        %v2801 = vmul.f32 1.0, %v2800
        %v2802 = vmul.f32 %v2794, %v2577
        %v2803 = vmul.f32 %v2788, %v2795
        %v2804 = vadd.f32 %v2802, %v2803
        %v2805 = vtanh.pop %v2804
        %v2806 = vmul.f32 %v2801, %v2805
        %v2807 = vpack.c.bf16 %v2806, %v2806
        %v2808 = vpack.c.bf16 %v2687, %v2687
        %2809 = vmatprep.subr.bf16.mxu0 %v1321
        %2810 = vmatpush1.bf16.msra.mxu0 %v1320
        %2811 = vmatprep.subr.bf16.mxu0 %v1325
        %2812 = vmatpush1.bf16.msra.mxu0 %v1324
        %2813 = vmatprep.subr.bf16.mxu0 %v1329
        %2814 = vmatpush1.bf16.msra.mxu0 %v1328
        %2815 = vmatprep.subr.bf16.mxu0 %v1333
        %2816 = vmatpush1.bf16.msra.mxu0 %v1332
        %2817 = vmatprep.subr.bf16.mxu0 %v1337
        %2818 = vmatpush1.bf16.msra.mxu0 %v1336
        %2819 = vmatprep.subr.bf16.mxu0 %v1341
        %2820 = vmatpush1.bf16.msra.mxu0 %v1340
        %2821 = vmatprep.subr.bf16.mxu0 %v1345
        %2822 = vmatpush1.bf16.msra.mxu0 %v1344
        %2823 = vmatprep.subr.bf16.mxu0 %v1349
        %2824 = vmatpush1.bf16.msra.mxu0 %v1348
        %2825 = vmatprep.subr.bf16.mxu0 %v1353
        %2826 = vmatpush1.bf16.msra.mxu0 %v1352
        %2827 = vmatprep.subr.bf16.mxu0 %v1357
        %2828 = vmatpush1.bf16.msra.mxu0 %v1356
        %2829 = vmatprep.subr.bf16.mxu0 %v1361
        %2830 = vmatpush1.bf16.msra.mxu0 %v1360
        %2831 = vmatprep.subr.bf16.mxu0 %v1365
        %2832 = vmatpush1.bf16.msra.mxu0 %v1364
        %2833 = vmatprep.subr.bf16.mxu0 %v1369
        %2834 = vmatpush1.bf16.msra.mxu0 %v1368
        %2835 = vmatprep.subr.bf16.mxu0 %v1373
        %2836 = vmatpush1.bf16.msra.mxu0 %v1372
        %2837 = vmatprep.subr.bf16.mxu0 %v1377
        %2838 = vmatpush1.bf16.msra.mxu0 %v1376
        %2839 = vmatprep.subr.bf16.mxu0 %v1381
        %2840 = vmatpush1.bf16.msra.mxu0 %v1380
        %2841 = vmatprep.mubr.bf16.mxu0 %v2808
        %2842 = vmatmul.mubr.bf16.gmra.mrb[0].mxu0 %v2807
        %v2843 = vpop.f32.mrb[0].mxu0
        %v2844 = vadd.f32 %v823, %v2843
        %v2845 = vpop.f32.mrb[0].mxu0
        %v2846 = vadd.f32 %v827, %v2845
        %v2847 = vpop.f32.mrb[0].mxu0
        %v2848 = vpop.f32.mrb[0].mxu0
        %2849 = vdwg.mxu0
        %2850 = vmatprep.subr.bf16.mxu0 %v1323
        %2851 = vmatpush1.bf16.msra.mxu0 %v1322
        %2852 = vmatprep.subr.bf16.mxu0 %v1327
        %2853 = vmatpush1.bf16.msra.mxu0 %v1326
        %2854 = vmatprep.subr.bf16.mxu0 %v1331
        %2855 = vmatpush1.bf16.msra.mxu0 %v1330
        %2856 = vmatprep.subr.bf16.mxu0 %v1335
        %2857 = vmatpush1.bf16.msra.mxu0 %v1334
        %2858 = vmatprep.subr.bf16.mxu0 %v1339
        %2859 = vmatpush1.bf16.msra.mxu0 %v1338
        %2860 = vmatprep.subr.bf16.mxu0 %v1343
        %2861 = vmatpush1.bf16.msra.mxu0 %v1342
        %2862 = vmatprep.subr.bf16.mxu0 %v1347
        %2863 = vmatpush1.bf16.msra.mxu0 %v1346
        %2864 = vmatprep.subr.bf16.mxu0 %v1351
        %2865 = vmatpush1.bf16.msra.mxu0 %v1350
        %2866 = vmatprep.subr.bf16.mxu0 %v1355
        %2867 = vmatpush1.bf16.msra.mxu0 %v1354
        %2868 = vmatprep.subr.bf16.mxu0 %v1359
        %2869 = vmatpush1.bf16.msra.mxu0 %v1358
        %2870 = vmatprep.subr.bf16.mxu0 %v1363
        %2871 = vmatpush1.bf16.msra.mxu0 %v1362
        %2872 = vmatprep.subr.bf16.mxu0 %v1367
        %2873 = vmatpush1.bf16.msra.mxu0 %v1366
        %2874 = vmatprep.subr.bf16.mxu0 %v1371
        %2875 = vmatpush1.bf16.msra.mxu0 %v1370
        %2876 = vmatprep.subr.bf16.mxu0 %v1375
        %2877 = vmatpush1.bf16.msra.mxu0 %v1374
        %2878 = vmatprep.subr.bf16.mxu0 %v1379
        %2879 = vmatpush1.bf16.msra.mxu0 %v1378
        %2880 = vmatprep.subr.bf16.mxu0 %v1383
        %2881 = vmatpush1.bf16.msra.mxu0 %v1382
        %2882 = vmatprep.mubr.bf16.mxu0 %v2808
        %2883 = vmatmul.mubr.bf16.gmra.mrb[0].mxu0 %v2807
        %v2884 = vpop.f32.mrb[0].mxu0
        %v2885 = vadd.f32 %v831, %v2884
        %v2886 = vpop.f32.mrb[0].mxu0
        %v2887 = vadd.f32 %v835, %v2886
        %v2888 = vpop.f32.mrb[0].mxu0
        %v2889 = vpop.f32.mrb[0].mxu0
        %2890 = vdwg.mxu0
        %v2891 = vxor.u32 %v2844, 2147483648
        %v2892 = vmul.f32 %v2891, 1.442695
        %v2893 = vpow.pop %v2892
        %v2894 = vadd.f32 %v2893, 1.0
        %v2895 = vrcp.pop %v2894
        %v2896 = vmul.f32 1.0, %v2895
        %v2897 = vxor.u32 %v2846, 2147483648
        %v2898 = vmul.f32 %v2897, 1.442695
        %v2899 = vpow.pop %v2898
        %v2900 = vadd.f32 %v2899, 1.0
        %v2901 = vrcp.pop %v2900
        %v2902 = vmul.f32 1.0, %v2901
        %v2903 = vtanh.pop %v2885
        %v2904 = vxor.u32 %v2887, 2147483648
        %v2905 = vmul.f32 %v2904, 1.442695
        %v2906 = vpow.pop %v2905
        %v2907 = vadd.f32 %v2906, 1.0
        %v2908 = vrcp.pop %v2907
        %v2909 = vmul.f32 1.0, %v2908
        %v2910 = vmul.f32 %v2902, %v2685
        %v2911 = vmul.f32 %v2896, %v2903
        %v2912 = vadd.f32 %v2910, %v2911
        %v2913 = vtanh.pop %v2912
        %v2914 = vmul.f32 %v2909, %v2913
        %s2915 = sadd.s32 %s845, 6
        %v2916 = vstv %s2915
        %vm2917 = vcmp.eq.s32.totalorder %v844, %v2916
        %v2918 = vsel %vm2917, %v2914, %v2691
        %s2919 = scalar_lea.vmem [#allocation2], 224
        %v2920 = vld [vmem:[%s2919] sm:$0xff]
        %v2921 = vld [vmem:[%s2919 + $0x8] sm:$0xff]
        %v2922 = vld [vmem:[%s2919 + $0x10] sm:$0xff]
        %v2923 = vld [vmem:[%s2919 + $0x18] sm:$0xff]
        %2924 = vmatprep.subr.bf16.mxu0 %v953
        %2925 = vmatpush1.bf16.msra.mxu0 %v952
        %2926 = vmatprep.subr.bf16.mxu0 %v957
        %2927 = vmatpush1.bf16.msra.mxu0 %v956
        %2928 = vmatprep.subr.bf16.mxu0 %v961
        %2929 = vmatpush1.bf16.msra.mxu0 %v960
        %2930 = vmatprep.subr.bf16.mxu0 %v965
        %2931 = vmatpush1.bf16.msra.mxu0 %v964
        %2932 = vmatprep.subr.bf16.mxu0 %v969
        %2933 = vmatpush1.bf16.msra.mxu0 %v968
        %2934 = vmatprep.subr.bf16.mxu0 %v973
        %2935 = vmatpush1.bf16.msra.mxu0 %v972
        %2936 = vmatprep.subr.bf16.mxu0 %v977
        %2937 = vmatpush1.bf16.msra.mxu0 %v976
        %2938 = vmatprep.subr.bf16.mxu0 %v981
        %2939 = vmatpush1.bf16.msra.mxu0 %v980
        %2940 = vmatprep.subr.bf16.mxu0 0
        %2941 = vmatpush1.bf16.msra.mxu0 0
        %2942 = vmatprep.subr.bf16.mxu0 0
        %2943 = vmatpush1.bf16.msra.mxu0 0
        %2944 = vmatprep.subr.bf16.mxu0 0
        %2945 = vmatpush1.bf16.msra.mxu0 0
        %2946 = vmatprep.subr.bf16.mxu0 0
        %2947 = vmatpush1.bf16.msra.mxu0 0
        %2948 = vmatprep.subr.bf16.mxu0 0
        %2949 = vmatpush1.bf16.msra.mxu0 0
        %2950 = vmatprep.subr.bf16.mxu0 0
        %2951 = vmatpush1.bf16.msra.mxu0 0
        %2952 = vmatprep.subr.bf16.mxu0 0
        %2953 = vmatpush1.bf16.msra.mxu0 0
        %2954 = vmatprep.subr.bf16.mxu0 0
        %2955 = vmatpush1.bf16.msra.mxu0 0
        %2956 = vmatprep.mubr.bf16.mxu0 0
        %2957 = vmatmul.mubr.bf16.gmra.mrb[0].mxu0 %v2807
        %v2958 = vpop.f32.mrb[0].mxu0
        %v2959 = vadd.f32 0.0, %v2958
        %v2960 = vpop.f32.mrb[0].mxu0
        %v2961 = vadd.f32 0.0, %v2960
        %v2962 = vpop.f32.mrb[0].mxu0
        %v2963 = vpop.f32.mrb[0].mxu0
        %2964 = vdwg.mxu0
        %2965 = vmatprep.subr.bf16.mxu0 %v955
        %2966 = vmatpush1.bf16.msra.mxu0 %v954
        %2967 = vmatprep.subr.bf16.mxu0 %v959
        %2968 = vmatpush1.bf16.msra.mxu0 %v958
        %2969 = vmatprep.subr.bf16.mxu0 %v963
        %2970 = vmatpush1.bf16.msra.mxu0 %v962
        %2971 = vmatprep.subr.bf16.mxu0 %v967
        %2972 = vmatpush1.bf16.msra.mxu0 %v966
        %2973 = vmatprep.subr.bf16.mxu0 %v971
        %2974 = vmatpush1.bf16.msra.mxu0 %v970
        %2975 = vmatprep.subr.bf16.mxu0 %v975
        %2976 = vmatpush1.bf16.msra.mxu0 %v974
        %2977 = vmatprep.subr.bf16.mxu0 %v979
        %2978 = vmatpush1.bf16.msra.mxu0 %v978
        %2979 = vmatprep.subr.bf16.mxu0 %v983
        %2980 = vmatpush1.bf16.msra.mxu0 %v982
        %2981 = vmatprep.subr.bf16.mxu0 0
        %2982 = vmatpush1.bf16.msra.mxu0 0
        %2983 = vmatprep.subr.bf16.mxu0 0
        %2984 = vmatpush1.bf16.msra.mxu0 0
        %2985 = vmatprep.subr.bf16.mxu0 0
        %2986 = vmatpush1.bf16.msra.mxu0 0
        %2987 = vmatprep.subr.bf16.mxu0 0
        %2988 = vmatpush1.bf16.msra.mxu0 0
        %2989 = vmatprep.subr.bf16.mxu0 0
        %2990 = vmatpush1.bf16.msra.mxu0 0
        %2991 = vmatprep.subr.bf16.mxu0 0
        %2992 = vmatpush1.bf16.msra.mxu0 0
        %2993 = vmatprep.subr.bf16.mxu0 0
        %2994 = vmatpush1.bf16.msra.mxu0 0
        %2995 = vmatprep.subr.bf16.mxu0 0
        %2996 = vmatpush1.bf16.msra.mxu0 0
        %2997 = vmatprep.mubr.bf16.mxu0 0
        %2998 = vmatmul.mubr.bf16.gmra.mrb[0].mxu0 %v2807
        %v2999 = vpop.f32.mrb[0].mxu0
        %v3000 = vadd.f32 0.0, %v2999
        %v3001 = vpop.f32.mrb[0].mxu0
        %v3002 = vadd.f32 0.0, %v3001
        %v3003 = vpop.f32.mrb[0].mxu0
        %v3004 = vpop.f32.mrb[0].mxu0
        %3005 = vdwg.mxu0
        %v3006 = vadd.f32 %v2920, %v2959
        %v3007 = vadd.f32 %v2921, %v2961
        %v3008 = vadd.f32 %v2922, %v3000
        %v3009 = vadd.f32 %v2923, %v3002
        %v3010 = vxor.u32 %v3006, 2147483648
        %v3011 = vmul.f32 %v3010, 1.442695
        %v3012 = vpow.pop %v3011
        %v3013 = vadd.f32 %v3012, 1.0
        %v3014 = vrcp.pop %v3013
        %v3015 = vmul.f32 1.0, %v3014
        %v3016 = vxor.u32 %v3007, 2147483648
        %v3017 = vmul.f32 %v3016, 1.442695
        %v3018 = vpow.pop %v3017
        %v3019 = vadd.f32 %v3018, 1.0
        %v3020 = vrcp.pop %v3019
        %v3021 = vmul.f32 1.0, %v3020
        %v3022 = vtanh.pop %v3008
        %v3023 = vxor.u32 %v3009, 2147483648
        %v3024 = vmul.f32 %v3023, 1.442695
        %v3025 = vpow.pop %v3024
        %v3026 = vadd.f32 %v3025, 1.0
        %v3027 = vrcp.pop %v3026
        %v3028 = vmul.f32 1.0, %v3027
        %v3029 = vmul.f32 %v3021, %v2804
        %v3030 = vmul.f32 %v3015, %v3022
        %v3031 = vadd.f32 %v3029, %v3030
        %v3032 = vtanh.pop %v3031
        %v3033 = vmul.f32 %v3028, %v3032
        %v3034 = vpack.c.bf16 %v3033, %v3033
        %v3035 = vpack.c.bf16 %v2914, %v2914
        %3036 = vmatprep.subr.bf16.mxu0 %v1321
        %3037 = vmatpush1.bf16.msra.mxu0 %v1320
        %3038 = vmatprep.subr.bf16.mxu0 %v1325
        %3039 = vmatpush1.bf16.msra.mxu0 %v1324
        %3040 = vmatprep.subr.bf16.mxu0 %v1329
        %3041 = vmatpush1.bf16.msra.mxu0 %v1328
        %3042 = vmatprep.subr.bf16.mxu0 %v1333
        %3043 = vmatpush1.bf16.msra.mxu0 %v1332
        %3044 = vmatprep.subr.bf16.mxu0 %v1337
        %3045 = vmatpush1.bf16.msra.mxu0 %v1336
        %3046 = vmatprep.subr.bf16.mxu0 %v1341
        %3047 = vmatpush1.bf16.msra.mxu0 %v1340
        %3048 = vmatprep.subr.bf16.mxu0 %v1345
        %3049 = vmatpush1.bf16.msra.mxu0 %v1344
        %3050 = vmatprep.subr.bf16.mxu0 %v1349
        %3051 = vmatpush1.bf16.msra.mxu0 %v1348
        %3052 = vmatprep.subr.bf16.mxu0 %v1353
        %3053 = vmatpush1.bf16.msra.mxu0 %v1352
        %3054 = vmatprep.subr.bf16.mxu0 %v1357
        %3055 = vmatpush1.bf16.msra.mxu0 %v1356
        %3056 = vmatprep.subr.bf16.mxu0 %v1361
        %3057 = vmatpush1.bf16.msra.mxu0 %v1360
        %3058 = vmatprep.subr.bf16.mxu0 %v1365
        %3059 = vmatpush1.bf16.msra.mxu0 %v1364
        %3060 = vmatprep.subr.bf16.mxu0 %v1369
        %3061 = vmatpush1.bf16.msra.mxu0 %v1368
        %3062 = vmatprep.subr.bf16.mxu0 %v1373
        %3063 = vmatpush1.bf16.msra.mxu0 %v1372
        %3064 = vmatprep.subr.bf16.mxu0 %v1377
        %3065 = vmatpush1.bf16.msra.mxu0 %v1376
        %3066 = vmatprep.subr.bf16.mxu0 %v1381
        %3067 = vmatpush1.bf16.msra.mxu0 %v1380
        %3068 = vmatprep.mubr.bf16.mxu0 %v3035
        %3069 = vmatmul.mubr.bf16.gmra.mrb[0].mxu0 %v3034
        %v3070 = vpop.f32.mrb[0].mxu0
        %v3071 = vadd.f32 %v823, %v3070
        %v3072 = vpop.f32.mrb[0].mxu0
        %v3073 = vadd.f32 %v827, %v3072
        %v3074 = vpop.f32.mrb[0].mxu0
        %v3075 = vpop.f32.mrb[0].mxu0
        %3076 = vdwg.mxu0
        %3077 = vmatprep.subr.bf16.mxu0 %v1323
        %3078 = vmatpush1.bf16.msra.mxu0 %v1322
        %3079 = vmatprep.subr.bf16.mxu0 %v1327
        %3080 = vmatpush1.bf16.msra.mxu0 %v1326
        %3081 = vmatprep.subr.bf16.mxu0 %v1331
        %3082 = vmatpush1.bf16.msra.mxu0 %v1330
        %3083 = vmatprep.subr.bf16.mxu0 %v1335
        %3084 = vmatpush1.bf16.msra.mxu0 %v1334
        %3085 = vmatprep.subr.bf16.mxu0 %v1339
        %3086 = vmatpush1.bf16.msra.mxu0 %v1338
        %3087 = vmatprep.subr.bf16.mxu0 %v1343
        %3088 = vmatpush1.bf16.msra.mxu0 %v1342
        %3089 = vmatprep.subr.bf16.mxu0 %v1347
        %3090 = vmatpush1.bf16.msra.mxu0 %v1346
        %3091 = vmatprep.subr.bf16.mxu0 %v1351
        %3092 = vmatpush1.bf16.msra.mxu0 %v1350
        %3093 = vmatprep.subr.bf16.mxu0 %v1355
        %3094 = vmatpush1.bf16.msra.mxu0 %v1354
        %3095 = vmatprep.subr.bf16.mxu0 %v1359
        %3096 = vmatpush1.bf16.msra.mxu0 %v1358
        %3097 = vmatprep.subr.bf16.mxu0 %v1363
        %3098 = vmatpush1.bf16.msra.mxu0 %v1362
        %3099 = vmatprep.subr.bf16.mxu0 %v1367
        %3100 = vmatpush1.bf16.msra.mxu0 %v1366
        %3101 = vmatprep.subr.bf16.mxu0 %v1371
        %3102 = vmatpush1.bf16.msra.mxu0 %v1370
        %3103 = vmatprep.subr.bf16.mxu0 %v1375
        %3104 = vmatpush1.bf16.msra.mxu0 %v1374
        %3105 = vmatprep.subr.bf16.mxu0 %v1379
        %3106 = vmatpush1.bf16.msra.mxu0 %v1378
        %3107 = vmatprep.subr.bf16.mxu0 %v1383
        %3108 = vmatpush1.bf16.msra.mxu0 %v1382
        %3109 = vmatprep.mubr.bf16.mxu0 %v3035
        %3110 = vmatmul.mubr.bf16.gmra.mrb[0].mxu0 %v3034
        %v3111 = vpop.f32.mrb[0].mxu0
        %v3112 = vadd.f32 %v831, %v3111
        %v3113 = vpop.f32.mrb[0].mxu0
        %v3114 = vadd.f32 %v835, %v3113
        %v3115 = vpop.f32.mrb[0].mxu0
        %v3116 = vpop.f32.mrb[0].mxu0
        %3117 = vdwg.mxu0
        %v3118 = vxor.u32 %v3071, 2147483648
        %v3119 = vmul.f32 %v3118, 1.442695
        %v3120 = vpow.pop %v3119
        %v3121 = vadd.f32 %v3120, 1.0
        %v3122 = vrcp.pop %v3121
        %v3123 = vmul.f32 1.0, %v3122
        %v3124 = vxor.u32 %v3073, 2147483648
        %v3125 = vmul.f32 %v3124, 1.442695
        %v3126 = vpow.pop %v3125
        %v3127 = vadd.f32 %v3126, 1.0
        %v3128 = vrcp.pop %v3127
        %v3129 = vmul.f32 1.0, %v3128
        %v3130 = vtanh.pop %v3112
        %v3131 = vxor.u32 %v3114, 2147483648
        %v3132 = vmul.f32 %v3131, 1.442695
        %v3133 = vpow.pop %v3132
        %v3134 = vadd.f32 %v3133, 1.0
        %v3135 = vrcp.pop %v3134
        %v3136 = vmul.f32 1.0, %v3135
        %v3137 = vmul.f32 %v3129, %v2912
        %v3138 = vmul.f32 %v3123, %v3130
        %v3139 = vadd.f32 %v3137, %v3138
        %v3140 = vtanh.pop %v3139
        %v3141 = vmul.f32 %v3136, %v3140
        %s3142 = sadd.s32 %s845, 7
        %v3143 = vstv %s3142
        %vm3144 = vcmp.eq.s32.totalorder %v844, %v3143
        %v3145 = vsel %vm3144, %v3141, %v2918
        %3146 = vst [vmem:[#allocation3] sm:$0xff] %v3033
        %3147 = vst [vmem:[#allocation4] sm:$0xff] %v3031
        %3148 = vst [vmem:[#allocation5] sm:$0xff] %v3141
        %3149 = vst [vmem:[#allocation6] sm:$0xff] %v3139
        %3150 = vst [vmem:[#allocation7] sm:$0xff] %v3145
        %p3151 = scmp.eq.s32.totalorder %s33, 1
        // Predicated region
        $region77: #{tpu_custom_call.1} parent=55 // pred_check
          %p3152 = pneg %p3151
        $region78: #{tpu_custom_call.1} parent=55 // pred_check_branch
          %3154 = sbr.rel (%p3152) target = $region80
        $region79: #{tpu_custom_call.1} parent=55 // pred_region
          %v3155 = vld [vmem:[#allocation7] sm:$0xff]
          %v3156 = vld [vmem:[%s7] sm:$0x1]
          %v3158 = vlaneseq
          %v3159 = vshrl.u32 %v3158, 7
          %v3160 = vsub.s32 0, %v3159
          %v3161 = vrot.slane %v3156, %v3160
          %v3163 = vmul.f32 %v3155, %v3161
          %3164 = vadd.xlane.f32.xlu0 %v3163
          %v3165 = vpop.xlane.xlu0 %3164
          %v3166 = vld [vmem:[#allocation8] sm:$0x1]
          %v3168 = vlaneseq
          %v3169 = vshrl.u32 %v3168, 7
          %v3170 = vsub.s32 0, %v3169
          %v3171 = vrot.slane %v3166, %v3170
          %v3173 = vadd.f32 %v3165, %v3171
          %v3174 = vxor.u32 %v3173, 2147483648
          %v3175 = vmul.f32 %v3174, 1.442695
          %v3176 = vpow.pop %v3175
          %v3177 = vadd.f32 %v3176, 1.0
          %v3178 = vrcp.pop %v3177
          %v3179 = vmul.f32 1.0, %v3178
          %3181 = vset.pattern.permute.xlu0 0
          %3182 = vperm.xlu0 %3181, %v3179
          %v3183 = vpop.permute.xlu0 %3182
          %3185 = vst [vmem:[#allocation17] sm:$0xff] %v3183
        $region80: #{tpu_custom_call.1} parent=55 // pred_fallthru
          _
        // Predicated region
        $region81: #{tpu_custom_call.1} parent=55 // pred_check
          %p3186 = pneg %p259
        $region82: #{tpu_custom_call.1} parent=55 // pred_check_branch
          %3188 = sbr.rel (%p3186) target = $region84
        $region83: #{tpu_custom_call.1} parent=55 // pred_region
          %s3190 = ssub.s32 128, 128
          %3191 = vsyncadd [#allocation11], %s3190
          %s3192 = smul.addr %s32, 128
          %s3193 = scalar_lea.hbm %s9, %s3192
          %s3195 = sshll.u32 [#allocation17], 4
          %s3196 = int_to_ptr.vmem [resolvable:$true] %s3195
          %3198 = dma.vmem_to_hbm [thread:$0]  %s3196, 128, %s3193, [#allocation11]
        $region84: #{tpu_custom_call.1} parent=55 // pred_fallthru
          _
        // Predicated region
        $region85: #{tpu_custom_call.1} parent=55 // pred_check
          %p3199 = pneg %p259
        $region86: #{tpu_custom_call.1} parent=55 // pred_check_branch
          %3201 = sbr.rel (%p3199) target = $region88
        $region87: #{tpu_custom_call.1} parent=55 // pred_region
          %3202 = dma.done [#allocation11], 128
        $region88: #{tpu_custom_call.1} parent=55 // pred_fallthru
          _
      $region56: #{tpu_custom_call.1} parent=5 // pred_fallthru
        _
      %p3203 = scmp.le.s32.totalorder 2, %s23
      // Predicated region
      $region89: #{tpu_custom_call.1} parent=5 // pred_check
        %p3204 = pneg %p3203
      $region90: #{tpu_custom_call.1} parent=5 // pred_check_branch
        %3206 = sbr.rel (%p3204) target = $region92
      $region91: #{tpu_custom_call.1} parent=5 // pred_region
        %s3207 = ssub.s32 %s23, 2
      $region92: #{tpu_custom_call.1} parent=5 // pred_fallthru
        _
    $region6: #{tpu_custom_call.1} parent=1 // loop_footer
      %s27 = sadd.s32 1, %s23
    $region7: #{tpu_custom_call.1} parent=1 // loop_footer_branch
      %22 = sbr.rel target = $region3
    $region8: #{tpu_custom_call.1} parent=1 // loop_exit
      _
    %3208 = vsyncpa [#allocation10], 1
    %s3209 = scalar_lea.sflag [#allocation10], 1
    %3210 = vsyncpa %s3209, 1
    %3211 = vsyncpa [#allocation13], 1
    %3212 = vsyncpa [#allocation16], 1
    %3213 = vsyncpa [#allocation11], 1
    %s3214 = scalar_lea.sflag [#allocation11], 1
    %3215 = vsyncpa %s3214, 1

</llo_original>
